<compile_context>
chip_gen: v5e
topology: v5e:2x2
jax: 0.10.0
libtpu: 0.0.40
codegen_flags: <defaults>
</compile_context>

<pallas_src>
import functools

import jax
import jax.numpy as jnp
from jax.experimental import pallas as pl
from jax.experimental.pallas import tpu as pltpu

LANE = 128                       # channel padding target (lane / MXU width)
_BN_EPS = 1e-5
_VMEM_LIMIT = 32 * 1024 * 1024   # safe scoped-VMEM request on v5e / v6e / v7x


def _round_up(x, m):
    return (x + m - 1) // m * m


def _pick_tile_h(h, w, target_rows=1024):
    """Largest divisor of H such that tile_h*W <= target_rows and is 8-aligned."""
    best = None
    for t in range(1, h + 1):
        if h % t == 0 and t * w <= target_rows and (t * w) % 8 == 0:
            best = t
    return best if best is not None else h


def _pick_tile_m(m, cap=1024, align=8):
    """Largest divisor of M that is <= cap and a multiple of `align`."""
    best = None
    for t in range(1, min(m, cap) + 1):
        if m % t == 0 and t % align == 0:
            best = t
    return best if best is not None else m


def _pad_last(x, target):
    pad = target - x.shape[-1]
    if pad > 0:
        x = jnp.pad(x, [(0, 0)] * (x.ndim - 1) + [(0, pad)])
    return x


# ---------------------------------------------------------------------------
# Pass 1: 3x3 conv as 9 shifted MXU matmuls + per-channel sum / sum-of-squares.
# ---------------------------------------------------------------------------
def _conv3x3_stats_kernel(x_hbm, w_ref, y_ref, sum_ref, ssq_ref, xbuf, sem, *,
                          tile_h, out_w):
    ni = pl.program_id(0)      # batch index
    hi = pl.program_id(1)      # H-tile index

    # Manual DMA of the halo'd row window of image `ni`:
    # rows [hi*tile_h, hi*tile_h + tile_h + 2) of the spatially padded input.
    h0 = hi * tile_h
    cpy = pltpu.make_async_copy(x_hbm.at[ni, pl.ds(h0, tile_h + 2)], xbuf, sem)
    cpy.start()

    # Init resident per-channel BN-stat accumulators on the first grid step.
    @pl.when(jnp.logical_and(ni == 0, hi == 0))
    def _():
        sum_ref[...] = jnp.zeros_like(sum_ref)
        ssq_ref[...] = jnp.zeros_like(ssq_ref)

    cpy.wait()

    cout_p = y_ref.shape[-1]
    acc = jnp.zeros((tile_h * out_w, cout_p), jnp.float32)
    # 3x3 taps = 9 shifted bf16 matmuls with f32 accumulation
    # (K = Cin padded to 128, N = Cout padded to 128 -> aligned MXU shapes).
    for dy in range(3):
        for dx in range(3):
            tap = xbuf[dy:dy + tile_h, dx:dx + out_w, :]
            tap = tap.reshape(tile_h * out_w, tap.shape[-1])
            acc += jnp.dot(tap, w_ref[dy, dx],
                           preferred_element_type=jnp.float32)

    # NOTE: the conv bias is intentionally NOT added -- training-mode BatchNorm
    # subtracts the per-channel mean right back out, so it has no effect.
    y_ref[...] = acc.astype(y_ref.dtype)

    # BatchNorm batch statistics (f32), accumulated over the whole grid.
    sum_ref[...] += jnp.sum(acc, axis=0, keepdims=True)
    ssq_ref[...] += jnp.sum(acc * acc, axis=0, keepdims=True)


# ---------------------------------------------------------------------------
# Pass 2: folded BatchNorm affine (single FMA) + ReLU over lane-dense tiles.
# ---------------------------------------------------------------------------
def _bn_affine_relu_kernel(y_ref, scale_ref, shift_ref, o_ref):
    y = y_ref[...].astype(jnp.float32)
    o_ref[...] = jnp.maximum(y * scale_ref[...] + shift_ref[...],
                             0.0).astype(o_ref.dtype)


def conv_bn_relu(x_nhwc, w_p, gamma_p, beta_p, *, out_dtype):
    """One conv3x3(pad=1) + BatchNorm(train) + ReLU layer.

    x_nhwc : (N, H, W, CP)     bf16, channels zero-padded to CP (multiple of 128)
    w_p    : (3, 3, CP, COUTP) bf16, zero-padded HWIO weights
    gamma_p, beta_p : (1, COUTP) f32, zero in padded channels
    Returns (N, H, W, COUTP) in `out_dtype`; padded channels are exactly 0.
    """
    n, h, w, cin_p = x_nhwc.shape
    cout_p = w_p.shape[-1]

    tile_h = _pick_tile_h(h, w)          # whole rows; ~<=1024 M-rows per matmul
    num_h = h // tile_h
    rows = tile_h * w

    # Spatial halo padding for the 3x3 / padding=1 taps; right-pad W+2 up to a
    # sublane multiple (the extra columns are never read by any tap).
    wp2 = _round_up(w + 2, 8)
    xpad = jnp.pad(x_nhwc, ((0, 0), (1, 1), (1, wp2 - w - 1), (0, 0)))

    m = n * h * w
    y_flat, csum, cssq = pl.pallas_call(
        functools.partial(_conv3x3_stats_kernel, tile_h=tile_h, out_w=w),
        grid=(n, num_h),
        in_specs=[
            pl.BlockSpec(memory_space=pl.ANY),                   # input stays in HBM
            pl.BlockSpec((3, 3, cin_p, cout_p),
                         lambda ni, hi: (0, 0, 0, 0)),           # resident weights
        ],
        out_specs=[
            pl.BlockSpec((rows, cout_p),
                         lambda ni, hi: (ni * num_h + hi, 0)),   # conv output tile
            pl.BlockSpec((1, cout_p), lambda ni, hi: (0, 0)),    # resident sum acc
            pl.BlockSpec((1, cout_p), lambda ni, hi: (0, 0)),    # resident sumsq acc
        ],
        out_shape=[
            jax.ShapeDtypeStruct((m, cout_p), jnp.bfloat16),
            jax.ShapeDtypeStruct((1, cout_p), jnp.float32),
            jax.ShapeDtypeStruct((1, cout_p), jnp.float32),
        ],
        scratch_shapes=[
            pltpu.VMEM((tile_h + 2, wp2, cin_p), jnp.bfloat16),  # halo'd row tile
            pltpu.SemaphoreType.DMA(()),
        ],
        compiler_params=pltpu.CompilerParams(
            # Both axes feed the resident BN-stat accumulators -> 'arbitrary'.
            dimension_semantics=("arbitrary", "arbitrary"),
            vmem_limit_bytes=_VMEM_LIMIT,
        ),
    )(xpad, w_p)

    # Fold BN (batch statistics, biased variance) + affine into one FMA.
    mean = csum / float(m)
    var = jnp.maximum(cssq / float(m) - mean * mean, 0.0)   # f32, biased
    scale = gamma_p * jax.lax.rsqrt(var + _BN_EPS)           # (1, COUTP)
    shift = beta_p - mean * scale

    tile_m = _pick_tile_m(m)
    o_flat = pl.pallas_call(
        _bn_affine_relu_kernel,
        grid=(m // tile_m,),
        in_specs=[
            pl.BlockSpec((tile_m, cout_p), lambda i: (i, 0)),
            pl.BlockSpec((1, cout_p), lambda i: (0, 0)),
            pl.BlockSpec((1, cout_p), lambda i: (0, 0)),
        ],
        out_specs=pl.BlockSpec((tile_m, cout_p), lambda i: (i, 0)),
        out_shape=jax.ShapeDtypeStruct((m, cout_p), out_dtype),
        compiler_params=pltpu.CompilerParams(
            dimension_semantics=("parallel",),
            vmem_limit_bytes=_VMEM_LIMIT,
        ),
    )(y_flat, scale, shift)

    return o_flat.reshape(n, h, w, cout_p)


# ---------------------------------------------------------------------------
# Parameters / wrapper
# ---------------------------------------------------------------------------
def init_conv_block_params(key, in_c, out_c):
    """Deterministic init mirroring nn.Conv2d / nn.BatchNorm2d defaults."""
    def conv_init(k, cin, cout):
        kw, kb = jax.random.split(k)
        bound = 1.0 / ((cin * 9) ** 0.5)
        w = jax.random.uniform(kw, (3, 3, cin, cout), jnp.float32, -bound, bound)
        b = jax.random.uniform(kb, (cout,), jnp.float32, -bound, bound)
        return w, b

    k1, k2 = jax.random.split(key)
    w1, b1 = conv_init(k1, in_c, out_c)
    w2, b2 = conv_init(k2, out_c, out_c)
    return dict(
        w1=w1, b1=b1, g1=jnp.ones((out_c,), jnp.float32),
        be1=jnp.zeros((out_c,), jnp.float32),
        w2=w2, b2=b2, g2=jnp.ones((out_c,), jnp.float32),
        be2=jnp.zeros((out_c,), jnp.float32),
    )


def _pad_weight(w, cin_p, cout_p):
    kh, kw, cin, cout = w.shape
    return jnp.pad(w, ((0, 0), (0, 0), (0, cin_p - cin), (0, cout_p - cout)))


def conv_block_forward(params, x_nchw):
    """NCHW in / NCHW out, matching the PyTorch module (training-mode BN)."""
    n, cin, h, w = x_nchw.shape
    cout = params["w1"].shape[-1]
    cin_p = _round_up(cin, LANE)
    cout_p = _round_up(cout, LANE)

    # NCHW -> NHWC, channel-pad to the lane width, bf16 for the MXU.
    x = jnp.transpose(x_nchw, (0, 2, 3, 1))
    x = _pad_last(x, cin_p).astype(jnp.bfloat16)

    # params["b1"], params["b2"] (conv biases) are not applied: training-mode
    # BatchNorm's mean subtraction cancels them exactly.
    w1 = _pad_weight(params["w1"], cin_p, cout_p).astype(jnp.bfloat16)
    g1 = _pad_last(params["g1"].reshape(1, -1), cout_p)
    be1 = _pad_last(params["be1"].reshape(1, -1), cout_p)
    y = conv_bn_relu(x, w1, g1, be1, out_dtype=jnp.bfloat16)

    w2 = _pad_weight(params["w2"], cout_p, cout_p).astype(jnp.bfloat16)
    g2 = _pad_last(params["g2"].reshape(1, -1), cout_p)
    be2 = _pad_last(params["be2"].reshape(1, -1), cout_p)
    y = conv_bn_relu(y, w2, g2, be2, out_dtype=jnp.float32)

    y = y[..., :cout]                                  # drop channel padding
    return jnp.transpose(y, (0, 3, 1, 2))              # back to NCHW
    # TODO(synk): running_mean / running_var buffer updates (momentum=0.1) are
    # not modeled; forward uses batch statistics exactly as PyTorch training mode.


def _reference_forward(params, x_nchw):
    """Pure-JAX f32 reference of the PyTorch module (training-mode BN)."""
    def layer(x, w, b, g, be):
        y = jax.lax.conv_general_dilated(
            x, w, window_strides=(1, 1), padding=((1, 1), (1, 1)),
            dimension_numbers=("NCHW", "HWIO", "NCHW"))
        y = y + b.reshape(1, -1, 1, 1)
        mean = jnp.mean(y, axis=(0, 2, 3), keepdims=True)
        var = jnp.mean((y - mean) ** 2, axis=(0, 2, 3), keepdims=True)
        y = (y - mean) * jax.lax.rsqrt(var + _BN_EPS)
        y = y * g.reshape(1, -1, 1, 1) + be.reshape(1, -1, 1, 1)
        return jnp.maximum(y, 0.0)

    x = layer(x_nchw, params["w1"], params["b1"], params["g1"], params["be1"])
    x = layer(x, params["w2"], params["b2"], params["g2"], params["be2"])
    return x


if __name__ == "__main__":
    key = jax.random.PRNGKey(0)
    k_param, k_x = jax.random.split(key)

    in_c, out_c = 4, 8
    N, H, W = 2, 16, 16

    params = init_conv_block_params(k_param, in_c, out_c)
    x = jax.random.normal(k_x, (N, in_c, H, W), jnp.float32)   # NCHW like PyTorch

    fwd = jax.jit(conv_block_forward)
    y = jax.block_until_ready(fwd(params, x))

    assert y.shape == (N, out_c, H, W), y.shape
    assert bool(jnp.all(jnp.isfinite(y)))
    assert bool(jnp.all(y >= 0.0))          # ReLU output

    # Loose-tolerance check vs an f32 XLA reference (the kernel uses bf16 MXU
    # operands and a bf16 inter-layer intermediate, so bit-exactness is not expected).
    y_ref = _reference_forward(params, x)
    max_err = float(jnp.max(jnp.abs(y - y_ref)))
    assert max_err < 0.25, max_err

    print("KERNEL_OK")
</pallas_src>

<mosaic_0001>
module attributes {stable_mosaic.version = 11 : i64} {
  func.func @_bn_affine_relu_kernel(%arg0: i32, %arg1: memref<512x128xbf16, #tpu.memory_space<vmem>>, %arg2: memref<1x128xf32, #tpu.memory_space<vmem>>, %arg3: memref<1x128xf32, #tpu.memory_space<vmem>>, %arg4: memref<512x128xbf16, #tpu.memory_space<vmem>>) attributes {dimension_semantics = [#tpu.dimension_semantics<parallel>], iteration_bounds = array<i64: 1>, scalar_prefetch = 0 : i64, scratch_operands = 0 : i64, tpu.core_type = #tpu.core_type<tc>, window_params = [{transform_indices = @transform_0, window_bounds = array<i64: 512, 128>}, {pipeline_mode = #tpu.pipeline_mode<synchronous>, transform_indices = @transform_1, window_bounds = array<i64: 1, 128>}, {pipeline_mode = #tpu.pipeline_mode<synchronous>, transform_indices = @transform_2, window_bounds = array<i64: 1, 128>}, {transform_indices = @transform_3, window_bounds = array<i64: 512, 128>}]} {
    %c0 = arith.constant 0 : index
    %c0_0 = arith.constant 0 : index
    %0 = vector.load %arg1[%c0, %c0_0] : memref<512x128xbf16, #tpu.memory_space<vmem>>, vector<512x128xbf16>
    %1 = arith.extf %0 : vector<512x128xbf16> to vector<512x128xf32>
    %c0_1 = arith.constant 0 : index
    %c0_2 = arith.constant 0 : index
    %2 = vector.load %arg2[%c0_1, %c0_2] : memref<1x128xf32, #tpu.memory_space<vmem>>, vector<1x128xf32>
    %3 = vector.broadcast %2 : vector<1x128xf32> to vector<512x128xf32>
    %4 = arith.mulf %1, %3 : vector<512x128xf32>
    %c0_3 = arith.constant 0 : index
    %c0_4 = arith.constant 0 : index
    %5 = vector.load %arg3[%c0_3, %c0_4] : memref<1x128xf32, #tpu.memory_space<vmem>>, vector<1x128xf32>
    %6 = vector.broadcast %5 : vector<1x128xf32> to vector<512x128xf32>
    %7 = arith.addf %4, %6 : vector<512x128xf32>
    %cst = arith.constant 0.000000e+00 : f32
    %8 = vector.broadcast %cst : f32 to vector<512x128xf32>
    %9 = arith.maximumf %7, %8 : vector<512x128xf32>
    %10 = arith.truncf %9 : vector<512x128xf32> to vector<512x128xbf16>
    %c0_5 = arith.constant 0 : index
    %c0_6 = arith.constant 0 : index
    %11 = vector.load %arg4[%c0_5, %c0_6] : memref<512x128xbf16, #tpu.memory_space<vmem>>, vector<512x128xbf16>
    tpu.vector_store %arg4[%c0_5, %c0_6], %10 {strides = array<i32>} : memref<512x128xbf16, #tpu.memory_space<vmem>>, vector<512x128xbf16>,
    return
  }
  func.func @transform_0(%arg0: i32) -> (i32, i32) {
    %c0_i32 = arith.constant 0 : i32
    %c0_i32_0 = arith.constant 0 : i32
    return %arg0, %c0_i32 : i32, i32
  }
  func.func @transform_1(%arg0: i32) -> (i32, i32) {
    %c0_i32 = arith.constant 0 : i32
    %c0_i32_0 = arith.constant 0 : i32
    %c0_i32_1 = arith.constant 0 : i32
    return %c0_i32, %c0_i32_0 : i32, i32
  }
  func.func @transform_2(%arg0: i32) -> (i32, i32) {
    %c0_i32 = arith.constant 0 : i32
    %c0_i32_0 = arith.constant 0 : i32
    %c0_i32_1 = arith.constant 0 : i32
    return %c0_i32, %c0_i32_0 : i32, i32
  }
  func.func @transform_3(%arg0: i32) -> (i32, i32) {
    %c0_i32 = arith.constant 0 : i32
    %c0_i32_0 = arith.constant 0 : i32
    return %arg0, %c0_i32 : i32, i32
  }
}

module attributes {stable_mosaic.version = 11 : i64} {
  func.func @_conv3x3_stats_kernel(%arg0: i32, %arg1: i32, %arg2: memref<2x18x24x128xbf16, #tpu.memory_space<any>>, %arg3: memref<3x3x128x128xbf16, #tpu.memory_space<vmem>>, %arg4: memref<256x128xbf16, #tpu.memory_space<vmem>>, %arg5: memref<1x128xf32, #tpu.memory_space<vmem>>, %arg6: memref<1x128xf32, #tpu.memory_space<vmem>>, %arg7: memref<18x24x128xbf16, #tpu.memory_space<vmem>>, %arg8: memref<!tpu.dma_semaphore, #tpu.memory_space<semaphore_mem>>) attributes {dimension_semantics = [#tpu.dimension_semantics<arbitrary>, #tpu.dimension_semantics<arbitrary>], iteration_bounds = array<i64: 2, 1>, scalar_prefetch = 0 : i64, scratch_operands = 2 : i64, tpu.core_type = #tpu.core_type<tc>, window_params = [{}, {pipeline_mode = #tpu.pipeline_mode<synchronous>, transform_indices = @transform_1, window_bounds = array<i64: 3, 3, 128, 128>}, {transform_indices = @transform_2, window_bounds = array<i64: 256, 128>}, {pipeline_mode = #tpu.pipeline_mode<synchronous>, transform_indices = @transform_3, window_bounds = array<i64: 1, 128>}, {pipeline_mode = #tpu.pipeline_mode<synchronous>, transform_indices = @transform_4, window_bounds = array<i64: 1, 128>}]} {
    %c16_i32 = arith.constant 16 : i32
    %0 = arith.muli %arg1, %c16_i32 : i32
    %c0_i32 = arith.constant 0 : i32
    %c0_i32_0 = arith.constant 0 : i32
    %1 = tpu.memref_slice %arg2[%arg0, %0, %c0_i32, %c0_i32_0] : memref<2x18x24x128xbf16, #tpu.memory_space<any>> -> memref<1x18x24x128xbf16, #tpu.memory_space<any>>
    %2 = tpu.memref_squeeze %1 : memref<1x18x24x128xbf16, #tpu.memory_space<any>> -> memref<18x24x128xbf16, #tpu.memory_space<any>>
    tpu.enqueue_dma source(%2 : memref<18x24x128xbf16, #tpu.memory_space<any>>) target(%arg7 : memref<18x24x128xbf16, #tpu.memory_space<vmem>>) target_semaphore(%arg8 : memref<!tpu.dma_semaphore, #tpu.memory_space<semaphore_mem>>)
    %c0_i32_1 = arith.constant 0 : i32
    %3 = arith.cmpi eq, %arg0, %c0_i32_1 : i32
    %c0_i32_2 = arith.constant 0 : i32
    %4 = arith.cmpi eq, %arg1, %c0_i32_2 : i32
    %5 = arith.andi %3, %4 : i1
    %6 = arith.extui %5 : i1 to i32
    %c0_i32_3 = arith.constant 0 : i32
    %7 = arith.cmpi ne, %6, %c0_i32_3 : i32
    scf.if %7 {
      %cst_87 = arith.constant 0.000000e+00 : f32
      %78 = vector.broadcast %cst_87 : f32 to vector<1x128xf32>
      %c0_88 = arith.constant 0 : index
      %c0_89 = arith.constant 0 : index
      %79 = vector.load %arg5[%c0_88, %c0_89] : memref<1x128xf32, #tpu.memory_space<vmem>>, vector<1x128xf32>
      tpu.vector_store %arg5[%c0_88, %c0_89], %78 {strides = array<i32>} : memref<1x128xf32, #tpu.memory_space<vmem>>, vector<1x128xf32>,
      %cst_90 = arith.constant 0.000000e+00 : f32
      %80 = vector.broadcast %cst_90 : f32 to vector<1x128xf32>
      %c0_91 = arith.constant 0 : index
      %c0_92 = arith.constant 0 : index
      %81 = vector.load %arg6[%c0_91, %c0_92] : memref<1x128xf32, #tpu.memory_space<vmem>>, vector<1x128xf32>
      tpu.vector_store %arg6[%c0_91, %c0_92], %80 {strides = array<i32>} : memref<1x128xf32, #tpu.memory_space<vmem>>, vector<1x128xf32>,
    } else {
    }
    %c0_i32_4 = arith.constant 0 : i32
    %c0_i32_5 = arith.constant 0 : i32
    %8 = tpu.memref_slice %arg2[%arg0, %0, %c0_i32_4, %c0_i32_5] : memref<2x18x24x128xbf16, #tpu.memory_space<any>> -> memref<1x18x24x128xbf16, #tpu.memory_space<any>>
    %9 = tpu.memref_squeeze %8 : memref<1x18x24x128xbf16, #tpu.memory_space<any>> -> memref<18x24x128xbf16, #tpu.memory_space<any>>
    tpu.wait_dma2 semaphore(%arg8 : memref<!tpu.dma_semaphore, #tpu.memory_space<semaphore_mem>>) src(%9 : memref<18x24x128xbf16, #tpu.memory_space<any>>) dst(%arg7 : memref<18x24x128xbf16, #tpu.memory_space<vmem>>)
    %cst = arith.constant 0.000000e+00 : f32
    %10 = vector.broadcast %cst : f32 to vector<256x128xf32>
    %c0 = arith.constant 0 : index
    %c0_6 = arith.constant 0 : index
    %c0_7 = arith.constant 0 : index
    %11 = vector.load %arg7[%c0, %c0_6, %c0_7] : memref<18x24x128xbf16, #tpu.memory_space<vmem>>, vector<16x16x128xbf16>
    %12 = vector.shape_cast %11 : vector<16x16x128xbf16> to vector<256x128xbf16>
    %c0_8 = arith.constant 0 : index
    %c0_9 = arith.constant 0 : index
    %c0_10 = arith.constant 0 : index
    %c0_11 = arith.constant 0 : index
    %13 = vector.load %arg3[%c0_8, %c0_9, %c0_10, %c0_11] : memref<3x3x128x128xbf16, #tpu.memory_space<vmem>>, vector<1x1x128x128xbf16>
    %14 = vector.shape_cast %13 : vector<1x1x128x128xbf16> to vector<128x128xbf16>
    %cst_12 = arith.constant dense<0.000000e+00> : vector<256x128xf32>
    %15 = tpu.matmul %12, %14, %cst_12 {dimension_numbers = #tpu.dot_dimension_numbers<[1], [0], [0], [1], [0, 0, 1, 1], [], []>} : vector<256x128xbf16>, vector<128x128xbf16>, vector<256x128xf32> -> vector<256x128xf32>
    %16 = arith.addf %10, %15 : vector<256x128xf32>
    %c0_13 = arith.constant 0 : index
    %c1 = arith.constant 1 : index
    %c0_14 = arith.constant 0 : index
    %17 = vector.load %arg7[%c0_13, %c1, %c0_14] : memref<18x24x128xbf16, #tpu.memory_space<vmem>>, vector<16x16x128xbf16>
    %18 = vector.shape_cast %17 : vector<16x16x128xbf16> to vector<256x128xbf16>
    %c0_15 = arith.constant 0 : index
    %c1_16 = arith.constant 1 : index
    %c0_17 = arith.constant 0 : index
    %c0_18 = arith.constant 0 : index
    %19 = vector.load %arg3[%c0_15, %c1_16, %c0_17, %c0_18] : memref<3x3x128x128xbf16, #tpu.memory_space<vmem>>, vector<1x1x128x128xbf16>
    %20 = vector.shape_cast %19 : vector<1x1x128x128xbf16> to vector<128x128xbf16>
    %cst_19 = arith.constant dense<0.000000e+00> : vector<256x128xf32>
    %21 = tpu.matmul %18, %20, %cst_19 {dimension_numbers = #tpu.dot_dimension_numbers<[1], [0], [0], [1], [0, 0, 1, 1], [], []>} : vector<256x128xbf16>, vector<128x128xbf16>, vector<256x128xf32> -> vector<256x128xf32>
    %22 = arith.addf %16, %21 : vector<256x128xf32>
    %c0_20 = arith.constant 0 : index
    %c2 = arith.constant 2 : index
    %c0_21 = arith.constant 0 : index
    %23 = vector.load %arg7[%c0_20, %c2, %c0_21] : memref<18x24x128xbf16, #tpu.memory_space<vmem>>, vector<16x16x128xbf16>
    %24 = vector.shape_cast %23 : vector<16x16x128xbf16> to vector<256x128xbf16>
    %c0_22 = arith.constant 0 : index
    %c2_23 = arith.constant 2 : index
    %c0_24 = arith.constant 0 : index
    %c0_25 = arith.constant 0 : index
    %25 = vector.load %arg3[%c0_22, %c2_23, %c0_24, %c0_25] : memref<3x3x128x128xbf16, #tpu.memory_space<vmem>>, vector<1x1x128x128xbf16>
    %26 = vector.shape_cast %25 : vector<1x1x128x128xbf16> to vector<128x128xbf16>
    %cst_26 = arith.constant dense<0.000000e+00> : vector<256x128xf32>
    %27 = tpu.matmul %24, %26, %cst_26 {dimension_numbers = #tpu.dot_dimension_numbers<[1], [0], [0], [1], [0, 0, 1, 1], [], []>} : vector<256x128xbf16>, vector<128x128xbf16>, vector<256x128xf32> -> vector<256x128xf32>
    %28 = arith.addf %22, %27 : vector<256x128xf32>
    %c1_27 = arith.constant 1 : index
    %c0_28 = arith.constant 0 : index
    %c0_29 = arith.constant 0 : index
    %29 = vector.load %arg7[%c1_27, %c0_28, %c0_29] : memref<18x24x128xbf16, #tpu.memory_space<vmem>>, vector<16x16x128xbf16>
    %30 = vector.shape_cast %29 : vector<16x16x128xbf16> to vector<256x128xbf16>
    %c1_30 = arith.constant 1 : index
    %c0_31 = arith.constant 0 : index
    %c0_32 = arith.constant 0 : index
    %c0_33 = arith.constant 0 : index
    %31 = vector.load %arg3[%c1_30, %c0_31, %c0_32, %c0_33] : memref<3x3x128x128xbf16, #tpu.memory_space<vmem>>, vector<1x1x128x128xbf16>
    %32 = vector.shape_cast %31 : vector<1x1x128x128xbf16> to vector<128x128xbf16>
    %cst_34 = arith.constant dense<0.000000e+00> : vector<256x128xf32>
    %33 = tpu.matmul %30, %32, %cst_34 {dimension_numbers = #tpu.dot_dimension_numbers<[1], [0], [0], [1], [0, 0, 1, 1], [], []>} : vector<256x128xbf16>, vector<128x128xbf16>, vector<256x128xf32> -> vector<256x128xf32>
    %34 = arith.addf %28, %33 : vector<256x128xf32>
    %c1_35 = arith.constant 1 : index
    %c1_36 = arith.constant 1 : index
    %c0_37 = arith.constant 0 : index
    %35 = vector.load %arg7[%c1_35, %c1_36, %c0_37] : memref<18x24x128xbf16, #tpu.memory_space<vmem>>, vector<16x16x128xbf16>
    %36 = vector.shape_cast %35 : vector<16x16x128xbf16> to vector<256x128xbf16>
    %c1_38 = arith.constant 1 : index
    %c1_39 = arith.constant 1 : index
    %c0_40 = arith.constant 0 : index
    %c0_41 = arith.constant 0 : index
    %37 = vector.load %arg3[%c1_38, %c1_39, %c0_40, %c0_41] : memref<3x3x128x128xbf16, #tpu.memory_space<vmem>>, vector<1x1x128x128xbf16>
    %38 = vector.shape_cast %37 : vector<1x1x128x128xbf16> to vector<128x128xbf16>
    %cst_42 = arith.constant dense<0.000000e+00> : vector<256x128xf32>
    %39 = tpu.matmul %36, %38, %cst_42 {dimension_numbers = #tpu.dot_dimension_numbers<[1], [0], [0], [1], [0, 0, 1, 1], [], []>} : vector<256x128xbf16>, vector<128x128xbf16>, vector<256x128xf32> -> vector<256x128xf32>
    %40 = arith.addf %34, %39 : vector<256x128xf32>
    %c1_43 = arith.constant 1 : index
    %c2_44 = arith.constant 2 : index
    %c0_45 = arith.constant 0 : index
    %41 = vector.load %arg7[%c1_43, %c2_44, %c0_45] : memref<18x24x128xbf16, #tpu.memory_space<vmem>>, vector<16x16x128xbf16>
    %42 = vector.shape_cast %41 : vector<16x16x128xbf16> to vector<256x128xbf16>
    %c1_46 = arith.constant 1 : index
    %c2_47 = arith.constant 2 : index
    %c0_48 = arith.constant 0 : index
    %c0_49 = arith.constant 0 : index
    %43 = vector.load %arg3[%c1_46, %c2_47, %c0_48, %c0_49] : memref<3x3x128x128xbf16, #tpu.memory_space<vmem>>, vector<1x1x128x128xbf16>
    %44 = vector.shape_cast %43 : vector<1x1x128x128xbf16> to vector<128x128xbf16>
    %cst_50 = arith.constant dense<0.000000e+00> : vector<256x128xf32>
    %45 = tpu.matmul %42, %44, %cst_50 {dimension_numbers = #tpu.dot_dimension_numbers<[1], [0], [0], [1], [0, 0, 1, 1], [], []>} : vector<256x128xbf16>, vector<128x128xbf16>, vector<256x128xf32> -> vector<256x128xf32>
    %46 = arith.addf %40, %45 : vector<256x128xf32>
    %c2_51 = arith.constant 2 : index
    %c0_52 = arith.constant 0 : index
    %c0_53 = arith.constant 0 : index
    %47 = vector.load %arg7[%c2_51, %c0_52, %c0_53] : memref<18x24x128xbf16, #tpu.memory_space<vmem>>, vector<16x16x128xbf16>
    %48 = vector.shape_cast %47 : vector<16x16x128xbf16> to vector<256x128xbf16>
    %c2_54 = arith.constant 2 : index
    %c0_55 = arith.constant 0 : index
    %c0_56 = arith.constant 0 : index
    %c0_57 = arith.constant 0 : index
    %49 = vector.load %arg3[%c2_54, %c0_55, %c0_56, %c0_57] : memref<3x3x128x128xbf16, #tpu.memory_space<vmem>>, vector<1x1x128x128xbf16>
    %50 = vector.shape_cast %49 : vector<1x1x128x128xbf16> to vector<128x128xbf16>
    %cst_58 = arith.constant dense<0.000000e+00> : vector<256x128xf32>
    %51 = tpu.matmul %48, %50, %cst_58 {dimension_numbers = #tpu.dot_dimension_numbers<[1], [0], [0], [1], [0, 0, 1, 1], [], []>} : vector<256x128xbf16>, vector<128x128xbf16>, vector<256x128xf32> -> vector<256x128xf32>
    %52 = arith.addf %46, %51 : vector<256x128xf32>
    %c2_59 = arith.constant 2 : index
    %c1_60 = arith.constant 1 : index
    %c0_61 = arith.constant 0 : index
    %53 = vector.load %arg7[%c2_59, %c1_60, %c0_61] : memref<18x24x128xbf16, #tpu.memory_space<vmem>>, vector<16x16x128xbf16>
    %54 = vector.shape_cast %53 : vector<16x16x128xbf16> to vector<256x128xbf16>
    %c2_62 = arith.constant 2 : index
    %c1_63 = arith.constant 1 : index
    %c0_64 = arith.constant 0 : index
    %c0_65 = arith.constant 0 : index
    %55 = vector.load %arg3[%c2_62, %c1_63, %c0_64, %c0_65] : memref<3x3x128x128xbf16, #tpu.memory_space<vmem>>, vector<1x1x128x128xbf16>
    %56 = vector.shape_cast %55 : vector<1x1x128x128xbf16> to vector<128x128xbf16>
    %cst_66 = arith.constant dense<0.000000e+00> : vector<256x128xf32>
    %57 = tpu.matmul %54, %56, %cst_66 {dimension_numbers = #tpu.dot_dimension_numbers<[1], [0], [0], [1], [0, 0, 1, 1], [], []>} : vector<256x128xbf16>, vector<128x128xbf16>, vector<256x128xf32> -> vector<256x128xf32>
    %58 = arith.addf %52, %57 : vector<256x128xf32>
    %c2_67 = arith.constant 2 : index
    %c2_68 = arith.constant 2 : index
    %c0_69 = arith.constant 0 : index
    %59 = vector.load %arg7[%c2_67, %c2_68, %c0_69] : memref<18x24x128xbf16, #tpu.memory_space<vmem>>, vector<16x16x128xbf16>
    %60 = vector.shape_cast %59 : vector<16x16x128xbf16> to vector<256x128xbf16>
    %c2_70 = arith.constant 2 : index
    %c2_71 = arith.constant 2 : index
    %c0_72 = arith.constant 0 : index
    %c0_73 = arith.constant 0 : index
    %61 = vector.load %arg3[%c2_70, %c2_71, %c0_72, %c0_73] : memref<3x3x128x128xbf16, #tpu.memory_space<vmem>>, vector<1x1x128x128xbf16>
    %62 = vector.shape_cast %61 : vector<1x1x128x128xbf16> to vector<128x128xbf16>
    %cst_74 = arith.constant dense<0.000000e+00> : vector<256x128xf32>
    %63 = tpu.matmul %60, %62, %cst_74 {dimension_numbers = #tpu.dot_dimension_numbers<[1], [0], [0], [1], [0, 0, 1, 1], [], []>} : vector<256x128xbf16>, vector<128x128xbf16>, vector<256x128xf32> -> vector<256x128xf32>
    %64 = arith.addf %58, %63 : vector<256x128xf32>
    %65 = arith.truncf %64 : vector<256x128xf32> to vector<256x128xbf16>
    %c0_75 = arith.constant 0 : index
    %c0_76 = arith.constant 0 : index
    %66 = vector.load %arg4[%c0_75, %c0_76] : memref<256x128xbf16, #tpu.memory_space<vmem>>, vector<256x128xbf16>
    tpu.vector_store %arg4[%c0_75, %c0_76], %65 {strides = array<i32>} : memref<256x128xbf16, #tpu.memory_space<vmem>>, vector<256x128xbf16>,
    %c0_77 = arith.constant 0 : index
    %c0_78 = arith.constant 0 : index
    %67 = vector.load %arg5[%c0_77, %c0_78] : memref<1x128xf32, #tpu.memory_space<vmem>>, vector<1x128xf32>
    %cst_79 = arith.constant dense<0.000000e+00> : vector<128xf32>
    %68 = vector.multi_reduction <add>, %64, %cst_79 [0] : vector<256x128xf32> to vector<128xf32>
    %69 = vector.shape_cast %68 : vector<128xf32> to vector<1x128xf32>
    %70 = arith.addf %67, %69 : vector<1x128xf32>
    %c0_80 = arith.constant 0 : index
    %c0_81 = arith.constant 0 : index
    %71 = vector.load %arg5[%c0_80, %c0_81] : memref<1x128xf32, #tpu.memory_space<vmem>>, vector<1x128xf32>
    tpu.vector_store %arg5[%c0_80, %c0_81], %70 {strides = array<i32>} : memref<1x128xf32, #tpu.memory_space<vmem>>, vector<1x128xf32>,
    %c0_82 = arith.constant 0 : index
    %c0_83 = arith.constant 0 : index
    %72 = vector.load %arg6[%c0_82, %c0_83] : memref<1x128xf32, #tpu.memory_space<vmem>>, vector<1x128xf32>
    %73 = arith.mulf %64, %64 : vector<256x128xf32>
    %cst_84 = arith.constant dense<0.000000e+00> : vector<128xf32>
    %74 = vector.multi_reduction <add>, %73, %cst_84 [0] : vector<256x128xf32> to vector<128xf32>
    %75 = vector.shape_cast %74 : vector<128xf32> to vector<1x128xf32>
    %76 = arith.addf %72, %75 : vector<1x128xf32>
    %c0_85 = arith.constant 0 : index
    %c0_86 = arith.constant 0 : index
    %77 = vector.load %arg6[%c0_85, %c0_86] : memref<1x128xf32, #tpu.memory_space<vmem>>, vector<1x128xf32>
    tpu.vector_store %arg6[%c0_85, %c0_86], %76 {strides = array<i32>} : memref<1x128xf32, #tpu.memory_space<vmem>>, vector<1x128xf32>,
    return
  }
  func.func @transform_1(%arg0: i32, %arg1: i32) -> (i32, i32, i32, i32) {
    %c0_i32 = arith.constant 0 : i32
    %c0_i32_0 = arith.constant 0 : i32
    %c0_i32_1 = arith.constant 0 : i32
    %c0_i32_2 = arith.constant 0 : i32
    %c0_i32_3 = arith.constant 0 : i32
    return %c0_i32, %c0_i32_0, %c0_i32_1, %c0_i32_2 : i32, i32, i32, i32
  }
  func.func @transform_2(%arg0: i32, %arg1: i32) -> (i32, i32) {
    %c1_i32 = arith.constant 1 : i32
    %0 = arith.muli %arg0, %c1_i32 : i32
    %1 = arith.addi %0, %arg1 : i32
    %c0_i32 = arith.constant 0 : i32
    %c0_i32_0 = arith.constant 0 : i32
    return %1, %c0_i32 : i32, i32
  }
  func.func @transform_3(%arg0: i32, %arg1: i32) -> (i32, i32) {
    %c0_i32 = arith.constant 0 : i32
    %c0_i32_0 = arith.constant 0 : i32
    %c0_i32_1 = arith.constant 0 : i32
    return %c0_i32, %c0_i32_0 : i32, i32
  }
  func.func @transform_4(%arg0: i32, %arg1: i32) -> (i32, i32) {
    %c0_i32 = arith.constant 0 : i32
    %c0_i32_0 = arith.constant 0 : i32
    %c0_i32_1 = arith.constant 0 : i32
    return %c0_i32, %c0_i32_0 : i32, i32
  }
}

module attributes {stable_mosaic.version = 11 : i64} {
  func.func @_bn_affine_relu_kernel(%arg0: i32, %arg1: memref<512x128xbf16, #tpu.memory_space<vmem>>, %arg2: memref<1x128xf32, #tpu.memory_space<vmem>>, %arg3: memref<1x128xf32, #tpu.memory_space<vmem>>, %arg4: memref<512x128xf32, #tpu.memory_space<vmem>>) attributes {dimension_semantics = [#tpu.dimension_semantics<parallel>], iteration_bounds = array<i64: 1>, scalar_prefetch = 0 : i64, scratch_operands = 0 : i64, tpu.core_type = #tpu.core_type<tc>, window_params = [{transform_indices = @transform_0, window_bounds = array<i64: 512, 128>}, {pipeline_mode = #tpu.pipeline_mode<synchronous>, transform_indices = @transform_1, window_bounds = array<i64: 1, 128>}, {pipeline_mode = #tpu.pipeline_mode<synchronous>, transform_indices = @transform_2, window_bounds = array<i64: 1, 128>}, {transform_indices = @transform_3, window_bounds = array<i64: 512, 128>}]} {
    %c0 = arith.constant 0 : index
    %c0_0 = arith.constant 0 : index
    %0 = vector.load %arg1[%c0, %c0_0] : memref<512x128xbf16, #tpu.memory_space<vmem>>, vector<512x128xbf16>
    %1 = arith.extf %0 : vector<512x128xbf16> to vector<512x128xf32>
    %c0_1 = arith.constant 0 : index
    %c0_2 = arith.constant 0 : index
    %2 = vector.load %arg2[%c0_1, %c0_2] : memref<1x128xf32, #tpu.memory_space<vmem>>, vector<1x128xf32>
    %3 = vector.broadcast %2 : vector<1x128xf32> to vector<512x128xf32>
    %4 = arith.mulf %1, %3 : vector<512x128xf32>
    %c0_3 = arith.constant 0 : index
    %c0_4 = arith.constant 0 : index
    %5 = vector.load %arg3[%c0_3, %c0_4] : memref<1x128xf32, #tpu.memory_space<vmem>>, vector<1x128xf32>
    %6 = vector.broadcast %5 : vector<1x128xf32> to vector<512x128xf32>
    %7 = arith.addf %4, %6 : vector<512x128xf32>
    %cst = arith.constant 0.000000e+00 : f32
    %8 = vector.broadcast %cst : f32 to vector<512x128xf32>
    %9 = arith.maximumf %7, %8 : vector<512x128xf32>
    %c0_5 = arith.constant 0 : index
    %c0_6 = arith.constant 0 : index
    %10 = vector.load %arg4[%c0_5, %c0_6] : memref<512x128xf32, #tpu.memory_space<vmem>>, vector<512x128xf32>
    tpu.vector_store %arg4[%c0_5, %c0_6], %9 {strides = array<i32>} : memref<512x128xf32, #tpu.memory_space<vmem>>, vector<512x128xf32>,
    return
  }
  func.func @transform_0(%arg0: i32) -> (i32, i32) {
    %c0_i32 = arith.constant 0 : i32
    %c0_i32_0 = arith.constant 0 : i32
    return %arg0, %c0_i32 : i32, i32
  }
  func.func @transform_1(%arg0: i32) -> (i32, i32) {
    %c0_i32 = arith.constant 0 : i32
    %c0_i32_0 = arith.constant 0 : i32
    %c0_i32_1 = arith.constant 0 : i32
    return %c0_i32, %c0_i32_0 : i32, i32
  }
  func.func @transform_2(%arg0: i32) -> (i32, i32) {
    %c0_i32 = arith.constant 0 : i32
    %c0_i32_0 = arith.constant 0 : i32
    %c0_i32_1 = arith.constant 0 : i32
    return %c0_i32, %c0_i32_0 : i32, i32
  }
  func.func @transform_3(%arg0: i32) -> (i32, i32) {
    %c0_i32 = arith.constant 0 : i32
    %c0_i32_0 = arith.constant 0 : i32
    return %arg0, %c0_i32 : i32, i32
  }
}

</mosaic_0001>

<llo_original>
// kernel: conv_block_forward.5
$region0: #{conv_block_forward.5}
  #allocation0 [shape = 'u32[]', space=smem, size = 0x4, offset = 0x4, fixed_abs, tag = 'smem constant byte address 0x4 - core index']
  #allocation1 [shape = 'u32[72,128]{1,0:T(1,128)}', space=vmem, size = 0x9000, scoped, tag = 'internal scratch']
  %s0 = inlined_call_operand.vmem [shape: bf16[512,128], index: 0, kind: input, shape index: {}]
  %s1 = inlined_call_operand.vmem [shape: f32[1,128], index: 1, kind: input, shape index: {}]
  %s2 = inlined_call_operand.vmem [shape: f32[1,128], index: 2, kind: input, shape index: {}]
  %s3 = inlined_call_operand.vmem [shape: bf16[512,128], index: 3, kind: output, shape index: {}]
  %s4 = sld [smem:[#allocation0]]
  $region22: #{conv_block_forward.5} parent=0
    _
  %s6 = ssub.s32 1, %s4
  %s7 = scalar_select 0, %s6, %s4
  // Predicated region
  $region2: #{conv_block_forward.5} parent=0 // pred_check
    _
  $region3: #{conv_block_forward.5} parent=0 // pred_check_branch
    %9 = sbr.rel (0) target = $region5
  $region4: #{conv_block_forward.5} parent=0 // pred_region
    _
  $region5: #{conv_block_forward.5} parent=0 // pred_fallthru
    _
  // Predicated region
  $region6: #{conv_block_forward.5} parent=0 // pred_check
    _
  $region7: #{conv_block_forward.5} parent=0 // pred_check_branch
    %11 = sbr.rel (0) target = $region9
  $region8: #{conv_block_forward.5} parent=0 // pred_region
    _
  $region9: #{conv_block_forward.5} parent=0 // pred_fallthru
    _
  // Predicated region
  $region10: #{conv_block_forward.5} parent=0 // pred_check
    _
  $region11: #{conv_block_forward.5} parent=0 // pred_check_branch
    %13 = sbr.rel (0) target = $region13
  $region12: #{conv_block_forward.5} parent=0 // pred_region
    _
  $region13: #{conv_block_forward.5} parent=0 // pred_fallthru
    _
  %v14 = vld [vmem:[%s0] sm:$0xf]
  %v15 = vld [vmem:[%s0 + $0x4] sm:$0xf]
  %v16 = vld [vmem:[%s0 + $0x8] sm:$0xf]
  %v17 = vld [vmem:[%s0 + $0xc] sm:$0xf]
  %v18 = vld [vmem:[%s0 + $0x10] sm:$0xf]
  %v19 = vld [vmem:[%s0 + $0x14] sm:$0xf]
  %v20 = vld [vmem:[%s0 + $0x18] sm:$0xf]
  %v21 = vld [vmem:[%s0 + $0x1c] sm:$0xf]
  %v22 = vld [vmem:[%s0 + $0x20] sm:$0xf]
  %v23 = vld [vmem:[%s0 + $0x24] sm:$0xf]
  %v24 = vld [vmem:[%s0 + $0x28] sm:$0xf]
  %v25 = vld [vmem:[%s0 + $0x2c] sm:$0xf]
  %v26 = vld [vmem:[%s0 + $0x30] sm:$0xf]
  %v27 = vld [vmem:[%s0 + $0x34] sm:$0xf]
  %v28 = vld [vmem:[%s0 + $0x38] sm:$0xf]
  %v29 = vld [vmem:[%s0 + $0x3c] sm:$0xf]
  %v30 = vld [vmem:[%s0 + $0x40] sm:$0xf]
  %v31 = vld [vmem:[%s0 + $0x44] sm:$0xf]
  %v32 = vld [vmem:[%s0 + $0x48] sm:$0xf]
  %v33 = vld [vmem:[%s0 + $0x4c] sm:$0xf]
  %v34 = vld [vmem:[%s0 + $0x50] sm:$0xf]
  %v35 = vld [vmem:[%s0 + $0x54] sm:$0xf]
  %v36 = vld [vmem:[%s0 + $0x58] sm:$0xf]
  %v37 = vld [vmem:[%s0 + $0x5c] sm:$0xf]
  %v38 = vld [vmem:[%s0 + $0x60] sm:$0xf]
  %v39 = vld [vmem:[%s0 + $0x64] sm:$0xf]
  %v40 = vld [vmem:[%s0 + $0x68] sm:$0xf]
  %v41 = vld [vmem:[%s0 + $0x6c] sm:$0xf]
  %v42 = vld [vmem:[%s0 + $0x70] sm:$0xf]
  %v43 = vld [vmem:[%s0 + $0x74] sm:$0xf]
  %v44 = vld [vmem:[%s0 + $0x78] sm:$0xf]
  %v45 = vld [vmem:[%s0 + $0x7c] sm:$0xf]
  %v46 = vld [vmem:[%s0 + $0x80] sm:$0xf]
  %v47 = vld [vmem:[%s0 + $0x84] sm:$0xf]
  %v48 = vld [vmem:[%s0 + $0x88] sm:$0xf]
  %v49 = vld [vmem:[%s0 + $0x8c] sm:$0xf]
  %v50 = vld [vmem:[%s0 + $0x90] sm:$0xf]
  %v51 = vld [vmem:[%s0 + $0x94] sm:$0xf]
  %v52 = vld [vmem:[%s0 + $0x98] sm:$0xf]
  %v53 = vld [vmem:[%s0 + $0x9c] sm:$0xf]
  %v54 = vld [vmem:[%s0 + $0xa0] sm:$0xf]
  %v55 = vld [vmem:[%s0 + $0xa4] sm:$0xf]
  %v56 = vld [vmem:[%s0 + $0xa8] sm:$0xf]
  %v57 = vld [vmem:[%s0 + $0xac] sm:$0xf]
  %v58 = vld [vmem:[%s0 + $0xb0] sm:$0xf]
  %v59 = vld [vmem:[%s0 + $0xb4] sm:$0xf]
  %v60 = vld [vmem:[%s0 + $0xb8] sm:$0xf]
  %v61 = vld [vmem:[%s0 + $0xbc] sm:$0xf]
  %v62 = vld [vmem:[%s0 + $0xc0] sm:$0xf]
  %v63 = vld [vmem:[%s0 + $0xc4] sm:$0xf]
  %v64 = vld [vmem:[%s0 + $0xc8] sm:$0xf]
  %v65 = vld [vmem:[%s0 + $0xcc] sm:$0xf]
  %v66 = vld [vmem:[%s0 + $0xd0] sm:$0xf]
  %v67 = vld [vmem:[%s0 + $0xd4] sm:$0xf]
  %v68 = vld [vmem:[%s0 + $0xd8] sm:$0xf]
  %v69 = vld [vmem:[%s0 + $0xdc] sm:$0xf]
  %v70 = vld [vmem:[%s0 + $0xe0] sm:$0xf]
  %v71 = vld [vmem:[%s0 + $0xe4] sm:$0xf]
  %v72 = vld [vmem:[%s0 + $0xe8] sm:$0xf]
  %v73 = vld [vmem:[%s0 + $0xec] sm:$0xf]
  %v74 = vld [vmem:[%s0 + $0xf0] sm:$0xf]
  %v75 = vld [vmem:[%s0 + $0xf4] sm:$0xf]
  %v76 = vld [vmem:[%s0 + $0xf8] sm:$0xf]
  %v77 = vld [vmem:[%s0 + $0xfc] sm:$0xf]
  %v78 = vunpack.c.l.bf16 %v14
  %v79 = vunpack.c.l.bf16 %v15
  %v80 = vunpack.c.l.bf16 %v16
  %v81 = vunpack.c.l.bf16 %v17
  %v82 = vunpack.c.l.bf16 %v18
  %v83 = vunpack.c.l.bf16 %v19
  %v84 = vunpack.c.l.bf16 %v20
  %v85 = vunpack.c.l.bf16 %v21
  %v86 = vunpack.c.l.bf16 %v22
  %v87 = vunpack.c.l.bf16 %v23
  %v88 = vunpack.c.l.bf16 %v24
  %v89 = vunpack.c.l.bf16 %v25
  %v90 = vunpack.c.l.bf16 %v26
  %v91 = vunpack.c.l.bf16 %v27
  %v92 = vunpack.c.l.bf16 %v28
  %v93 = vunpack.c.l.bf16 %v29
  %v94 = vunpack.c.l.bf16 %v30
  %v95 = vunpack.c.l.bf16 %v31
  %v96 = vunpack.c.l.bf16 %v32
  %v97 = vunpack.c.l.bf16 %v33
  %v98 = vunpack.c.l.bf16 %v34
  %v99 = vunpack.c.l.bf16 %v35
  %v100 = vunpack.c.l.bf16 %v36
  %v101 = vunpack.c.l.bf16 %v37
  %v102 = vunpack.c.l.bf16 %v38
  %v103 = vunpack.c.l.bf16 %v39
  %v104 = vunpack.c.l.bf16 %v40
  %v105 = vunpack.c.l.bf16 %v41
  %v106 = vunpack.c.l.bf16 %v42
  %v107 = vunpack.c.l.bf16 %v43
  %v108 = vunpack.c.l.bf16 %v44
  %v109 = vunpack.c.l.bf16 %v45
  %v110 = vunpack.c.l.bf16 %v46
  %v111 = vunpack.c.l.bf16 %v47
  %v112 = vunpack.c.l.bf16 %v48
  %v113 = vunpack.c.l.bf16 %v49
  %v114 = vunpack.c.l.bf16 %v50
  %v115 = vunpack.c.l.bf16 %v51
  %v116 = vunpack.c.l.bf16 %v52
  %v117 = vunpack.c.l.bf16 %v53
  %v118 = vunpack.c.l.bf16 %v54
  %v119 = vunpack.c.l.bf16 %v55
  %v120 = vunpack.c.l.bf16 %v56
  %v121 = vunpack.c.l.bf16 %v57
  %v122 = vunpack.c.l.bf16 %v58
  %v123 = vunpack.c.l.bf16 %v59
  %v124 = vunpack.c.l.bf16 %v60
  %v125 = vunpack.c.l.bf16 %v61
  %v126 = vunpack.c.l.bf16 %v62
  %v127 = vunpack.c.l.bf16 %v63
  %v128 = vunpack.c.l.bf16 %v64
  %v129 = vunpack.c.l.bf16 %v65
  %v130 = vunpack.c.l.bf16 %v66
  %v131 = vunpack.c.l.bf16 %v67
  %v132 = vunpack.c.l.bf16 %v68
  %v133 = vunpack.c.l.bf16 %v69
  %v134 = vunpack.c.l.bf16 %v70
  %v135 = vunpack.c.l.bf16 %v71
  %v136 = vunpack.c.l.bf16 %v72
  %v137 = vunpack.c.l.bf16 %v73
  %v138 = vunpack.c.l.bf16 %v74
  %v139 = vunpack.c.l.bf16 %v75
  %v140 = vunpack.c.l.bf16 %v76
  %v141 = vunpack.c.l.bf16 %v77
  %v142 = vld [vmem:[%s1] sm:$0x1]
  %v144 = vperm.slane %v142, 0
  %v146 = vmul.f32 %v78, %v144
  %v147 = vmul.f32 %v79, %v144
  %v148 = vmul.f32 %v80, %v144
  %v149 = vmul.f32 %v81, %v144
  %v150 = vmul.f32 %v82, %v144
  %v151 = vmul.f32 %v83, %v144
  %v152 = vmul.f32 %v84, %v144
  %v153 = vmul.f32 %v85, %v144
  %v154 = vmul.f32 %v86, %v144
  %v155 = vmul.f32 %v87, %v144
  %v156 = vmul.f32 %v88, %v144
  %v157 = vmul.f32 %v89, %v144
  %v158 = vmul.f32 %v90, %v144
  %v159 = vmul.f32 %v91, %v144
  %v160 = vmul.f32 %v92, %v144
  %v161 = vmul.f32 %v93, %v144
  %v162 = vmul.f32 %v94, %v144
  %v163 = vmul.f32 %v95, %v144
  %v164 = vmul.f32 %v96, %v144
  %v165 = vmul.f32 %v97, %v144
  %v166 = vmul.f32 %v98, %v144
  %v167 = vmul.f32 %v99, %v144
  %v168 = vmul.f32 %v100, %v144
  %v169 = vmul.f32 %v101, %v144
  %v170 = vmul.f32 %v102, %v144
  %v171 = vmul.f32 %v103, %v144
  %v172 = vmul.f32 %v104, %v144
  %v173 = vmul.f32 %v105, %v144
  %v174 = vmul.f32 %v106, %v144
  %v175 = vmul.f32 %v107, %v144
  %v176 = vmul.f32 %v108, %v144
  %v177 = vmul.f32 %v109, %v144
  %v178 = vmul.f32 %v110, %v144
  %v179 = vmul.f32 %v111, %v144
  %v180 = vmul.f32 %v112, %v144
  %v181 = vmul.f32 %v113, %v144
  %v182 = vmul.f32 %v114, %v144
  %v183 = vmul.f32 %v115, %v144
  %v184 = vmul.f32 %v116, %v144
  %v185 = vmul.f32 %v117, %v144
  %v186 = vmul.f32 %v118, %v144
  %v187 = vmul.f32 %v119, %v144
  %v188 = vmul.f32 %v120, %v144
  %v189 = vmul.f32 %v121, %v144
  %v190 = vmul.f32 %v122, %v144
  %v191 = vmul.f32 %v123, %v144
  %v192 = vmul.f32 %v124, %v144
  %v193 = vmul.f32 %v125, %v144
  %v194 = vmul.f32 %v126, %v144
  %v195 = vmul.f32 %v127, %v144
  %v196 = vmul.f32 %v128, %v144
  %v197 = vmul.f32 %v129, %v144
  %v198 = vmul.f32 %v130, %v144
  %v199 = vmul.f32 %v131, %v144
  %v200 = vmul.f32 %v132, %v144
  %v201 = vmul.f32 %v133, %v144
  %v202 = vmul.f32 %v134, %v144
  %v203 = vmul.f32 %v135, %v144
  %v204 = vmul.f32 %v136, %v144
  %v205 = vmul.f32 %v137, %v144
  %v206 = vmul.f32 %v138, %v144
  %v207 = vmul.f32 %v139, %v144
  %v208 = vmul.f32 %v140, %v144
  %v209 = vmul.f32 %v141, %v144
  %v210 = vld [vmem:[%s2] sm:$0x1]
  %v212 = vperm.slane %v210, 0
  %v214 = vadd.f32 %v146, %v212
  %v215 = vadd.f32 %v147, %v212
  %v216 = vadd.f32 %v148, %v212
  %v217 = vadd.f32 %v149, %v212
  %v218 = vadd.f32 %v150, %v212
  %v219 = vadd.f32 %v151, %v212
  %v220 = vadd.f32 %v152, %v212
  %v221 = vadd.f32 %v153, %v212
  %v222 = vadd.f32 %v154, %v212
  %v223 = vadd.f32 %v155, %v212
  %v224 = vadd.f32 %v156, %v212
  %v225 = vadd.f32 %v157, %v212
  %v226 = vadd.f32 %v158, %v212
  %v227 = vadd.f32 %v159, %v212
  %v228 = vadd.f32 %v160, %v212
  %v229 = vadd.f32 %v161, %v212
  %v230 = vadd.f32 %v162, %v212
  %v231 = vadd.f32 %v163, %v212
  %v232 = vadd.f32 %v164, %v212
  %v233 = vadd.f32 %v165, %v212
  %v234 = vadd.f32 %v166, %v212
  %v235 = vadd.f32 %v167, %v212
  %v236 = vadd.f32 %v168, %v212
  %v237 = vadd.f32 %v169, %v212
  %v238 = vadd.f32 %v170, %v212
  %v239 = vadd.f32 %v171, %v212
  %v240 = vadd.f32 %v172, %v212
  %v241 = vadd.f32 %v173, %v212
  %v242 = vadd.f32 %v174, %v212
  %v243 = vadd.f32 %v175, %v212
  %v244 = vadd.f32 %v176, %v212
  %v245 = vadd.f32 %v177, %v212
  %v246 = vadd.f32 %v178, %v212
  %v247 = vadd.f32 %v179, %v212
  %v248 = vadd.f32 %v180, %v212
  %v249 = vadd.f32 %v181, %v212
  %v250 = vadd.f32 %v182, %v212
  %v251 = vadd.f32 %v183, %v212
  %v252 = vadd.f32 %v184, %v212
  %v253 = vadd.f32 %v185, %v212
  %v254 = vadd.f32 %v186, %v212
  %v255 = vadd.f32 %v187, %v212
  %v256 = vadd.f32 %v188, %v212
  %v257 = vadd.f32 %v189, %v212
  %v258 = vadd.f32 %v190, %v212
  %v259 = vadd.f32 %v191, %v212
  %v260 = vadd.f32 %v192, %v212
  %v261 = vadd.f32 %v193, %v212
  %v262 = vadd.f32 %v194, %v212
  %v263 = vadd.f32 %v195, %v212
  %v264 = vadd.f32 %v196, %v212
  %v265 = vadd.f32 %v197, %v212
  %v266 = vadd.f32 %v198, %v212
  %v267 = vadd.f32 %v199, %v212
  %v268 = vadd.f32 %v200, %v212
  %v269 = vadd.f32 %v201, %v212
  %v270 = vadd.f32 %v202, %v212
  %v271 = vadd.f32 %v203, %v212
  %v272 = vadd.f32 %v204, %v212
  %v273 = vadd.f32 %v205, %v212
  %v274 = vadd.f32 %v206, %v212
  %v275 = vadd.f32 %v207, %v212
  %v276 = vadd.f32 %v208, %v212
  %v277 = vadd.f32 %v209, %v212
  %v278 = vmax.f32 %v214, 0.0
  %v279 = vmax.f32 %v215, 0.0
  %v280 = vmax.f32 %v216, 0.0
  %v281 = vmax.f32 %v217, 0.0
  %v282 = vmax.f32 %v218, 0.0
  %v283 = vmax.f32 %v219, 0.0
  %v284 = vmax.f32 %v220, 0.0
  %v285 = vmax.f32 %v221, 0.0
  %v286 = vmax.f32 %v222, 0.0
  %v287 = vmax.f32 %v223, 0.0
  %v288 = vmax.f32 %v224, 0.0
  %v289 = vmax.f32 %v225, 0.0
  %v290 = vmax.f32 %v226, 0.0
  %v291 = vmax.f32 %v227, 0.0
  %v292 = vmax.f32 %v228, 0.0
  %v293 = vmax.f32 %v229, 0.0
  %v294 = vmax.f32 %v230, 0.0
  %v295 = vmax.f32 %v231, 0.0
  %v296 = vmax.f32 %v232, 0.0
  %v297 = vmax.f32 %v233, 0.0
  %v298 = vmax.f32 %v234, 0.0
  %v299 = vmax.f32 %v235, 0.0
  %v300 = vmax.f32 %v236, 0.0
  %v301 = vmax.f32 %v237, 0.0
  %v302 = vmax.f32 %v238, 0.0
  %v303 = vmax.f32 %v239, 0.0
  %v304 = vmax.f32 %v240, 0.0
  %v305 = vmax.f32 %v241, 0.0
  %v306 = vmax.f32 %v242, 0.0
  %v307 = vmax.f32 %v243, 0.0
  %v308 = vmax.f32 %v244, 0.0
  %v309 = vmax.f32 %v245, 0.0
  %v310 = vmax.f32 %v246, 0.0
  %v311 = vmax.f32 %v247, 0.0
  %v312 = vmax.f32 %v248, 0.0
  %v313 = vmax.f32 %v249, 0.0
  %v314 = vmax.f32 %v250, 0.0
  %v315 = vmax.f32 %v251, 0.0
  %v316 = vmax.f32 %v252, 0.0
  %v317 = vmax.f32 %v253, 0.0
  %v318 = vmax.f32 %v254, 0.0
  %v319 = vmax.f32 %v255, 0.0
  %v320 = vmax.f32 %v256, 0.0
  %v321 = vmax.f32 %v257, 0.0
  %v322 = vmax.f32 %v258, 0.0
  %v323 = vmax.f32 %v259, 0.0
  %v324 = vmax.f32 %v260, 0.0
  %v325 = vmax.f32 %v261, 0.0
  %v326 = vmax.f32 %v262, 0.0
  %v327 = vmax.f32 %v263, 0.0
  %v328 = vmax.f32 %v264, 0.0
  %v329 = vmax.f32 %v265, 0.0
  %v330 = vmax.f32 %v266, 0.0
  %v331 = vmax.f32 %v267, 0.0
  %v332 = vmax.f32 %v268, 0.0
  %v333 = vmax.f32 %v269, 0.0
  %v334 = vmax.f32 %v270, 0.0
  %v335 = vmax.f32 %v271, 0.0
  %v336 = vmax.f32 %v272, 0.0
  %v337 = vmax.f32 %v273, 0.0
  %v338 = vmax.f32 %v274, 0.0
  %v339 = vmax.f32 %v275, 0.0
  %v340 = vmax.f32 %v276, 0.0
  %v341 = vmax.f32 %v277, 0.0
  %v342 = vpack.c.bf16 %v278, %v278
  %v343 = vpack.c.bf16 %v279, %v279
  %v344 = vpack.c.bf16 %v280, %v280
  %v345 = vpack.c.bf16 %v281, %v281
  %v346 = vpack.c.bf16 %v282, %v282
  %v347 = vpack.c.bf16 %v283, %v283
  %v348 = vpack.c.bf16 %v284, %v284
  %v349 = vpack.c.bf16 %v285, %v285
  %v350 = vpack.c.bf16 %v286, %v286
  %v351 = vpack.c.bf16 %v287, %v287
  %v352 = vpack.c.bf16 %v288, %v288
  %v353 = vpack.c.bf16 %v289, %v289
  %v354 = vpack.c.bf16 %v290, %v290
  %v355 = vpack.c.bf16 %v291, %v291
  %v356 = vpack.c.bf16 %v292, %v292
  %v357 = vpack.c.bf16 %v293, %v293
  %v358 = vpack.c.bf16 %v294, %v294
  %v359 = vpack.c.bf16 %v295, %v295
  %v360 = vpack.c.bf16 %v296, %v296
  %v361 = vpack.c.bf16 %v297, %v297
  %v362 = vpack.c.bf16 %v298, %v298
  %v363 = vpack.c.bf16 %v299, %v299
  %v364 = vpack.c.bf16 %v300, %v300
  %v365 = vpack.c.bf16 %v301, %v301
  %v366 = vpack.c.bf16 %v302, %v302
  %v367 = vpack.c.bf16 %v303, %v303
  %v368 = vpack.c.bf16 %v304, %v304
  %v369 = vpack.c.bf16 %v305, %v305
  %v370 = vpack.c.bf16 %v306, %v306
  %v371 = vpack.c.bf16 %v307, %v307
  %v372 = vpack.c.bf16 %v308, %v308
  %v373 = vpack.c.bf16 %v309, %v309
  %v374 = vpack.c.bf16 %v310, %v310
  %v375 = vpack.c.bf16 %v311, %v311
  %v376 = vpack.c.bf16 %v312, %v312
  %v377 = vpack.c.bf16 %v313, %v313
  %v378 = vpack.c.bf16 %v314, %v314
  %v379 = vpack.c.bf16 %v315, %v315
  %v380 = vpack.c.bf16 %v316, %v316
  %v381 = vpack.c.bf16 %v317, %v317
  %v382 = vpack.c.bf16 %v318, %v318
  %v383 = vpack.c.bf16 %v319, %v319
  %v384 = vpack.c.bf16 %v320, %v320
  %v385 = vpack.c.bf16 %v321, %v321
  %v386 = vpack.c.bf16 %v322, %v322
  %v387 = vpack.c.bf16 %v323, %v323
  %v388 = vpack.c.bf16 %v324, %v324
  %v389 = vpack.c.bf16 %v325, %v325
  %v390 = vpack.c.bf16 %v326, %v326
  %v391 = vpack.c.bf16 %v327, %v327
  %v392 = vpack.c.bf16 %v328, %v328
  %v393 = vpack.c.bf16 %v329, %v329
  %v394 = vpack.c.bf16 %v330, %v330
  %v395 = vpack.c.bf16 %v331, %v331
  %v396 = vpack.c.bf16 %v332, %v332
  %v397 = vpack.c.bf16 %v333, %v333
  %v398 = vpack.c.bf16 %v334, %v334
  %v399 = vpack.c.bf16 %v335, %v335
  %v400 = vpack.c.bf16 %v336, %v336
  %v401 = vpack.c.bf16 %v337, %v337
  %v402 = vpack.c.bf16 %v338, %v338
  %v403 = vpack.c.bf16 %v339, %v339
  %v404 = vpack.c.bf16 %v340, %v340
  %v405 = vpack.c.bf16 %v341, %v341
  %406 = vst [vmem:[%s3] sm:$0xf] %v342
  %407 = vst [vmem:[%s3 + $0x4] sm:$0xf] %v343
  %408 = vst [vmem:[%s3 + $0x8] sm:$0xf] %v344
  %409 = vst [vmem:[%s3 + $0xc] sm:$0xf] %v345
  %410 = vst [vmem:[%s3 + $0x10] sm:$0xf] %v346
  %411 = vst [vmem:[%s3 + $0x14] sm:$0xf] %v347
  %412 = vst [vmem:[%s3 + $0x18] sm:$0xf] %v348
  %413 = vst [vmem:[%s3 + $0x1c] sm:$0xf] %v349
  %414 = vst [vmem:[%s3 + $0x20] sm:$0xf] %v350
  %415 = vst [vmem:[%s3 + $0x24] sm:$0xf] %v351
  %416 = vst [vmem:[%s3 + $0x28] sm:$0xf] %v352
  %417 = vst [vmem:[%s3 + $0x2c] sm:$0xf] %v353
  %418 = vst [vmem:[%s3 + $0x30] sm:$0xf] %v354
  %419 = vst [vmem:[%s3 + $0x34] sm:$0xf] %v355
  %420 = vst [vmem:[%s3 + $0x38] sm:$0xf] %v356
  %421 = vst [vmem:[%s3 + $0x3c] sm:$0xf] %v357
  %422 = vst [vmem:[%s3 + $0x40] sm:$0xf] %v358
  %423 = vst [vmem:[%s3 + $0x44] sm:$0xf] %v359
  %424 = vst [vmem:[%s3 + $0x48] sm:$0xf] %v360
  %425 = vst [vmem:[%s3 + $0x4c] sm:$0xf] %v361
  %426 = vst [vmem:[%s3 + $0x50] sm:$0xf] %v362
  %427 = vst [vmem:[%s3 + $0x54] sm:$0xf] %v363
  %428 = vst [vmem:[%s3 + $0x58] sm:$0xf] %v364
  %429 = vst [vmem:[%s3 + $0x5c] sm:$0xf] %v365
  %430 = vst [vmem:[%s3 + $0x60] sm:$0xf] %v366
  %431 = vst [vmem:[%s3 + $0x64] sm:$0xf] %v367
  %432 = vst [vmem:[%s3 + $0x68] sm:$0xf] %v368
  %433 = vst [vmem:[%s3 + $0x6c] sm:$0xf] %v369
  %434 = vst [vmem:[%s3 + $0x70] sm:$0xf] %v370
  %435 = vst [vmem:[%s3 + $0x74] sm:$0xf] %v371
  %436 = vst [vmem:[%s3 + $0x78] sm:$0xf] %v372
  %437 = vst [vmem:[%s3 + $0x7c] sm:$0xf] %v373
  %438 = vst [vmem:[%s3 + $0x80] sm:$0xf] %v374
  %439 = vst [vmem:[%s3 + $0x84] sm:$0xf] %v375
  %440 = vst [vmem:[%s3 + $0x88] sm:$0xf] %v376
  %441 = vst [vmem:[%s3 + $0x8c] sm:$0xf] %v377
  %442 = vst [vmem:[%s3 + $0x90] sm:$0xf] %v378
  %443 = vst [vmem:[%s3 + $0x94] sm:$0xf] %v379
  %444 = vst [vmem:[%s3 + $0x98] sm:$0xf] %v380
  %445 = vst [vmem:[%s3 + $0x9c] sm:$0xf] %v381
  %446 = vst [vmem:[%s3 + $0xa0] sm:$0xf] %v382
  %447 = vst [vmem:[%s3 + $0xa4] sm:$0xf] %v383
  %448 = vst [vmem:[%s3 + $0xa8] sm:$0xf] %v384
  %449 = vst [vmem:[%s3 + $0xac] sm:$0xf] %v385
  %450 = vst [vmem:[%s3 + $0xb0] sm:$0xf] %v386
  %451 = vst [vmem:[%s3 + $0xb4] sm:$0xf] %v387
  %452 = vst [vmem:[%s3 + $0xb8] sm:$0xf] %v388
  %453 = vst [vmem:[%s3 + $0xbc] sm:$0xf] %v389
  %454 = vst [vmem:[%s3 + $0xc0] sm:$0xf] %v390
  %455 = vst [vmem:[%s3 + $0xc4] sm:$0xf] %v391
  %456 = vst [vmem:[%s3 + $0xc8] sm:$0xf] %v392
  %457 = vst [vmem:[%s3 + $0xcc] sm:$0xf] %v393
  %458 = vst [vmem:[%s3 + $0xd0] sm:$0xf] %v394
  %459 = vst [vmem:[%s3 + $0xd4] sm:$0xf] %v395
  %460 = vst [vmem:[%s3 + $0xd8] sm:$0xf] %v396
  %461 = vst [vmem:[%s3 + $0xdc] sm:$0xf] %v397
  %462 = vst [vmem:[%s3 + $0xe0] sm:$0xf] %v398
  %463 = vst [vmem:[%s3 + $0xe4] sm:$0xf] %v399
  %464 = vst [vmem:[%s3 + $0xe8] sm:$0xf] %v400
  %465 = vst [vmem:[%s3 + $0xec] sm:$0xf] %v401
  %466 = vst [vmem:[%s3 + $0xf0] sm:$0xf] %v402
  %467 = vst [vmem:[%s3 + $0xf4] sm:$0xf] %v403
  %468 = vst [vmem:[%s3 + $0xf8] sm:$0xf] %v404
  %469 = vst [vmem:[%s3 + $0xfc] sm:$0xf] %v405
  // Predicated region
  $region14: #{conv_block_forward.5} parent=0 // pred_check
    _
  $region15: #{conv_block_forward.5} parent=0 // pred_check_branch
    %471 = sbr.rel (0) target = $region17
  $region16: #{conv_block_forward.5} parent=0 // pred_region
    _
  $region17: #{conv_block_forward.5} parent=0 // pred_fallthru
    _
  // Predicated region
  $region18: #{conv_block_forward.5} parent=0 // pred_check
    _
  $region19: #{conv_block_forward.5} parent=0 // pred_check_branch
    %473 = sbr.rel (0) target = $region21
  $region20: #{conv_block_forward.5} parent=0 // pred_region
    _
  $region21: #{conv_block_forward.5} parent=0 // pred_fallthru
    _

// kernel: conv_block_forward.7
$region0: #{conv_block_forward.7}
  #allocation0 [shape = 'u32[]', space=smem, size = 0x4, offset = 0x4, fixed_abs, tag = 'smem constant byte address 0x4 - core index']
  #allocation1 [shape = 'u32[72,128]{1,0:T(1,128)}', space=vmem, size = 0x9000, scoped, tag = 'internal scratch']
  %s0 = inlined_call_operand.vmem [shape: bf16[512,128], index: 0, kind: input, shape index: {}]
  %s1 = inlined_call_operand.vmem [shape: f32[1,128], index: 1, kind: input, shape index: {}]
  %s2 = inlined_call_operand.vmem [shape: f32[1,128], index: 2, kind: input, shape index: {}]
  %s3 = inlined_call_operand.vmem [shape: f32[512,128], index: 3, kind: output, shape index: {}]
  %s4 = sld [smem:[#allocation0]]
  $region22: #{conv_block_forward.7} parent=0
    _
  %s6 = ssub.s32 1, %s4
  %s7 = scalar_select 0, %s6, %s4
  // Predicated region
  $region2: #{conv_block_forward.7} parent=0 // pred_check
    _
  $region3: #{conv_block_forward.7} parent=0 // pred_check_branch
    %9 = sbr.rel (0) target = $region5
  $region4: #{conv_block_forward.7} parent=0 // pred_region
    _
  $region5: #{conv_block_forward.7} parent=0 // pred_fallthru
    _
  // Predicated region
  $region6: #{conv_block_forward.7} parent=0 // pred_check
    _
  $region7: #{conv_block_forward.7} parent=0 // pred_check_branch
    %11 = sbr.rel (0) target = $region9
  $region8: #{conv_block_forward.7} parent=0 // pred_region
    _
  $region9: #{conv_block_forward.7} parent=0 // pred_fallthru
    _
  // Predicated region
  $region10: #{conv_block_forward.7} parent=0 // pred_check
    _
  $region11: #{conv_block_forward.7} parent=0 // pred_check_branch
    %13 = sbr.rel (0) target = $region13
  $region12: #{conv_block_forward.7} parent=0 // pred_region
    _
  $region13: #{conv_block_forward.7} parent=0 // pred_fallthru
    _
  %v14 = vld [vmem:[%s0] sm:$0xf]
  %v15 = vld [vmem:[%s0 + $0x4] sm:$0xf]
  %v16 = vld [vmem:[%s0 + $0x8] sm:$0xf]
  %v17 = vld [vmem:[%s0 + $0xc] sm:$0xf]
  %v18 = vld [vmem:[%s0 + $0x10] sm:$0xf]
  %v19 = vld [vmem:[%s0 + $0x14] sm:$0xf]
  %v20 = vld [vmem:[%s0 + $0x18] sm:$0xf]
  %v21 = vld [vmem:[%s0 + $0x1c] sm:$0xf]
  %v22 = vld [vmem:[%s0 + $0x20] sm:$0xf]
  %v23 = vld [vmem:[%s0 + $0x24] sm:$0xf]
  %v24 = vld [vmem:[%s0 + $0x28] sm:$0xf]
  %v25 = vld [vmem:[%s0 + $0x2c] sm:$0xf]
  %v26 = vld [vmem:[%s0 + $0x30] sm:$0xf]
  %v27 = vld [vmem:[%s0 + $0x34] sm:$0xf]
  %v28 = vld [vmem:[%s0 + $0x38] sm:$0xf]
  %v29 = vld [vmem:[%s0 + $0x3c] sm:$0xf]
  %v30 = vld [vmem:[%s0 + $0x40] sm:$0xf]
  %v31 = vld [vmem:[%s0 + $0x44] sm:$0xf]
  %v32 = vld [vmem:[%s0 + $0x48] sm:$0xf]
  %v33 = vld [vmem:[%s0 + $0x4c] sm:$0xf]
  %v34 = vld [vmem:[%s0 + $0x50] sm:$0xf]
  %v35 = vld [vmem:[%s0 + $0x54] sm:$0xf]
  %v36 = vld [vmem:[%s0 + $0x58] sm:$0xf]
  %v37 = vld [vmem:[%s0 + $0x5c] sm:$0xf]
  %v38 = vld [vmem:[%s0 + $0x60] sm:$0xf]
  %v39 = vld [vmem:[%s0 + $0x64] sm:$0xf]
  %v40 = vld [vmem:[%s0 + $0x68] sm:$0xf]
  %v41 = vld [vmem:[%s0 + $0x6c] sm:$0xf]
  %v42 = vld [vmem:[%s0 + $0x70] sm:$0xf]
  %v43 = vld [vmem:[%s0 + $0x74] sm:$0xf]
  %v44 = vld [vmem:[%s0 + $0x78] sm:$0xf]
  %v45 = vld [vmem:[%s0 + $0x7c] sm:$0xf]
  %v46 = vld [vmem:[%s0 + $0x80] sm:$0xf]
  %v47 = vld [vmem:[%s0 + $0x84] sm:$0xf]
  %v48 = vld [vmem:[%s0 + $0x88] sm:$0xf]
  %v49 = vld [vmem:[%s0 + $0x8c] sm:$0xf]
  %v50 = vld [vmem:[%s0 + $0x90] sm:$0xf]
  %v51 = vld [vmem:[%s0 + $0x94] sm:$0xf]
  %v52 = vld [vmem:[%s0 + $0x98] sm:$0xf]
  %v53 = vld [vmem:[%s0 + $0x9c] sm:$0xf]
  %v54 = vld [vmem:[%s0 + $0xa0] sm:$0xf]
  %v55 = vld [vmem:[%s0 + $0xa4] sm:$0xf]
  %v56 = vld [vmem:[%s0 + $0xa8] sm:$0xf]
  %v57 = vld [vmem:[%s0 + $0xac] sm:$0xf]
  %v58 = vld [vmem:[%s0 + $0xb0] sm:$0xf]
  %v59 = vld [vmem:[%s0 + $0xb4] sm:$0xf]
  %v60 = vld [vmem:[%s0 + $0xb8] sm:$0xf]
  %v61 = vld [vmem:[%s0 + $0xbc] sm:$0xf]
  %v62 = vld [vmem:[%s0 + $0xc0] sm:$0xf]
  %v63 = vld [vmem:[%s0 + $0xc4] sm:$0xf]
  %v64 = vld [vmem:[%s0 + $0xc8] sm:$0xf]
  %v65 = vld [vmem:[%s0 + $0xcc] sm:$0xf]
  %v66 = vld [vmem:[%s0 + $0xd0] sm:$0xf]
  %v67 = vld [vmem:[%s0 + $0xd4] sm:$0xf]
  %v68 = vld [vmem:[%s0 + $0xd8] sm:$0xf]
  %v69 = vld [vmem:[%s0 + $0xdc] sm:$0xf]
  %v70 = vld [vmem:[%s0 + $0xe0] sm:$0xf]
  %v71 = vld [vmem:[%s0 + $0xe4] sm:$0xf]
  %v72 = vld [vmem:[%s0 + $0xe8] sm:$0xf]
  %v73 = vld [vmem:[%s0 + $0xec] sm:$0xf]
  %v74 = vld [vmem:[%s0 + $0xf0] sm:$0xf]
  %v75 = vld [vmem:[%s0 + $0xf4] sm:$0xf]
  %v76 = vld [vmem:[%s0 + $0xf8] sm:$0xf]
  %v77 = vld [vmem:[%s0 + $0xfc] sm:$0xf]
  %v78 = vunpack.c.l.bf16 %v14
  %v79 = vunpack.c.l.bf16 %v15
  %v80 = vunpack.c.l.bf16 %v16
  %v81 = vunpack.c.l.bf16 %v17
  %v82 = vunpack.c.l.bf16 %v18
  %v83 = vunpack.c.l.bf16 %v19
  %v84 = vunpack.c.l.bf16 %v20
  %v85 = vunpack.c.l.bf16 %v21
  %v86 = vunpack.c.l.bf16 %v22
  %v87 = vunpack.c.l.bf16 %v23
  %v88 = vunpack.c.l.bf16 %v24
  %v89 = vunpack.c.l.bf16 %v25
  %v90 = vunpack.c.l.bf16 %v26
  %v91 = vunpack.c.l.bf16 %v27
  %v92 = vunpack.c.l.bf16 %v28
  %v93 = vunpack.c.l.bf16 %v29
  %v94 = vunpack.c.l.bf16 %v30
  %v95 = vunpack.c.l.bf16 %v31
  %v96 = vunpack.c.l.bf16 %v32
  %v97 = vunpack.c.l.bf16 %v33
  %v98 = vunpack.c.l.bf16 %v34
  %v99 = vunpack.c.l.bf16 %v35
  %v100 = vunpack.c.l.bf16 %v36
  %v101 = vunpack.c.l.bf16 %v37
  %v102 = vunpack.c.l.bf16 %v38
  %v103 = vunpack.c.l.bf16 %v39
  %v104 = vunpack.c.l.bf16 %v40
  %v105 = vunpack.c.l.bf16 %v41
  %v106 = vunpack.c.l.bf16 %v42
  %v107 = vunpack.c.l.bf16 %v43
  %v108 = vunpack.c.l.bf16 %v44
  %v109 = vunpack.c.l.bf16 %v45
  %v110 = vunpack.c.l.bf16 %v46
  %v111 = vunpack.c.l.bf16 %v47
  %v112 = vunpack.c.l.bf16 %v48
  %v113 = vunpack.c.l.bf16 %v49
  %v114 = vunpack.c.l.bf16 %v50
  %v115 = vunpack.c.l.bf16 %v51
  %v116 = vunpack.c.l.bf16 %v52
  %v117 = vunpack.c.l.bf16 %v53
  %v118 = vunpack.c.l.bf16 %v54
  %v119 = vunpack.c.l.bf16 %v55
  %v120 = vunpack.c.l.bf16 %v56
  %v121 = vunpack.c.l.bf16 %v57
  %v122 = vunpack.c.l.bf16 %v58
  %v123 = vunpack.c.l.bf16 %v59
  %v124 = vunpack.c.l.bf16 %v60
  %v125 = vunpack.c.l.bf16 %v61
  %v126 = vunpack.c.l.bf16 %v62
  %v127 = vunpack.c.l.bf16 %v63
  %v128 = vunpack.c.l.bf16 %v64
  %v129 = vunpack.c.l.bf16 %v65
  %v130 = vunpack.c.l.bf16 %v66
  %v131 = vunpack.c.l.bf16 %v67
  %v132 = vunpack.c.l.bf16 %v68
  %v133 = vunpack.c.l.bf16 %v69
  %v134 = vunpack.c.l.bf16 %v70
  %v135 = vunpack.c.l.bf16 %v71
  %v136 = vunpack.c.l.bf16 %v72
  %v137 = vunpack.c.l.bf16 %v73
  %v138 = vunpack.c.l.bf16 %v74
  %v139 = vunpack.c.l.bf16 %v75
  %v140 = vunpack.c.l.bf16 %v76
  %v141 = vunpack.c.l.bf16 %v77
  %v142 = vld [vmem:[%s1] sm:$0x1]
  %v144 = vperm.slane %v142, 0
  %v146 = vmul.f32 %v78, %v144
  %v147 = vmul.f32 %v79, %v144
  %v148 = vmul.f32 %v80, %v144
  %v149 = vmul.f32 %v81, %v144
  %v150 = vmul.f32 %v82, %v144
  %v151 = vmul.f32 %v83, %v144
  %v152 = vmul.f32 %v84, %v144
  %v153 = vmul.f32 %v85, %v144
  %v154 = vmul.f32 %v86, %v144
  %v155 = vmul.f32 %v87, %v144
  %v156 = vmul.f32 %v88, %v144
  %v157 = vmul.f32 %v89, %v144
  %v158 = vmul.f32 %v90, %v144
  %v159 = vmul.f32 %v91, %v144
  %v160 = vmul.f32 %v92, %v144
  %v161 = vmul.f32 %v93, %v144
  %v162 = vmul.f32 %v94, %v144
  %v163 = vmul.f32 %v95, %v144
  %v164 = vmul.f32 %v96, %v144
  %v165 = vmul.f32 %v97, %v144
  %v166 = vmul.f32 %v98, %v144
  %v167 = vmul.f32 %v99, %v144
  %v168 = vmul.f32 %v100, %v144
  %v169 = vmul.f32 %v101, %v144
  %v170 = vmul.f32 %v102, %v144
  %v171 = vmul.f32 %v103, %v144
  %v172 = vmul.f32 %v104, %v144
  %v173 = vmul.f32 %v105, %v144
  %v174 = vmul.f32 %v106, %v144
  %v175 = vmul.f32 %v107, %v144
  %v176 = vmul.f32 %v108, %v144
  %v177 = vmul.f32 %v109, %v144
  %v178 = vmul.f32 %v110, %v144
  %v179 = vmul.f32 %v111, %v144
  %v180 = vmul.f32 %v112, %v144
  %v181 = vmul.f32 %v113, %v144
  %v182 = vmul.f32 %v114, %v144
  %v183 = vmul.f32 %v115, %v144
  %v184 = vmul.f32 %v116, %v144
  %v185 = vmul.f32 %v117, %v144
  %v186 = vmul.f32 %v118, %v144
  %v187 = vmul.f32 %v119, %v144
  %v188 = vmul.f32 %v120, %v144
  %v189 = vmul.f32 %v121, %v144
  %v190 = vmul.f32 %v122, %v144
  %v191 = vmul.f32 %v123, %v144
  %v192 = vmul.f32 %v124, %v144
  %v193 = vmul.f32 %v125, %v144
  %v194 = vmul.f32 %v126, %v144
  %v195 = vmul.f32 %v127, %v144
  %v196 = vmul.f32 %v128, %v144
  %v197 = vmul.f32 %v129, %v144
  %v198 = vmul.f32 %v130, %v144
  %v199 = vmul.f32 %v131, %v144
  %v200 = vmul.f32 %v132, %v144
  %v201 = vmul.f32 %v133, %v144
  %v202 = vmul.f32 %v134, %v144
  %v203 = vmul.f32 %v135, %v144
  %v204 = vmul.f32 %v136, %v144
  %v205 = vmul.f32 %v137, %v144
  %v206 = vmul.f32 %v138, %v144
  %v207 = vmul.f32 %v139, %v144
  %v208 = vmul.f32 %v140, %v144
  %v209 = vmul.f32 %v141, %v144
  %v210 = vld [vmem:[%s2] sm:$0x1]
  %v212 = vperm.slane %v210, 0
  %v214 = vadd.f32 %v146, %v212
  %v215 = vadd.f32 %v147, %v212
  %v216 = vadd.f32 %v148, %v212
  %v217 = vadd.f32 %v149, %v212
  %v218 = vadd.f32 %v150, %v212
  %v219 = vadd.f32 %v151, %v212
  %v220 = vadd.f32 %v152, %v212
  %v221 = vadd.f32 %v153, %v212
  %v222 = vadd.f32 %v154, %v212
  %v223 = vadd.f32 %v155, %v212
  %v224 = vadd.f32 %v156, %v212
  %v225 = vadd.f32 %v157, %v212
  %v226 = vadd.f32 %v158, %v212
  %v227 = vadd.f32 %v159, %v212
  %v228 = vadd.f32 %v160, %v212
  %v229 = vadd.f32 %v161, %v212
  %v230 = vadd.f32 %v162, %v212
  %v231 = vadd.f32 %v163, %v212
  %v232 = vadd.f32 %v164, %v212
  %v233 = vadd.f32 %v165, %v212
  %v234 = vadd.f32 %v166, %v212
  %v235 = vadd.f32 %v167, %v212
  %v236 = vadd.f32 %v168, %v212
  %v237 = vadd.f32 %v169, %v212
  %v238 = vadd.f32 %v170, %v212
  %v239 = vadd.f32 %v171, %v212
  %v240 = vadd.f32 %v172, %v212
  %v241 = vadd.f32 %v173, %v212
  %v242 = vadd.f32 %v174, %v212
  %v243 = vadd.f32 %v175, %v212
  %v244 = vadd.f32 %v176, %v212
  %v245 = vadd.f32 %v177, %v212
  %v246 = vadd.f32 %v178, %v212
  %v247 = vadd.f32 %v179, %v212
  %v248 = vadd.f32 %v180, %v212
  %v249 = vadd.f32 %v181, %v212
  %v250 = vadd.f32 %v182, %v212
  %v251 = vadd.f32 %v183, %v212
  %v252 = vadd.f32 %v184, %v212
  %v253 = vadd.f32 %v185, %v212
  %v254 = vadd.f32 %v186, %v212
  %v255 = vadd.f32 %v187, %v212
  %v256 = vadd.f32 %v188, %v212
  %v257 = vadd.f32 %v189, %v212
  %v258 = vadd.f32 %v190, %v212
  %v259 = vadd.f32 %v191, %v212
  %v260 = vadd.f32 %v192, %v212
  %v261 = vadd.f32 %v193, %v212
  %v262 = vadd.f32 %v194, %v212
  %v263 = vadd.f32 %v195, %v212
  %v264 = vadd.f32 %v196, %v212
  %v265 = vadd.f32 %v197, %v212
  %v266 = vadd.f32 %v198, %v212
  %v267 = vadd.f32 %v199, %v212
  %v268 = vadd.f32 %v200, %v212
  %v269 = vadd.f32 %v201, %v212
  %v270 = vadd.f32 %v202, %v212
  %v271 = vadd.f32 %v203, %v212
  %v272 = vadd.f32 %v204, %v212
  %v273 = vadd.f32 %v205, %v212
  %v274 = vadd.f32 %v206, %v212
  %v275 = vadd.f32 %v207, %v212
  %v276 = vadd.f32 %v208, %v212
  %v277 = vadd.f32 %v209, %v212
  %v278 = vmax.f32 %v214, 0.0
  %v279 = vmax.f32 %v215, 0.0
  %v280 = vmax.f32 %v216, 0.0
  %v281 = vmax.f32 %v217, 0.0
  %v282 = vmax.f32 %v218, 0.0
  %v283 = vmax.f32 %v219, 0.0
  %v284 = vmax.f32 %v220, 0.0
  %v285 = vmax.f32 %v221, 0.0
  %v286 = vmax.f32 %v222, 0.0
  %v287 = vmax.f32 %v223, 0.0
  %v288 = vmax.f32 %v224, 0.0
  %v289 = vmax.f32 %v225, 0.0
  %v290 = vmax.f32 %v226, 0.0
  %v291 = vmax.f32 %v227, 0.0
  %v292 = vmax.f32 %v228, 0.0
  %v293 = vmax.f32 %v229, 0.0
  %v294 = vmax.f32 %v230, 0.0
  %v295 = vmax.f32 %v231, 0.0
  %v296 = vmax.f32 %v232, 0.0
  %v297 = vmax.f32 %v233, 0.0
  %v298 = vmax.f32 %v234, 0.0
  %v299 = vmax.f32 %v235, 0.0
  %v300 = vmax.f32 %v236, 0.0
  %v301 = vmax.f32 %v237, 0.0
  %v302 = vmax.f32 %v238, 0.0
  %v303 = vmax.f32 %v239, 0.0
  %v304 = vmax.f32 %v240, 0.0
  %v305 = vmax.f32 %v241, 0.0
  %v306 = vmax.f32 %v242, 0.0
  %v307 = vmax.f32 %v243, 0.0
  %v308 = vmax.f32 %v244, 0.0
  %v309 = vmax.f32 %v245, 0.0
  %v310 = vmax.f32 %v246, 0.0
  %v311 = vmax.f32 %v247, 0.0
  %v312 = vmax.f32 %v248, 0.0
  %v313 = vmax.f32 %v249, 0.0
  %v314 = vmax.f32 %v250, 0.0
  %v315 = vmax.f32 %v251, 0.0
  %v316 = vmax.f32 %v252, 0.0
  %v317 = vmax.f32 %v253, 0.0
  %v318 = vmax.f32 %v254, 0.0
  %v319 = vmax.f32 %v255, 0.0
  %v320 = vmax.f32 %v256, 0.0
  %v321 = vmax.f32 %v257, 0.0
  %v322 = vmax.f32 %v258, 0.0
  %v323 = vmax.f32 %v259, 0.0
  %v324 = vmax.f32 %v260, 0.0
  %v325 = vmax.f32 %v261, 0.0
  %v326 = vmax.f32 %v262, 0.0
  %v327 = vmax.f32 %v263, 0.0
  %v328 = vmax.f32 %v264, 0.0
  %v329 = vmax.f32 %v265, 0.0
  %v330 = vmax.f32 %v266, 0.0
  %v331 = vmax.f32 %v267, 0.0
  %v332 = vmax.f32 %v268, 0.0
  %v333 = vmax.f32 %v269, 0.0
  %v334 = vmax.f32 %v270, 0.0
  %v335 = vmax.f32 %v271, 0.0
  %v336 = vmax.f32 %v272, 0.0
  %v337 = vmax.f32 %v273, 0.0
  %v338 = vmax.f32 %v274, 0.0
  %v339 = vmax.f32 %v275, 0.0
  %v340 = vmax.f32 %v276, 0.0
  %v341 = vmax.f32 %v277, 0.0
  %342 = vst [vmem:[%s3] sm:$0xff] %v278
  %343 = vst [vmem:[%s3 + $0x8] sm:$0xff] %v279
  %344 = vst [vmem:[%s3 + $0x10] sm:$0xff] %v280
  %345 = vst [vmem:[%s3 + $0x18] sm:$0xff] %v281
  %346 = vst [vmem:[%s3 + $0x20] sm:$0xff] %v282
  %347 = vst [vmem:[%s3 + $0x28] sm:$0xff] %v283
  %348 = vst [vmem:[%s3 + $0x30] sm:$0xff] %v284
  %349 = vst [vmem:[%s3 + $0x38] sm:$0xff] %v285
  %350 = vst [vmem:[%s3 + $0x40] sm:$0xff] %v286
  %351 = vst [vmem:[%s3 + $0x48] sm:$0xff] %v287
  %352 = vst [vmem:[%s3 + $0x50] sm:$0xff] %v288
  %353 = vst [vmem:[%s3 + $0x58] sm:$0xff] %v289
  %354 = vst [vmem:[%s3 + $0x60] sm:$0xff] %v290
  %355 = vst [vmem:[%s3 + $0x68] sm:$0xff] %v291
  %356 = vst [vmem:[%s3 + $0x70] sm:$0xff] %v292
  %357 = vst [vmem:[%s3 + $0x78] sm:$0xff] %v293
  %358 = vst [vmem:[%s3 + $0x80] sm:$0xff] %v294
  %359 = vst [vmem:[%s3 + $0x88] sm:$0xff] %v295
  %360 = vst [vmem:[%s3 + $0x90] sm:$0xff] %v296
  %361 = vst [vmem:[%s3 + $0x98] sm:$0xff] %v297
  %362 = vst [vmem:[%s3 + $0xa0] sm:$0xff] %v298
  %363 = vst [vmem:[%s3 + $0xa8] sm:$0xff] %v299
  %364 = vst [vmem:[%s3 + $0xb0] sm:$0xff] %v300
  %365 = vst [vmem:[%s3 + $0xb8] sm:$0xff] %v301
  %366 = vst [vmem:[%s3 + $0xc0] sm:$0xff] %v302
  %367 = vst [vmem:[%s3 + $0xc8] sm:$0xff] %v303
  %368 = vst [vmem:[%s3 + $0xd0] sm:$0xff] %v304
  %369 = vst [vmem:[%s3 + $0xd8] sm:$0xff] %v305
  %370 = vst [vmem:[%s3 + $0xe0] sm:$0xff] %v306
  %371 = vst [vmem:[%s3 + $0xe8] sm:$0xff] %v307
  %372 = vst [vmem:[%s3 + $0xf0] sm:$0xff] %v308
  %373 = vst [vmem:[%s3 + $0xf8] sm:$0xff] %v309
  %374 = vst [vmem:[%s3 + $0x100] sm:$0xff] %v310
  %375 = vst [vmem:[%s3 + $0x108] sm:$0xff] %v311
  %376 = vst [vmem:[%s3 + $0x110] sm:$0xff] %v312
  %377 = vst [vmem:[%s3 + $0x118] sm:$0xff] %v313
  %378 = vst [vmem:[%s3 + $0x120] sm:$0xff] %v314
  %379 = vst [vmem:[%s3 + $0x128] sm:$0xff] %v315
  %380 = vst [vmem:[%s3 + $0x130] sm:$0xff] %v316
  %381 = vst [vmem:[%s3 + $0x138] sm:$0xff] %v317
  %382 = vst [vmem:[%s3 + $0x140] sm:$0xff] %v318
  %383 = vst [vmem:[%s3 + $0x148] sm:$0xff] %v319
  %384 = vst [vmem:[%s3 + $0x150] sm:$0xff] %v320
  %385 = vst [vmem:[%s3 + $0x158] sm:$0xff] %v321
  %386 = vst [vmem:[%s3 + $0x160] sm:$0xff] %v322
  %387 = vst [vmem:[%s3 + $0x168] sm:$0xff] %v323
  %388 = vst [vmem:[%s3 + $0x170] sm:$0xff] %v324
  %389 = vst [vmem:[%s3 + $0x178] sm:$0xff] %v325
  %390 = vst [vmem:[%s3 + $0x180] sm:$0xff] %v326
  %391 = vst [vmem:[%s3 + $0x188] sm:$0xff] %v327
  %392 = vst [vmem:[%s3 + $0x190] sm:$0xff] %v328
  %393 = vst [vmem:[%s3 + $0x198] sm:$0xff] %v329
  %394 = vst [vmem:[%s3 + $0x1a0] sm:$0xff] %v330
  %395 = vst [vmem:[%s3 + $0x1a8] sm:$0xff] %v331
  %396 = vst [vmem:[%s3 + $0x1b0] sm:$0xff] %v332
  %397 = vst [vmem:[%s3 + $0x1b8] sm:$0xff] %v333
  %398 = vst [vmem:[%s3 + $0x1c0] sm:$0xff] %v334
  %399 = vst [vmem:[%s3 + $0x1c8] sm:$0xff] %v335
  %400 = vst [vmem:[%s3 + $0x1d0] sm:$0xff] %v336
  %401 = vst [vmem:[%s3 + $0x1d8] sm:$0xff] %v337
  %402 = vst [vmem:[%s3 + $0x1e0] sm:$0xff] %v338
  %403 = vst [vmem:[%s3 + $0x1e8] sm:$0xff] %v339
  %404 = vst [vmem:[%s3 + $0x1f0] sm:$0xff] %v340
  %405 = vst [vmem:[%s3 + $0x1f8] sm:$0xff] %v341
  // Predicated region
  $region14: #{conv_block_forward.7} parent=0 // pred_check
    _
  $region15: #{conv_block_forward.7} parent=0 // pred_check_branch
    %407 = sbr.rel (0) target = $region17
  $region16: #{conv_block_forward.7} parent=0 // pred_region
    _
  $region17: #{conv_block_forward.7} parent=0 // pred_fallthru
    _
  // Predicated region
  $region18: #{conv_block_forward.7} parent=0 // pred_check
    _
  $region19: #{conv_block_forward.7} parent=0 // pred_check_branch
    %409 = sbr.rel (0) target = $region21
  $region20: #{conv_block_forward.7} parent=0 // pred_region
    _
  $region21: #{conv_block_forward.7} parent=0 // pred_fallthru
    _

// kernel: conv_block_forward.4
$region0: #{conv_block_forward.4}
  #allocation0 [shape = 'u32[]', space=smem, size = 0x4, offset = 0x4, fixed_abs, tag = 'smem constant byte address 0x4 - core index']
  #allocation1 [shape = 'u32[72,128]{1,0:T(1,128)}', space=vmem, size = 0x9000, scoped, tag = 'internal scratch']
  #allocation2 [shape = 'bf16[18,24,128]{2,1,0:T(8,128)(2,1)}', space=vmem, size = 0x1b000, scoped, tag = 'scratch operand']
  #allocation3 [shape = 's32[1]{0}', space=sflag, size = 0x4, scoped, tag = 'scratch operand']
  #allocation4 [shape = 's32[]', space=sflag, size = 0x4, offset = 0, fixed_abs, tag = 'sflag constant byte address 0x0 - dummy sync flag']
  %s0 = inlined_call_operand.vmem [shape: bf16[2,18,24,128], index: 0, kind: input, shape index: {}]
  %s1 = inlined_call_operand.vmem [shape: bf16[3,3,128,128], index: 1, kind: input, shape index: {}]
  %s2 = inlined_call_operand.vmem [shape: bf16[512,128], index: 2, kind: output, shape index: {0}]
  %s3 = inlined_call_operand.vmem [shape: f32[1,128], index: 3, kind: output, shape index: {1}]
  %s4 = inlined_call_operand.vmem [shape: f32[1,128], index: 4, kind: output, shape index: {2}]
  %5 = xla_tuple %s2, %s3, %s4
  %s6 = sld [smem:[#allocation0]]
  $region76: #{conv_block_forward.4} parent=0
    _
  %s8 = ssub.s32 1, %s6
  %s9 = scalar_select 0, %s8, %s6
  loop: start=0, step=1, limit=4
  $region2: #{conv_block_forward.4} parent=0 // loop_pre_header
    _
  $region3: #{conv_block_forward.4} parent=0 // loop_header
    %s11 = sphi 0, %s15
    %p12 = scmp.ge.s32.totalorder %s11, 4
    %s18 = sphi 0, %s30
    %s19 = sphi 0, %s26
    %s20 = sphi 0, %s18
    %s21 = sphi 0, %s19
    %s22 = sphi 0, %s20
    %s23 = sphi 0, %s21
    %s31 = sphi 0, %s31
    %s33 = sphi 0, %s31
    %s34 = sphi 0, %s33
    %s48 = sphi 0, %s34
    %s56 = sphi 0, %s58
    %s59 = sphi 0, %s56
    %s60 = sphi 0, %s59
    %s76 = sphi 0, %s60
    %s80 = sphi 0, %s80
    %s82 = sphi 0, %s80
    %s83 = sphi 0, %s82
    %s97 = sphi 0, %s83
    %s101 = sphi 0, %s101
    %s103 = sphi 0, %s101
    %s104 = sphi 0, %s103
    %s118 = sphi 0, %s104
  $region4: #{conv_block_forward.4} parent=0 // loop_header_branch
    %14 = sbr.rel (%p12) target = $region8
  $region5: #{conv_block_forward.4} parent=0 // loop_body
    %s16 = ssub.s32 %s11, 1
    %s17 = ssub.s32 %s11, 2
    %s24 = sadd.s32 1, %s19
    %p25 = scmp.ge.s32.totalorder %s24, 1
    %s26 = scalar_select %p25, 0, %s24
    %s27 = sadd.s32 1, %s18
    %s28 = scalar_select %p25, %s27, %s18
    %p29 = scmp.ge.s32.totalorder %s28, 2
    %s30 = scalar_select %p29, 0, %s28
    %s32 = sadd.s32 %s31, 1
    %p35 = scmp.eq.s32.totalorder %s11, 1
    %p36 = scmp.ne.s32.totalorder %s31, %s33
    %p37 = scmp.eq.s32.totalorder %s11, 0
    %p38 = por %p36, %p37
    %p39 = scmp.ne.s32.totalorder %s31, %s33
    %p40 = scmp.eq.s32.totalorder %s16, 1
    %p41 = por %p39, %p40
    %p42 = scmp.ne.s32.totalorder %s33, %s34
    %p43 = scmp.eq.s32.totalorder %s16, 0
    %p44 = por %p42, %p43
    %p45 = scmp.ne.s32.totalorder %s33, %s34
    %p46 = scmp.eq.s32.totalorder %s17, 1
    %p47 = por %p45, %p46
    %p49 = scmp.ne.s32.totalorder %s34, %s48
    %p50 = scmp.eq.s32.totalorder %s17, 0
    %p51 = por %p49, %p50
    %s52 = sadd.s32 %s18, %s19
    %s53 = sadd.s32 %s30, %s26
    %s54 = ssub.s32 %s52, %s53
    %p55 = scmp.eq.s32.totalorder %s54, 0
    %s57 = sadd.s32 %s56, 1
    %s58 = scalar_select %p55, %s56, %s57
    %p61 = pneg %p55
    %p62 = scmp.eq.s32.totalorder %s11, 1
    %p63 = por %p61, %p62
    %p64 = scmp.ne.s32.totalorder %s56, %s59
    %p65 = scmp.eq.s32.totalorder %s11, 0
    %p66 = por %p64, %p65
    %p67 = scmp.ne.s32.totalorder %s56, %s59
    %p68 = scmp.eq.s32.totalorder %s16, 1
    %p69 = por %p67, %p68
    %p70 = scmp.ne.s32.totalorder %s59, %s60
    %p71 = scmp.eq.s32.totalorder %s16, 0
    %p72 = por %p70, %p71
    %p73 = scmp.ne.s32.totalorder %s59, %s60
    %p74 = scmp.eq.s32.totalorder %s17, 1
    %p75 = por %p73, %p74
    %p77 = scmp.ne.s32.totalorder %s60, %s76
    %p78 = scmp.eq.s32.totalorder %s17, 0
    %p79 = por %p77, %p78
    %s81 = sadd.s32 %s80, 1
    %p84 = scmp.eq.s32.totalorder %s11, 1
    %p85 = scmp.ne.s32.totalorder %s80, %s82
    %p86 = scmp.eq.s32.totalorder %s11, 0
    %p87 = por %p85, %p86
    %p88 = scmp.ne.s32.totalorder %s80, %s82
    %p89 = scmp.eq.s32.totalorder %s16, 1
    %p90 = por %p88, %p89
    %p91 = scmp.ne.s32.totalorder %s82, %s83
    %p92 = scmp.eq.s32.totalorder %s16, 0
    %p93 = por %p91, %p92
    %p94 = scmp.ne.s32.totalorder %s82, %s83
    %p95 = scmp.eq.s32.totalorder %s17, 1
    %p96 = por %p94, %p95
    %p98 = scmp.ne.s32.totalorder %s83, %s97
    %p99 = scmp.eq.s32.totalorder %s17, 0
    %p100 = por %p98, %p99
    %s102 = sadd.s32 %s101, 1
    %p105 = scmp.eq.s32.totalorder %s11, 1
    %p106 = scmp.ne.s32.totalorder %s101, %s103
    %p107 = scmp.eq.s32.totalorder %s11, 0
    %p108 = por %p106, %p107
    %p109 = scmp.ne.s32.totalorder %s101, %s103
    %p110 = scmp.eq.s32.totalorder %s16, 1
    %p111 = por %p109, %p110
    %p112 = scmp.ne.s32.totalorder %s103, %s104
    %p113 = scmp.eq.s32.totalorder %s16, 0
    %p114 = por %p112, %p113
    %p115 = scmp.ne.s32.totalorder %s103, %s104
    %p116 = scmp.eq.s32.totalorder %s17, 1
    %p117 = por %p115, %p116
    %p119 = scmp.ne.s32.totalorder %s104, %s118
    %p120 = scmp.eq.s32.totalorder %s17, 0
    %p121 = por %p119, %p120
    %p122 = scmp.le.s32.totalorder 1, %s11
    %p123 = scmp.lt.s32.totalorder %s11, 3
    %p124 = pnand %p122, %p123
    %p125 = pneg %p124
    // Predicated region
    $region9: #{conv_block_forward.4} parent=5 // pred_check
      _
    $region10: #{conv_block_forward.4} parent=5 // pred_check_branch
      %127 = sbr.rel (%p124) target = $region12
    $region11: #{conv_block_forward.4} parent=5 // pred_region
      %s128 = ssub.s32 %s11, 1
      // Predicated region
      $region13: #{conv_block_forward.4} parent=11 // pred_check
        %p129 = pneg %p44
      $region14: #{conv_block_forward.4} parent=11 // pred_check_branch
        %131 = sbr.rel (%p129) target = $region16
      $region15: #{conv_block_forward.4} parent=11 // pred_region
        _
      $region16: #{conv_block_forward.4} parent=11 // pred_fallthru
        _
    $region12: #{conv_block_forward.4} parent=5 // pred_fallthru
      _
    %p132 = scmp.lt.s32.totalorder %s11, 2
    // Predicated region
    $region17: #{conv_block_forward.4} parent=5 // pred_check
      %p133 = pneg %p132
    $region18: #{conv_block_forward.4} parent=5 // pred_check_branch
      %135 = sbr.rel (%p133) target = $region20
    $region19: #{conv_block_forward.4} parent=5 // pred_region
      _
    $region20: #{conv_block_forward.4} parent=5 // pred_fallthru
      _
    %p136 = scmp.le.s32.totalorder 1, %s11
    %p137 = scmp.lt.s32.totalorder %s11, 3
    %p138 = pnand %p136, %p137
    %p139 = pneg %p138
    // Predicated region
    $region21: #{conv_block_forward.4} parent=5 // pred_check
      _
    $region22: #{conv_block_forward.4} parent=5 // pred_check_branch
      %141 = sbr.rel (%p138) target = $region24
    $region23: #{conv_block_forward.4} parent=5 // pred_region
      %s142 = ssub.s32 %s11, 1
      %p143 = pneg %p44
      %p144 = pneg %p41
      %p145 = pneg %p72
      %p146 = pneg %p69
      %s147 = sadd.s32 %s20, %s21
      %s148 = smul.u32 32, %s147
      %p149 = scmp.lt.s32.totalorder %s148, 63
      %s150 = scalar_select %p149, %s148, 63
      %s151 = smul.addr %s150, 4
      %s152 = scalar_lea.vmem %s2, %s151
      %p153 = pneg %p93
      %p154 = pneg %p90
      %p155 = pneg %p114
      %p156 = pneg %p111
      %s157 = sadd.s32 %s20, %s21
      %s158 = smul.u32 32, %s157
      %p159 = scmp.lt.s32.totalorder %s158, 63
      %s160 = scalar_select %p159, %s158, 63
      %s161 = smul.addr %s160, 4
      %s162 = scalar_lea.vmem %s2, %s161
      %s163 = sadd.s32 %s20, %s21
      %s164 = smul.u32 32, %s163
      %s165 = smul.u32 %s21, 16
      %s166 = smul.u32 %s165, 3
      %s167 = smul.u32 %s20, 54
      %s168 = sadd.s32 %s166, %s167
      %s169 = smul.addr %s168, 4
      %s170 = scalar_lea.vmem %s0, %s169
      // Predicated region
      $region25: #{conv_block_forward.4} parent=23 // pred_check
        _
      $region26: #{conv_block_forward.4} parent=23 // pred_check_branch
        %172 = sbr.rel (0) target = $region28
      $region27: #{conv_block_forward.4} parent=23 // pred_region
        loop: start=0, step=1, limit=1
        $region29: #{conv_block_forward.4} parent=27 // loop_pre_header
          _
        $region30: #{conv_block_forward.4} parent=27 // loop_header
          %s174 = sphi 0, %s178
          %p175 = scmp.ge.s32.totalorder %s174, 1
          %s179 = sphi %s170, %s170
          %s180 = sphi [#allocation2], [#allocation2]
        $region31: #{conv_block_forward.4} parent=27 // loop_header_branch
          %177 = sbr.rel (%p175) target = $region35
        $region32: #{conv_block_forward.4} parent=27 // loop_body
          %v181 = vld [vmem:[%s179] sm:$0xff]
          %182 = vst [vmem:[%s180] sm:$0xff] %v181
          %v183 = vld [vmem:[%s179 + $0x8] sm:$0xff]
          %184 = vst [vmem:[%s180 + $0x8] sm:$0xff] %v183
          %v185 = vld [vmem:[%s179 + $0x10] sm:$0xff]
          %186 = vst [vmem:[%s180 + $0x10] sm:$0xff] %v185
          %v187 = vld [vmem:[%s179 + $0x18] sm:$0xff]
          %188 = vst [vmem:[%s180 + $0x18] sm:$0xff] %v187
          %v189 = vld [vmem:[%s179 + $0x20] sm:$0xff]
          %190 = vst [vmem:[%s180 + $0x20] sm:$0xff] %v189
          %v191 = vld [vmem:[%s179 + $0x28] sm:$0xff]
          %192 = vst [vmem:[%s180 + $0x28] sm:$0xff] %v191
          %v193 = vld [vmem:[%s179 + $0x30] sm:$0xff]
          %194 = vst [vmem:[%s180 + $0x30] sm:$0xff] %v193
          %v195 = vld [vmem:[%s179 + $0x38] sm:$0xff]
          %196 = vst [vmem:[%s180 + $0x38] sm:$0xff] %v195
          %v197 = vld [vmem:[%s179 + $0x40] sm:$0xff]
          %198 = vst [vmem:[%s180 + $0x40] sm:$0xff] %v197
          %v199 = vld [vmem:[%s179 + $0x48] sm:$0xff]
          %200 = vst [vmem:[%s180 + $0x48] sm:$0xff] %v199
          %v201 = vld [vmem:[%s179 + $0x50] sm:$0xff]
          %202 = vst [vmem:[%s180 + $0x50] sm:$0xff] %v201
          %v203 = vld [vmem:[%s179 + $0x58] sm:$0xff]
          %204 = vst [vmem:[%s180 + $0x58] sm:$0xff] %v203
          %v205 = vld [vmem:[%s179 + $0x60] sm:$0xff]
          %206 = vst [vmem:[%s180 + $0x60] sm:$0xff] %v205
          %v207 = vld [vmem:[%s179 + $0x68] sm:$0xff]
          %208 = vst [vmem:[%s180 + $0x68] sm:$0xff] %v207
          %v209 = vld [vmem:[%s179 + $0x70] sm:$0xff]
          %210 = vst [vmem:[%s180 + $0x70] sm:$0xff] %v209
          %v211 = vld [vmem:[%s179 + $0x78] sm:$0xff]
          %212 = vst [vmem:[%s180 + $0x78] sm:$0xff] %v211
          %v213 = vld [vmem:[%s179 + $0x80] sm:$0xff]
          %214 = vst [vmem:[%s180 + $0x80] sm:$0xff] %v213
          %v215 = vld [vmem:[%s179 + $0x88] sm:$0xff]
          %216 = vst [vmem:[%s180 + $0x88] sm:$0xff] %v215
          %v217 = vld [vmem:[%s179 + $0x90] sm:$0xff]
          %218 = vst [vmem:[%s180 + $0x90] sm:$0xff] %v217
          %v219 = vld [vmem:[%s179 + $0x98] sm:$0xff]
          %220 = vst [vmem:[%s180 + $0x98] sm:$0xff] %v219
          %v221 = vld [vmem:[%s179 + $0xa0] sm:$0xff]
          %222 = vst [vmem:[%s180 + $0xa0] sm:$0xff] %v221
          %v223 = vld [vmem:[%s179 + $0xa8] sm:$0xff]
          %224 = vst [vmem:[%s180 + $0xa8] sm:$0xff] %v223
          %v225 = vld [vmem:[%s179 + $0xb0] sm:$0xff]
          %226 = vst [vmem:[%s180 + $0xb0] sm:$0xff] %v225
          %v227 = vld [vmem:[%s179 + $0xb8] sm:$0xff]
          %228 = vst [vmem:[%s180 + $0xb8] sm:$0xff] %v227
          %v229 = vld [vmem:[%s179 + $0xc0] sm:$0xff]
          %230 = vst [vmem:[%s180 + $0xc0] sm:$0xff] %v229
          %v231 = vld [vmem:[%s179 + $0xc8] sm:$0xff]
          %232 = vst [vmem:[%s180 + $0xc8] sm:$0xff] %v231
          %v233 = vld [vmem:[%s179 + $0xd0] sm:$0xff]
          %234 = vst [vmem:[%s180 + $0xd0] sm:$0xff] %v233
        $region33: #{conv_block_forward.4} parent=27 // loop_footer
          %s178 = sadd.s32 1, %s174
        $region34: #{conv_block_forward.4} parent=27 // loop_footer_branch
          %173 = sbr.rel target = $region30
        $region35: #{conv_block_forward.4} parent=27 // loop_exit
          _
      $region28: #{conv_block_forward.4} parent=23 // pred_fallthru
        _
      // Predicated region
      $region36: #{conv_block_forward.4} parent=23 // pred_check
        _
      $region37: #{conv_block_forward.4} parent=23 // pred_check_branch
        %236 = sbr.rel target = $region39
      $region38: #{conv_block_forward.4} parent=23 // pred_region
        _
      $region39: #{conv_block_forward.4} parent=23 // pred_fallthru
        _
      // Predicated region
      $region40: #{conv_block_forward.4} parent=23 // pred_check
        _
      $region41: #{conv_block_forward.4} parent=23 // pred_check_branch
        %239 = sbr.rel (0) target = $region43
      $region42: #{conv_block_forward.4} parent=23 // pred_region
        %240 = vsyncadd [#allocation3], 3456
      $region43: #{conv_block_forward.4} parent=23 // pred_fallthru
        _
      %p241 = scmp.eq.s32.totalorder %s20, 0
      %p242 = scmp.eq.s32.totalorder %s21, 0
      %p243 = pnand %p241, %p242
      %p244 = pneg %p243
      // Predicated region
      $region44: #{conv_block_forward.4} parent=23 // pred_check
        _
      $region45: #{conv_block_forward.4} parent=23 // pred_check_branch
        %246 = sbr.rel (%p243) target = $region47
      $region46: #{conv_block_forward.4} parent=23 // pred_region
        %247 = vst [vmem:[%s3] sm:$0x1] 0.0
        %248 = vst [vmem:[%s4] sm:$0x1] 0.0
      $region47: #{conv_block_forward.4} parent=23 // pred_fallthru
        _
      %s249 = smul.u32 4, 18
      %s250 = smul.u32 %s249, 3
      %s251 = smul.u32 %s250, 1
      %s252 = sshll.u32 %s251, 4
      %253 = dma.done [#allocation3], %s252
      %v254 = vld [vmem:[#allocation2] sm:$0xf]
      %v255 = vld [vmem:[#allocation2 + $0x4] sm:$0xf]
      %v256 = vld [vmem:[#allocation2 + $0xc] sm:$0xf]
      %v257 = vld [vmem:[#allocation2 + $0x10] sm:$0xf]
      %v258 = vld [vmem:[#allocation2 + $0x18] sm:$0xf]
      %v259 = vld [vmem:[#allocation2 + $0x1c] sm:$0xf]
      %v260 = vld [vmem:[#allocation2 + $0x24] sm:$0xf]
      %v261 = vld [vmem:[#allocation2 + $0x28] sm:$0xf]
      %v262 = vld [vmem:[#allocation2 + $0x30] sm:$0xf]
      %v263 = vld [vmem:[#allocation2 + $0x34] sm:$0xf]
      %v264 = vld [vmem:[#allocation2 + $0x3c] sm:$0xf]
      %v265 = vld [vmem:[#allocation2 + $0x40] sm:$0xf]
      %v266 = vld [vmem:[#allocation2 + $0x48] sm:$0xf]
      %v267 = vld [vmem:[#allocation2 + $0x4c] sm:$0xf]
      %v268 = vld [vmem:[#allocation2 + $0x54] sm:$0xf]
      %v269 = vld [vmem:[#allocation2 + $0x58] sm:$0xf]
      %v270 = vld [vmem:[#allocation2 + $0x60] sm:$0xf]
      %v271 = vld [vmem:[#allocation2 + $0x64] sm:$0xf]
      %v272 = vld [vmem:[#allocation2 + $0x6c] sm:$0xf]
      %v273 = vld [vmem:[#allocation2 + $0x70] sm:$0xf]
      %v274 = vld [vmem:[#allocation2 + $0x78] sm:$0xf]
      %v275 = vld [vmem:[#allocation2 + $0x7c] sm:$0xf]
      %v276 = vld [vmem:[#allocation2 + $0x84] sm:$0xf]
      %v277 = vld [vmem:[#allocation2 + $0x88] sm:$0xf]
      %v278 = vld [vmem:[#allocation2 + $0x90] sm:$0xf]
      %v279 = vld [vmem:[#allocation2 + $0x94] sm:$0xf]
      %v280 = vld [vmem:[#allocation2 + $0x9c] sm:$0xf]
      %v281 = vld [vmem:[#allocation2 + $0xa0] sm:$0xf]
      %v282 = vld [vmem:[#allocation2 + $0xa8] sm:$0xf]
      %v283 = vld [vmem:[#allocation2 + $0xac] sm:$0xf]
      %v284 = vld [vmem:[#allocation2 + $0xb4] sm:$0xf]
      %v285 = vld [vmem:[#allocation2 + $0xb8] sm:$0xf]
      %v286 = vld [vmem:[%s1] sm:$0xf]
      %v287 = vld [vmem:[%s1 + $0x4] sm:$0xf]
      %v288 = vld [vmem:[%s1 + $0x8] sm:$0xf]
      %v289 = vld [vmem:[%s1 + $0xc] sm:$0xf]
      %v290 = vld [vmem:[%s1 + $0x10] sm:$0xf]
      %v291 = vld [vmem:[%s1 + $0x14] sm:$0xf]
      %v292 = vld [vmem:[%s1 + $0x18] sm:$0xf]
      %v293 = vld [vmem:[%s1 + $0x1c] sm:$0xf]
      %v294 = vld [vmem:[%s1 + $0x20] sm:$0xf]
      %v295 = vld [vmem:[%s1 + $0x24] sm:$0xf]
      %v296 = vld [vmem:[%s1 + $0x28] sm:$0xf]
      %v297 = vld [vmem:[%s1 + $0x2c] sm:$0xf]
      %v298 = vld [vmem:[%s1 + $0x30] sm:$0xf]
      %v299 = vld [vmem:[%s1 + $0x34] sm:$0xf]
      %v300 = vld [vmem:[%s1 + $0x38] sm:$0xf]
      %v301 = vld [vmem:[%s1 + $0x3c] sm:$0xf]
      %v302 = vld [vmem:[#allocation2 + $0x8] sm:$0x1]
      %v303 = vld [vmem:[#allocation2 + $0x14] sm:$0x1]
      %v304 = vld [vmem:[#allocation2 + $0x20] sm:$0x1]
      %v305 = vld [vmem:[#allocation2 + $0x2c] sm:$0x1]
      %v306 = vld [vmem:[#allocation2 + $0x38] sm:$0x1]
      %v307 = vld [vmem:[#allocation2 + $0x44] sm:$0x1]
      %v308 = vld [vmem:[#allocation2 + $0x50] sm:$0x1]
      %v309 = vld [vmem:[#allocation2 + $0x5c] sm:$0x1]
      %v310 = vld [vmem:[#allocation2 + $0x68] sm:$0x1]
      %v311 = vld [vmem:[#allocation2 + $0x74] sm:$0x1]
      %v312 = vld [vmem:[#allocation2 + $0x80] sm:$0x1]
      %v313 = vld [vmem:[#allocation2 + $0x8c] sm:$0x1]
      %v314 = vld [vmem:[#allocation2 + $0x98] sm:$0x1]
      %v315 = vld [vmem:[#allocation2 + $0xa4] sm:$0x1]
      %v316 = vld [vmem:[#allocation2 + $0xb0] sm:$0x1]
      %v317 = vld [vmem:[#allocation2 + $0xbc] sm:$0x1]
      %vm318 = vsmask.f32 3328
      %vm319 = vsmask.f32 7440
      %vm320 = vmor %vm318, %vm319
      %v322 = vshrl.u32 %v254, 16
      %v324 = vrot.slane %v322, 4
      %v325 = vshll.u32 %v254, 16
      %v327 = vrot.slane %v325, 5
      %v328 = vor.u32 %v324, %v327
      %v329 = vrot.slane %v328, 4
      %v331 = vshll.u32 %v255, 16
      %v333 = vrot.slane %v331, 5
      %v334 = vsel %vm320, %v329, %v333
      %v335 = vshrl.u32 %v255, 16
      %v337 = vrot.slane %v335, 4
      %v338 = vor.u32 %v337, %v333
      %v339 = vrot.slane %v338, 4
      %v341 = vshll.u32 %v302, 16
      %v343 = vrot.slane %v341, 5
      %v344 = vsel %vm320, %v339, %v343
      %v346 = vshrl.u32 %v256, 16
      %v348 = vrot.slane %v346, 4
      %v349 = vshll.u32 %v256, 16
      %v351 = vrot.slane %v349, 5
      %v352 = vor.u32 %v348, %v351
      %v353 = vrot.slane %v352, 4
      %v355 = vshll.u32 %v257, 16
      %v357 = vrot.slane %v355, 5
      %v358 = vsel %vm320, %v353, %v357
      %v359 = vshrl.u32 %v257, 16
      %v361 = vrot.slane %v359, 4
      %v362 = vor.u32 %v361, %v357
      %v363 = vrot.slane %v362, 4
      %v365 = vshll.u32 %v303, 16
      %v367 = vrot.slane %v365, 5
      %v368 = vsel %vm320, %v363, %v367
      %v370 = vshrl.u32 %v258, 16
      %v372 = vrot.slane %v370, 4
      %v373 = vshll.u32 %v258, 16
      %v375 = vrot.slane %v373, 5
      %v376 = vor.u32 %v372, %v375
      %v377 = vrot.slane %v376, 4
      %v379 = vshll.u32 %v259, 16
      %v381 = vrot.slane %v379, 5
      %v382 = vsel %vm320, %v377, %v381
      %v383 = vshrl.u32 %v259, 16
      %v385 = vrot.slane %v383, 4
      %v386 = vor.u32 %v385, %v381
      %v387 = vrot.slane %v386, 4
      %v389 = vshll.u32 %v304, 16
      %v391 = vrot.slane %v389, 5
      %v392 = vsel %vm320, %v387, %v391
      %v394 = vshrl.u32 %v260, 16
      %v396 = vrot.slane %v394, 4
      %v397 = vshll.u32 %v260, 16
      %v399 = vrot.slane %v397, 5
      %v400 = vor.u32 %v396, %v399
      %v401 = vrot.slane %v400, 4
      %v403 = vshll.u32 %v261, 16
      %v405 = vrot.slane %v403, 5
      %v406 = vsel %vm320, %v401, %v405
      %v407 = vshrl.u32 %v261, 16
      %v409 = vrot.slane %v407, 4
      %v410 = vor.u32 %v409, %v405
      %v411 = vrot.slane %v410, 4
      %v413 = vshll.u32 %v305, 16
      %v415 = vrot.slane %v413, 5
      %v416 = vsel %vm320, %v411, %v415
      %v418 = vshrl.u32 %v262, 16
      %v420 = vrot.slane %v418, 4
      %v421 = vshll.u32 %v262, 16
      %v423 = vrot.slane %v421, 5
      %v424 = vor.u32 %v420, %v423
      %v425 = vrot.slane %v424, 4
      %v427 = vshll.u32 %v263, 16
      %v429 = vrot.slane %v427, 5
      %v430 = vsel %vm320, %v425, %v429
      %v431 = vshrl.u32 %v263, 16
      %v433 = vrot.slane %v431, 4
      %v434 = vor.u32 %v433, %v429
      %v435 = vrot.slane %v434, 4
      %v437 = vshll.u32 %v306, 16
      %v439 = vrot.slane %v437, 5
      %v440 = vsel %vm320, %v435, %v439
      %v442 = vshrl.u32 %v264, 16
      %v444 = vrot.slane %v442, 4
      %v445 = vshll.u32 %v264, 16
      %v447 = vrot.slane %v445, 5
      %v448 = vor.u32 %v444, %v447
      %v449 = vrot.slane %v448, 4
      %v451 = vshll.u32 %v265, 16
      %v453 = vrot.slane %v451, 5
      %v454 = vsel %vm320, %v449, %v453
      %v455 = vshrl.u32 %v265, 16
      %v457 = vrot.slane %v455, 4
      %v458 = vor.u32 %v457, %v453
      %v459 = vrot.slane %v458, 4
      %v461 = vshll.u32 %v307, 16
      %v463 = vrot.slane %v461, 5
      %v464 = vsel %vm320, %v459, %v463
      %v466 = vshrl.u32 %v266, 16
      %v468 = vrot.slane %v466, 4
      %v469 = vshll.u32 %v266, 16
      %v471 = vrot.slane %v469, 5
      %v472 = vor.u32 %v468, %v471
      %v473 = vrot.slane %v472, 4
      %v475 = vshll.u32 %v267, 16
      %v477 = vrot.slane %v475, 5
      %v478 = vsel %vm320, %v473, %v477
      %v479 = vshrl.u32 %v267, 16
      %v481 = vrot.slane %v479, 4
      %v482 = vor.u32 %v481, %v477
      %v483 = vrot.slane %v482, 4
      %v485 = vshll.u32 %v308, 16
      %v487 = vrot.slane %v485, 5
      %v488 = vsel %vm320, %v483, %v487
      %v490 = vshrl.u32 %v268, 16
      %v492 = vrot.slane %v490, 4
      %v493 = vshll.u32 %v268, 16
      %v495 = vrot.slane %v493, 5
      %v496 = vor.u32 %v492, %v495
      %v497 = vrot.slane %v496, 4
      %v499 = vshll.u32 %v269, 16
      %v501 = vrot.slane %v499, 5
      %v502 = vsel %vm320, %v497, %v501
      %v503 = vshrl.u32 %v269, 16
      %v505 = vrot.slane %v503, 4
      %v506 = vor.u32 %v505, %v501
      %v507 = vrot.slane %v506, 4
      %v509 = vshll.u32 %v309, 16
      %v511 = vrot.slane %v509, 5
      %v512 = vsel %vm320, %v507, %v511
      %v514 = vshrl.u32 %v270, 16
      %v516 = vrot.slane %v514, 4
      %v517 = vshll.u32 %v270, 16
      %v519 = vrot.slane %v517, 5
      %v520 = vor.u32 %v516, %v519
      %v521 = vrot.slane %v520, 4
      %v523 = vshll.u32 %v271, 16
      %v525 = vrot.slane %v523, 5
      %v526 = vsel %vm320, %v521, %v525
      %v527 = vshrl.u32 %v271, 16
      %v529 = vrot.slane %v527, 4
      %v530 = vor.u32 %v529, %v525
      %v531 = vrot.slane %v530, 4
      %v533 = vshll.u32 %v310, 16
      %v535 = vrot.slane %v533, 5
      %v536 = vsel %vm320, %v531, %v535
      %v538 = vshrl.u32 %v272, 16
      %v540 = vrot.slane %v538, 4
      %v541 = vshll.u32 %v272, 16
      %v543 = vrot.slane %v541, 5
      %v544 = vor.u32 %v540, %v543
      %v545 = vrot.slane %v544, 4
      %v547 = vshll.u32 %v273, 16
      %v549 = vrot.slane %v547, 5
      %v550 = vsel %vm320, %v545, %v549
      %v551 = vshrl.u32 %v273, 16
      %v553 = vrot.slane %v551, 4
      %v554 = vor.u32 %v553, %v549
      %v555 = vrot.slane %v554, 4
      %v557 = vshll.u32 %v311, 16
      %v559 = vrot.slane %v557, 5
      %v560 = vsel %vm320, %v555, %v559
      %v562 = vshrl.u32 %v274, 16
      %v564 = vrot.slane %v562, 4
      %v565 = vshll.u32 %v274, 16
      %v567 = vrot.slane %v565, 5
      %v568 = vor.u32 %v564, %v567
      %v569 = vrot.slane %v568, 4
      %v571 = vshll.u32 %v275, 16
      %v573 = vrot.slane %v571, 5
      %v574 = vsel %vm320, %v569, %v573
      %v575 = vshrl.u32 %v275, 16
      %v577 = vrot.slane %v575, 4
      %v578 = vor.u32 %v577, %v573
      %v579 = vrot.slane %v578, 4
      %v581 = vshll.u32 %v312, 16
      %v583 = vrot.slane %v581, 5
      %v584 = vsel %vm320, %v579, %v583
      %v586 = vshrl.u32 %v276, 16
      %v588 = vrot.slane %v586, 4
      %v589 = vshll.u32 %v276, 16
      %v591 = vrot.slane %v589, 5
      %v592 = vor.u32 %v588, %v591
      %v593 = vrot.slane %v592, 4
      %v595 = vshll.u32 %v277, 16
      %v597 = vrot.slane %v595, 5
      %v598 = vsel %vm320, %v593, %v597
      %v599 = vshrl.u32 %v277, 16
      %v601 = vrot.slane %v599, 4
      %v602 = vor.u32 %v601, %v597
      %v603 = vrot.slane %v602, 4
      %v605 = vshll.u32 %v313, 16
      %v607 = vrot.slane %v605, 5
      %v608 = vsel %vm320, %v603, %v607
      %v610 = vshrl.u32 %v278, 16
      %v612 = vrot.slane %v610, 4
      %v613 = vshll.u32 %v278, 16
      %v615 = vrot.slane %v613, 5
      %v616 = vor.u32 %v612, %v615
      %v617 = vrot.slane %v616, 4
      %v619 = vshll.u32 %v279, 16
      %v621 = vrot.slane %v619, 5
      %v622 = vsel %vm320, %v617, %v621
      %v623 = vshrl.u32 %v279, 16
      %v625 = vrot.slane %v623, 4
      %v626 = vor.u32 %v625, %v621
      %v627 = vrot.slane %v626, 4
      %v629 = vshll.u32 %v314, 16
      %v631 = vrot.slane %v629, 5
      %v632 = vsel %vm320, %v627, %v631
      %v634 = vshrl.u32 %v280, 16
      %v636 = vrot.slane %v634, 4
      %v637 = vshll.u32 %v280, 16
      %v639 = vrot.slane %v637, 5
      %v640 = vor.u32 %v636, %v639
      %v641 = vrot.slane %v640, 4
      %v643 = vshll.u32 %v281, 16
      %v645 = vrot.slane %v643, 5
      %v646 = vsel %vm320, %v641, %v645
      %v647 = vshrl.u32 %v281, 16
      %v649 = vrot.slane %v647, 4
      %v650 = vor.u32 %v649, %v645
      %v651 = vrot.slane %v650, 4
      %v653 = vshll.u32 %v315, 16
      %v655 = vrot.slane %v653, 5
      %v656 = vsel %vm320, %v651, %v655
      %v658 = vshrl.u32 %v282, 16
      %v660 = vrot.slane %v658, 4
      %v661 = vshll.u32 %v282, 16
      %v663 = vrot.slane %v661, 5
      %v664 = vor.u32 %v660, %v663
      %v665 = vrot.slane %v664, 4
      %v667 = vshll.u32 %v283, 16
      %v669 = vrot.slane %v667, 5
      %v670 = vsel %vm320, %v665, %v669
      %v671 = vshrl.u32 %v283, 16
      %v673 = vrot.slane %v671, 4
      %v674 = vor.u32 %v673, %v669
      %v675 = vrot.slane %v674, 4
      %v677 = vshll.u32 %v316, 16
      %v679 = vrot.slane %v677, 5
      %v680 = vsel %vm320, %v675, %v679
      %v682 = vshrl.u32 %v284, 16
      %v684 = vrot.slane %v682, 4
      %v685 = vshll.u32 %v284, 16
      %v687 = vrot.slane %v685, 5
      %v688 = vor.u32 %v684, %v687
      %v689 = vrot.slane %v688, 4
      %v691 = vshll.u32 %v285, 16
      %v693 = vrot.slane %v691, 5
      %v694 = vsel %vm320, %v689, %v693
      %v695 = vshrl.u32 %v285, 16
      %v697 = vrot.slane %v695, 4
      %v698 = vor.u32 %v697, %v693
      %v699 = vrot.slane %v698, 4
      %v701 = vshll.u32 %v317, 16
      %v703 = vrot.slane %v701, 5
      %v704 = vsel %vm320, %v699, %v703
      %s705 = scalar_lea.vmem %s1, 64
      %v706 = vld [vmem:[%s705] sm:$0xf]
      %v707 = vld [vmem:[%s705 + $0x4] sm:$0xf]
      %v708 = vld [vmem:[%s705 + $0x8] sm:$0xf]
      %v709 = vld [vmem:[%s705 + $0xc] sm:$0xf]
      %v710 = vld [vmem:[%s705 + $0x10] sm:$0xf]
      %v711 = vld [vmem:[%s705 + $0x14] sm:$0xf]
      %v712 = vld [vmem:[%s705 + $0x18] sm:$0xf]
      %v713 = vld [vmem:[%s705 + $0x1c] sm:$0xf]
      %v714 = vld [vmem:[%s705 + $0x20] sm:$0xf]
      %v715 = vld [vmem:[%s705 + $0x24] sm:$0xf]
      %v716 = vld [vmem:[%s705 + $0x28] sm:$0xf]
      %v717 = vld [vmem:[%s705 + $0x2c] sm:$0xf]
      %v718 = vld [vmem:[%s705 + $0x30] sm:$0xf]
      %v719 = vld [vmem:[%s705 + $0x34] sm:$0xf]
      %v720 = vld [vmem:[%s705 + $0x38] sm:$0xf]
      %v721 = vld [vmem:[%s705 + $0x3c] sm:$0xf]
      %v722 = vunpack.c.l.b16 %v334
      %v723 = vunpack.c.l.b16 %v344
      %v724 = vunpack.c.l.b16 %v358
      %v725 = vunpack.c.l.b16 %v368
      %v726 = vunpack.c.l.b16 %v382
      %v727 = vunpack.c.l.b16 %v392
      %v728 = vunpack.c.l.b16 %v406
      %v729 = vunpack.c.l.b16 %v416
      %v730 = vunpack.c.l.b16 %v430
      %v731 = vunpack.c.l.b16 %v440
      %v732 = vunpack.c.l.b16 %v454
      %v733 = vunpack.c.l.b16 %v464
      %v734 = vunpack.c.l.b16 %v478
      %v735 = vunpack.c.l.b16 %v488
      %v736 = vunpack.c.l.b16 %v502
      %v737 = vunpack.c.l.b16 %v512
      %v738 = vunpack.c.l.b16 %v526
      %v739 = vunpack.c.l.b16 %v536
      %v740 = vunpack.c.l.b16 %v550
      %v741 = vunpack.c.l.b16 %v560
      %v742 = vunpack.c.l.b16 %v574
      %v743 = vunpack.c.l.b16 %v584
      %v744 = vunpack.c.l.b16 %v598
      %v745 = vunpack.c.l.b16 %v608
      %v746 = vunpack.c.l.b16 %v622
      %v747 = vunpack.c.l.b16 %v632
      %v748 = vunpack.c.l.b16 %v646
      %v749 = vunpack.c.l.b16 %v656
      %v750 = vunpack.c.l.b16 %v670
      %v751 = vunpack.c.l.b16 %v680
      %v752 = vunpack.c.l.b16 %v694
      %v753 = vunpack.c.l.b16 %v704
      %v754 = vpack.c.b16 %v723, %v722
      %v755 = vpack.c.b16 %v725, %v724
      %v756 = vpack.c.b16 %v727, %v726
      %v757 = vpack.c.b16 %v729, %v728
      %v758 = vpack.c.b16 %v731, %v730
      %v759 = vpack.c.b16 %v733, %v732
      %v760 = vpack.c.b16 %v735, %v734
      %v761 = vpack.c.b16 %v737, %v736
      %v762 = vpack.c.b16 %v739, %v738
      %v763 = vpack.c.b16 %v741, %v740
      %v764 = vpack.c.b16 %v743, %v742
      %v765 = vpack.c.b16 %v745, %v744
      %v766 = vpack.c.b16 %v747, %v746
      %v767 = vpack.c.b16 %v749, %v748
      %v768 = vpack.c.b16 %v751, %v750
      %v769 = vpack.c.b16 %v753, %v752
      %v802 = vunpack.c.l.b16 %v706
      %v803 = vunpack.c.l.b16 %v707
      %v804 = vunpack.c.l.b16 %v708
      %v805 = vunpack.c.l.b16 %v709
      %v806 = vunpack.c.l.b16 %v710
      %v807 = vunpack.c.l.b16 %v711
      %v808 = vunpack.c.l.b16 %v712
      %v809 = vunpack.c.l.b16 %v713
      %v810 = vunpack.c.l.b16 %v714
      %v811 = vunpack.c.l.b16 %v715
      %v812 = vunpack.c.l.b16 %v716
      %v813 = vunpack.c.l.b16 %v717
      %v814 = vunpack.c.l.b16 %v718
      %v815 = vunpack.c.l.b16 %v719
      %v816 = vunpack.c.l.b16 %v720
      %v817 = vunpack.c.l.b16 %v721
      %v818 = vpack.c.b16 %v803, %v802
      %v819 = vpack.c.b16 %v805, %v804
      %v820 = vpack.c.b16 %v807, %v806
      %v821 = vpack.c.b16 %v809, %v808
      %v822 = vpack.c.b16 %v811, %v810
      %v823 = vpack.c.b16 %v813, %v812
      %v824 = vpack.c.b16 %v815, %v814
      %v825 = vpack.c.b16 %v817, %v816
      %834 = vmatpush.bf16.msra.mxu0 %v825
      %835 = vmatpush.bf16.msra.mxu0 %v824
      %836 = vmatpush.bf16.msra.mxu0 %v823
      %837 = vmatpush.bf16.msra.mxu0 %v822
      %838 = vmatpush.bf16.msra.mxu0 %v821
      %839 = vmatpush.bf16.msra.mxu0 %v820
      %840 = vmatpush.bf16.msra.mxu0 %v819
      %841 = vmatpush.bf16.msra.mxu0 %v818
      %842 = vmatmul.bf16.gmra.mxu0 %v754
      %v843 = vpop.f32.mrf.mxu0
      %v844 = vadd.f32 0.0, %v843
      %v845 = vpop.f32.mrf.mxu0
      %v846 = vadd.f32 0.0, %v845
      %847 = vmatmul.bf16.gmra.mxu0 %v755
      %v848 = vpop.f32.mrf.mxu0
      %v849 = vadd.f32 0.0, %v848
      %v850 = vpop.f32.mrf.mxu0
      %v851 = vadd.f32 0.0, %v850
      %852 = vmatmul.bf16.gmra.mxu0 %v756
      %v853 = vpop.f32.mrf.mxu0
      %v854 = vadd.f32 0.0, %v853
      %v855 = vpop.f32.mrf.mxu0
      %v856 = vadd.f32 0.0, %v855
      %857 = vmatmul.bf16.gmra.mxu0 %v757
      %v858 = vpop.f32.mrf.mxu0
      %v859 = vadd.f32 0.0, %v858
      %v860 = vpop.f32.mrf.mxu0
      %v861 = vadd.f32 0.0, %v860
      %862 = vmatmul.bf16.gmra.mxu0 %v758
      %v863 = vpop.f32.mrf.mxu0
      %v864 = vadd.f32 0.0, %v863
      %v865 = vpop.f32.mrf.mxu0
      %v866 = vadd.f32 0.0, %v865
      %867 = vmatmul.bf16.gmra.mxu0 %v759
      %v868 = vpop.f32.mrf.mxu0
      %v869 = vadd.f32 0.0, %v868
      %v870 = vpop.f32.mrf.mxu0
      %v871 = vadd.f32 0.0, %v870
      %872 = vmatmul.bf16.gmra.mxu0 %v760
      %v873 = vpop.f32.mrf.mxu0
      %v874 = vadd.f32 0.0, %v873
      %v875 = vpop.f32.mrf.mxu0
      %v876 = vadd.f32 0.0, %v875
      %877 = vmatmul.bf16.gmra.mxu0 %v761
      %v878 = vpop.f32.mrf.mxu0
      %v879 = vadd.f32 0.0, %v878
      %v880 = vpop.f32.mrf.mxu0
      %v881 = vadd.f32 0.0, %v880
      %882 = vmatmul.bf16.gmra.mxu0 %v762
      %v883 = vpop.f32.mrf.mxu0
      %v884 = vadd.f32 0.0, %v883
      %v885 = vpop.f32.mrf.mxu0
      %v886 = vadd.f32 0.0, %v885
      %887 = vmatmul.bf16.gmra.mxu0 %v763
      %v888 = vpop.f32.mrf.mxu0
      %v889 = vadd.f32 0.0, %v888
      %v890 = vpop.f32.mrf.mxu0
      %v891 = vadd.f32 0.0, %v890
      %892 = vmatmul.bf16.gmra.mxu0 %v764
      %v893 = vpop.f32.mrf.mxu0
      %v894 = vadd.f32 0.0, %v893
      %v895 = vpop.f32.mrf.mxu0
      %v896 = vadd.f32 0.0, %v895
      %897 = vmatmul.bf16.gmra.mxu0 %v765
      %v898 = vpop.f32.mrf.mxu0
      %v899 = vadd.f32 0.0, %v898
      %v900 = vpop.f32.mrf.mxu0
      %v901 = vadd.f32 0.0, %v900
      %902 = vmatmul.bf16.gmra.mxu0 %v766
      %v903 = vpop.f32.mrf.mxu0
      %v904 = vadd.f32 0.0, %v903
      %v905 = vpop.f32.mrf.mxu0
      %v906 = vadd.f32 0.0, %v905
      %907 = vmatmul.bf16.gmra.mxu0 %v767
      %v908 = vpop.f32.mrf.mxu0
      %v909 = vadd.f32 0.0, %v908
      %v910 = vpop.f32.mrf.mxu0
      %v911 = vadd.f32 0.0, %v910
      %912 = vmatmul.bf16.gmra.mxu0 %v768
      %v913 = vpop.f32.mrf.mxu0
      %v914 = vadd.f32 0.0, %v913
      %v915 = vpop.f32.mrf.mxu0
      %v916 = vadd.f32 0.0, %v915
      %917 = vmatmul.bf16.gmra.mxu0 %v769
      %v918 = vpop.f32.mrf.mxu0
      %v919 = vadd.f32 0.0, %v918
      %v920 = vpop.f32.mrf.mxu0
      %v921 = vadd.f32 0.0, %v920
      %922 = vdwg.mxu0
      %v955 = vunpack.c.l.b16 %v254
      %v956 = vunpack.c.l.b16 %v255
      %v957 = vunpack.c.l.b16 %v256
      %v958 = vunpack.c.l.b16 %v257
      %v959 = vunpack.c.l.b16 %v258
      %v960 = vunpack.c.l.b16 %v259
      %v961 = vunpack.c.l.b16 %v260
      %v962 = vunpack.c.l.b16 %v261
      %v963 = vunpack.c.l.b16 %v262
      %v964 = vunpack.c.l.b16 %v263
      %v965 = vunpack.c.l.b16 %v264
      %v966 = vunpack.c.l.b16 %v265
      %v967 = vunpack.c.l.b16 %v266
      %v968 = vunpack.c.l.b16 %v267
      %v969 = vunpack.c.l.b16 %v268
      %v970 = vunpack.c.l.b16 %v269
      %v971 = vunpack.c.l.b16 %v270
      %v972 = vunpack.c.l.b16 %v271
      %v973 = vunpack.c.l.b16 %v272
      %v974 = vunpack.c.l.b16 %v273
      %v975 = vunpack.c.l.b16 %v274
      %v976 = vunpack.c.l.b16 %v275
      %v977 = vunpack.c.l.b16 %v276
      %v978 = vunpack.c.l.b16 %v277
      %v979 = vunpack.c.l.b16 %v278
      %v980 = vunpack.c.l.b16 %v279
      %v981 = vunpack.c.l.b16 %v280
      %v982 = vunpack.c.l.b16 %v281
      %v983 = vunpack.c.l.b16 %v282
      %v984 = vunpack.c.l.b16 %v283
      %v985 = vunpack.c.l.b16 %v284
      %v986 = vunpack.c.l.b16 %v285
      %v987 = vpack.c.b16 %v956, %v955
      %v988 = vpack.c.b16 %v958, %v957
      %v989 = vpack.c.b16 %v960, %v959
      %v990 = vpack.c.b16 %v962, %v961
      %v991 = vpack.c.b16 %v964, %v963
      %v992 = vpack.c.b16 %v966, %v965
      %v993 = vpack.c.b16 %v968, %v967
      %v994 = vpack.c.b16 %v970, %v969
      %v995 = vpack.c.b16 %v972, %v971
      %v996 = vpack.c.b16 %v974, %v973
      %v997 = vpack.c.b16 %v976, %v975
      %v998 = vpack.c.b16 %v978, %v977
      %v999 = vpack.c.b16 %v980, %v979
      %v1000 = vpack.c.b16 %v982, %v981
      %v1001 = vpack.c.b16 %v984, %v983
      %v1002 = vpack.c.b16 %v986, %v985
      %v1035 = vunpack.c.l.b16 %v286
      %v1036 = vunpack.c.l.b16 %v287
      %v1037 = vunpack.c.l.b16 %v288
      %v1038 = vunpack.c.l.b16 %v289
      %v1039 = vunpack.c.l.b16 %v290
      %v1040 = vunpack.c.l.b16 %v291
      %v1041 = vunpack.c.l.b16 %v292
      %v1042 = vunpack.c.l.b16 %v293
      %v1043 = vunpack.c.l.b16 %v294
      %v1044 = vunpack.c.l.b16 %v295
      %v1045 = vunpack.c.l.b16 %v296
      %v1046 = vunpack.c.l.b16 %v297
      %v1047 = vunpack.c.l.b16 %v298
      %v1048 = vunpack.c.l.b16 %v299
      %v1049 = vunpack.c.l.b16 %v300
      %v1050 = vunpack.c.l.b16 %v301
      %v1051 = vpack.c.b16 %v1036, %v1035
      %v1052 = vpack.c.b16 %v1038, %v1037
      %v1053 = vpack.c.b16 %v1040, %v1039
      %v1054 = vpack.c.b16 %v1042, %v1041
      %v1055 = vpack.c.b16 %v1044, %v1043
      %v1056 = vpack.c.b16 %v1046, %v1045
      %v1057 = vpack.c.b16 %v1048, %v1047
      %v1058 = vpack.c.b16 %v1050, %v1049
      %1067 = vmatpush.bf16.msra.mxu0 %v1058
      %1068 = vmatpush.bf16.msra.mxu0 %v1057
      %1069 = vmatpush.bf16.msra.mxu0 %v1056
      %1070 = vmatpush.bf16.msra.mxu0 %v1055
      %1071 = vmatpush.bf16.msra.mxu0 %v1054
      %1072 = vmatpush.bf16.msra.mxu0 %v1053
      %1073 = vmatpush.bf16.msra.mxu0 %v1052
      %1074 = vmatpush.bf16.msra.mxu0 %v1051
      %1075 = vmatmul.bf16.gmra.mxu0 %v987
      %v1076 = vpop.f32.mrf.mxu0
      %v1077 = vadd.f32 %v844, %v1076
      %v1078 = vpop.f32.mrf.mxu0
      %v1079 = vadd.f32 %v846, %v1078
      %1080 = vmatmul.bf16.gmra.mxu0 %v988
      %v1081 = vpop.f32.mrf.mxu0
      %v1082 = vadd.f32 %v849, %v1081
      %v1083 = vpop.f32.mrf.mxu0
      %v1084 = vadd.f32 %v851, %v1083
      %1085 = vmatmul.bf16.gmra.mxu0 %v989
      %v1086 = vpop.f32.mrf.mxu0
      %v1087 = vadd.f32 %v854, %v1086
      %v1088 = vpop.f32.mrf.mxu0
      %v1089 = vadd.f32 %v856, %v1088
      %1090 = vmatmul.bf16.gmra.mxu0 %v990
      %v1091 = vpop.f32.mrf.mxu0
      %v1092 = vadd.f32 %v859, %v1091
      %v1093 = vpop.f32.mrf.mxu0
      %v1094 = vadd.f32 %v861, %v1093
      %1095 = vmatmul.bf16.gmra.mxu0 %v991
      %v1096 = vpop.f32.mrf.mxu0
      %v1097 = vadd.f32 %v864, %v1096
      %v1098 = vpop.f32.mrf.mxu0
      %v1099 = vadd.f32 %v866, %v1098
      %1100 = vmatmul.bf16.gmra.mxu0 %v992
      %v1101 = vpop.f32.mrf.mxu0
      %v1102 = vadd.f32 %v869, %v1101
      %v1103 = vpop.f32.mrf.mxu0
      %v1104 = vadd.f32 %v871, %v1103
      %1105 = vmatmul.bf16.gmra.mxu0 %v993
      %v1106 = vpop.f32.mrf.mxu0
      %v1107 = vadd.f32 %v874, %v1106
      %v1108 = vpop.f32.mrf.mxu0
      %v1109 = vadd.f32 %v876, %v1108
      %1110 = vmatmul.bf16.gmra.mxu0 %v994
      %v1111 = vpop.f32.mrf.mxu0
      %v1112 = vadd.f32 %v879, %v1111
      %v1113 = vpop.f32.mrf.mxu0
      %v1114 = vadd.f32 %v881, %v1113
      %1115 = vmatmul.bf16.gmra.mxu0 %v995
      %v1116 = vpop.f32.mrf.mxu0
      %v1117 = vadd.f32 %v884, %v1116
      %v1118 = vpop.f32.mrf.mxu0
      %v1119 = vadd.f32 %v886, %v1118
      %1120 = vmatmul.bf16.gmra.mxu0 %v996
      %v1121 = vpop.f32.mrf.mxu0
      %v1122 = vadd.f32 %v889, %v1121
      %v1123 = vpop.f32.mrf.mxu0
      %v1124 = vadd.f32 %v891, %v1123
      %1125 = vmatmul.bf16.gmra.mxu0 %v997
      %v1126 = vpop.f32.mrf.mxu0
      %v1127 = vadd.f32 %v894, %v1126
      %v1128 = vpop.f32.mrf.mxu0
      %v1129 = vadd.f32 %v896, %v1128
      %1130 = vmatmul.bf16.gmra.mxu0 %v998
      %v1131 = vpop.f32.mrf.mxu0
      %v1132 = vadd.f32 %v899, %v1131
      %v1133 = vpop.f32.mrf.mxu0
      %v1134 = vadd.f32 %v901, %v1133
      %1135 = vmatmul.bf16.gmra.mxu0 %v999
      %v1136 = vpop.f32.mrf.mxu0
      %v1137 = vadd.f32 %v904, %v1136
      %v1138 = vpop.f32.mrf.mxu0
      %v1139 = vadd.f32 %v906, %v1138
      %1140 = vmatmul.bf16.gmra.mxu0 %v1000
      %v1141 = vpop.f32.mrf.mxu0
      %v1142 = vadd.f32 %v909, %v1141
      %v1143 = vpop.f32.mrf.mxu0
      %v1144 = vadd.f32 %v911, %v1143
      %1145 = vmatmul.bf16.gmra.mxu0 %v1001
      %v1146 = vpop.f32.mrf.mxu0
      %v1147 = vadd.f32 %v914, %v1146
      %v1148 = vpop.f32.mrf.mxu0
      %v1149 = vadd.f32 %v916, %v1148
      %1150 = vmatmul.bf16.gmra.mxu0 %v1002
      %v1151 = vpop.f32.mrf.mxu0
      %v1152 = vadd.f32 %v919, %v1151
      %v1153 = vpop.f32.mrf.mxu0
      %v1154 = vadd.f32 %v921, %v1153
      %1155 = vdwg.mxu0
      %v1156 = vld [vmem:[#allocation2] sm:$0xe]
      %v1157 = vld [vmem:[#allocation2 + $0xc] sm:$0xe]
      %v1158 = vld [vmem:[#allocation2 + $0x18] sm:$0xe]
      %v1159 = vld [vmem:[#allocation2 + $0x24] sm:$0xe]
      %v1160 = vld [vmem:[#allocation2 + $0x30] sm:$0xe]
      %v1161 = vld [vmem:[#allocation2 + $0x3c] sm:$0xe]
      %v1162 = vld [vmem:[#allocation2 + $0x48] sm:$0xe]
      %v1163 = vld [vmem:[#allocation2 + $0x54] sm:$0xe]
      %v1164 = vld [vmem:[#allocation2 + $0x60] sm:$0xe]
      %v1165 = vld [vmem:[#allocation2 + $0x6c] sm:$0xe]
      %v1166 = vld [vmem:[#allocation2 + $0x78] sm:$0xe]
      %v1167 = vld [vmem:[#allocation2 + $0x84] sm:$0xe]
      %v1168 = vld [vmem:[#allocation2 + $0x90] sm:$0xe]
      %v1169 = vld [vmem:[#allocation2 + $0x9c] sm:$0xe]
      %v1170 = vld [vmem:[#allocation2 + $0xa8] sm:$0xe]
      %v1171 = vld [vmem:[#allocation2 + $0xb4] sm:$0xe]
      %vm1204 = vcmask 1042432
      %vm1205 = vcmask 1046532
      %vm1206 = vmor %vm1204, %vm1205
      %v1207 = vrot.slane %v1156, 5
      %v1208 = vrot.slane %v1207, 4
      %v1209 = vrot.slane %v255, 5
      %v1210 = vsel %vm1206, %v1208, %v1209
      %v1211 = vrot.slane %v1209, 4
      %v1212 = vrot.slane %v302, 5
      %v1213 = vsel %vm1206, %v1211, %v1212
      %v1214 = vrot.slane %v1157, 5
      %v1215 = vrot.slane %v1214, 4
      %v1216 = vrot.slane %v257, 5
      %v1217 = vsel %vm1206, %v1215, %v1216
      %v1218 = vrot.slane %v1216, 4
      %v1219 = vrot.slane %v303, 5
      %v1220 = vsel %vm1206, %v1218, %v1219
      %v1221 = vrot.slane %v1158, 5
      %v1222 = vrot.slane %v1221, 4
      %v1223 = vrot.slane %v259, 5
      %v1224 = vsel %vm1206, %v1222, %v1223
      %v1225 = vrot.slane %v1223, 4
      %v1226 = vrot.slane %v304, 5
      %v1227 = vsel %vm1206, %v1225, %v1226
      %v1228 = vrot.slane %v1159, 5
      %v1229 = vrot.slane %v1228, 4
      %v1230 = vrot.slane %v261, 5
      %v1231 = vsel %vm1206, %v1229, %v1230
      %v1232 = vrot.slane %v1230, 4
      %v1233 = vrot.slane %v305, 5
      %v1234 = vsel %vm1206, %v1232, %v1233
      %v1235 = vrot.slane %v1160, 5
      %v1236 = vrot.slane %v1235, 4
      %v1237 = vrot.slane %v263, 5
      %v1238 = vsel %vm1206, %v1236, %v1237
      %v1239 = vrot.slane %v1237, 4
      %v1240 = vrot.slane %v306, 5
      %v1241 = vsel %vm1206, %v1239, %v1240
      %v1242 = vrot.slane %v1161, 5
      %v1243 = vrot.slane %v1242, 4
      %v1244 = vrot.slane %v265, 5
      %v1245 = vsel %vm1206, %v1243, %v1244
      %v1246 = vrot.slane %v1244, 4
      %v1247 = vrot.slane %v307, 5
      %v1248 = vsel %vm1206, %v1246, %v1247
      %v1249 = vrot.slane %v1162, 5
      %v1250 = vrot.slane %v1249, 4
      %v1251 = vrot.slane %v267, 5
      %v1252 = vsel %vm1206, %v1250, %v1251
      %v1253 = vrot.slane %v1251, 4
      %v1254 = vrot.slane %v308, 5
      %v1255 = vsel %vm1206, %v1253, %v1254
      %v1256 = vrot.slane %v1163, 5
      %v1257 = vrot.slane %v1256, 4
      %v1258 = vrot.slane %v269, 5
      %v1259 = vsel %vm1206, %v1257, %v1258
      %v1260 = vrot.slane %v1258, 4
      %v1261 = vrot.slane %v309, 5
      %v1262 = vsel %vm1206, %v1260, %v1261
      %v1263 = vrot.slane %v1164, 5
      %v1264 = vrot.slane %v1263, 4
      %v1265 = vrot.slane %v271, 5
      %v1266 = vsel %vm1206, %v1264, %v1265
      %v1267 = vrot.slane %v1265, 4
      %v1268 = vrot.slane %v310, 5
      %v1269 = vsel %vm1206, %v1267, %v1268
      %v1270 = vrot.slane %v1165, 5
      %v1271 = vrot.slane %v1270, 4
      %v1272 = vrot.slane %v273, 5
      %v1273 = vsel %vm1206, %v1271, %v1272
      %v1274 = vrot.slane %v1272, 4
      %v1275 = vrot.slane %v311, 5
      %v1276 = vsel %vm1206, %v1274, %v1275
      %v1277 = vrot.slane %v1166, 5
      %v1278 = vrot.slane %v1277, 4
      %v1279 = vrot.slane %v275, 5
      %v1280 = vsel %vm1206, %v1278, %v1279
      %v1281 = vrot.slane %v1279, 4
      %v1282 = vrot.slane %v312, 5
      %v1283 = vsel %vm1206, %v1281, %v1282
      %v1284 = vrot.slane %v1167, 5
      %v1285 = vrot.slane %v1284, 4
      %v1286 = vrot.slane %v277, 5
      %v1287 = vsel %vm1206, %v1285, %v1286
      %v1288 = vrot.slane %v1286, 4
      %v1289 = vrot.slane %v313, 5
      %v1290 = vsel %vm1206, %v1288, %v1289
      %v1291 = vrot.slane %v1168, 5
      %v1292 = vrot.slane %v1291, 4
      %v1293 = vrot.slane %v279, 5
      %v1294 = vsel %vm1206, %v1292, %v1293
      %v1295 = vrot.slane %v1293, 4
      %v1296 = vrot.slane %v314, 5
      %v1297 = vsel %vm1206, %v1295, %v1296
      %v1298 = vrot.slane %v1169, 5
      %v1299 = vrot.slane %v1298, 4
      %v1300 = vrot.slane %v281, 5
      %v1301 = vsel %vm1206, %v1299, %v1300
      %v1302 = vrot.slane %v1300, 4
      %v1303 = vrot.slane %v315, 5
      %v1304 = vsel %vm1206, %v1302, %v1303
      %v1305 = vrot.slane %v1170, 5
      %v1306 = vrot.slane %v1305, 4
      %v1307 = vrot.slane %v283, 5
      %v1308 = vsel %vm1206, %v1306, %v1307
      %v1309 = vrot.slane %v1307, 4
      %v1310 = vrot.slane %v316, 5
      %v1311 = vsel %vm1206, %v1309, %v1310
      %v1312 = vrot.slane %v1171, 5
      %v1313 = vrot.slane %v1312, 4
      %v1314 = vrot.slane %v285, 5
      %v1315 = vsel %vm1206, %v1313, %v1314
      %v1316 = vrot.slane %v1314, 4
      %v1317 = vrot.slane %v317, 5
      %v1318 = vsel %vm1206, %v1316, %v1317
      %s1319 = scalar_lea.vmem %s1, 128
      %v1320 = vld [vmem:[%s1319] sm:$0xf]
      %v1321 = vld [vmem:[%s1319 + $0x4] sm:$0xf]
      %v1322 = vld [vmem:[%s1319 + $0x8] sm:$0xf]
      %v1323 = vld [vmem:[%s1319 + $0xc] sm:$0xf]
      %v1324 = vld [vmem:[%s1319 + $0x10] sm:$0xf]
      %v1325 = vld [vmem:[%s1319 + $0x14] sm:$0xf]
      %v1326 = vld [vmem:[%s1319 + $0x18] sm:$0xf]
      %v1327 = vld [vmem:[%s1319 + $0x1c] sm:$0xf]
      %v1328 = vld [vmem:[%s1319 + $0x20] sm:$0xf]
      %v1329 = vld [vmem:[%s1319 + $0x24] sm:$0xf]
      %v1330 = vld [vmem:[%s1319 + $0x28] sm:$0xf]
      %v1331 = vld [vmem:[%s1319 + $0x2c] sm:$0xf]
      %v1332 = vld [vmem:[%s1319 + $0x30] sm:$0xf]
      %v1333 = vld [vmem:[%s1319 + $0x34] sm:$0xf]
      %v1334 = vld [vmem:[%s1319 + $0x38] sm:$0xf]
      %v1335 = vld [vmem:[%s1319 + $0x3c] sm:$0xf]
      %v1336 = vunpack.c.l.b16 %v1210
      %v1337 = vunpack.c.l.b16 %v1213
      %v1338 = vunpack.c.l.b16 %v1217
      %v1339 = vunpack.c.l.b16 %v1220
      %v1340 = vunpack.c.l.b16 %v1224
      %v1341 = vunpack.c.l.b16 %v1227
      %v1342 = vunpack.c.l.b16 %v1231
      %v1343 = vunpack.c.l.b16 %v1234
      %v1344 = vunpack.c.l.b16 %v1238
      %v1345 = vunpack.c.l.b16 %v1241
      %v1346 = vunpack.c.l.b16 %v1245
      %v1347 = vunpack.c.l.b16 %v1248
      %v1348 = vunpack.c.l.b16 %v1252
      %v1349 = vunpack.c.l.b16 %v1255
      %v1350 = vunpack.c.l.b16 %v1259
      %v1351 = vunpack.c.l.b16 %v1262
      %v1352 = vunpack.c.l.b16 %v1266
      %v1353 = vunpack.c.l.b16 %v1269
      %v1354 = vunpack.c.l.b16 %v1273
      %v1355 = vunpack.c.l.b16 %v1276
      %v1356 = vunpack.c.l.b16 %v1280
      %v1357 = vunpack.c.l.b16 %v1283
      %v1358 = vunpack.c.l.b16 %v1287
      %v1359 = vunpack.c.l.b16 %v1290
      %v1360 = vunpack.c.l.b16 %v1294
      %v1361 = vunpack.c.l.b16 %v1297
      %v1362 = vunpack.c.l.b16 %v1301
      %v1363 = vunpack.c.l.b16 %v1304
      %v1364 = vunpack.c.l.b16 %v1308
      %v1365 = vunpack.c.l.b16 %v1311
      %v1366 = vunpack.c.l.b16 %v1315
      %v1367 = vunpack.c.l.b16 %v1318
      %v1368 = vpack.c.b16 %v1337, %v1336
      %v1369 = vpack.c.b16 %v1339, %v1338
      %v1370 = vpack.c.b16 %v1341, %v1340
      %v1371 = vpack.c.b16 %v1343, %v1342
      %v1372 = vpack.c.b16 %v1345, %v1344
      %v1373 = vpack.c.b16 %v1347, %v1346
      %v1374 = vpack.c.b16 %v1349, %v1348
      %v1375 = vpack.c.b16 %v1351, %v1350
      %v1376 = vpack.c.b16 %v1353, %v1352
      %v1377 = vpack.c.b16 %v1355, %v1354
      %v1378 = vpack.c.b16 %v1357, %v1356
      %v1379 = vpack.c.b16 %v1359, %v1358
      %v1380 = vpack.c.b16 %v1361, %v1360
      %v1381 = vpack.c.b16 %v1363, %v1362
      %v1382 = vpack.c.b16 %v1365, %v1364
      %v1383 = vpack.c.b16 %v1367, %v1366
      %v1416 = vunpack.c.l.b16 %v1320
      %v1417 = vunpack.c.l.b16 %v1321
      %v1418 = vunpack.c.l.b16 %v1322
      %v1419 = vunpack.c.l.b16 %v1323
      %v1420 = vunpack.c.l.b16 %v1324
      %v1421 = vunpack.c.l.b16 %v1325
      %v1422 = vunpack.c.l.b16 %v1326
      %v1423 = vunpack.c.l.b16 %v1327
      %v1424 = vunpack.c.l.b16 %v1328
      %v1425 = vunpack.c.l.b16 %v1329
      %v1426 = vunpack.c.l.b16 %v1330
      %v1427 = vunpack.c.l.b16 %v1331
      %v1428 = vunpack.c.l.b16 %v1332
      %v1429 = vunpack.c.l.b16 %v1333
      %v1430 = vunpack.c.l.b16 %v1334
      %v1431 = vunpack.c.l.b16 %v1335
      %v1432 = vpack.c.b16 %v1417, %v1416
      %v1433 = vpack.c.b16 %v1419, %v1418
      %v1434 = vpack.c.b16 %v1421, %v1420
      %v1435 = vpack.c.b16 %v1423, %v1422
      %v1436 = vpack.c.b16 %v1425, %v1424
      %v1437 = vpack.c.b16 %v1427, %v1426
      %v1438 = vpack.c.b16 %v1429, %v1428
      %v1439 = vpack.c.b16 %v1431, %v1430
      %1448 = vmatpush.bf16.msra.mxu0 %v1439
      %1449 = vmatpush.bf16.msra.mxu0 %v1438
      %1450 = vmatpush.bf16.msra.mxu0 %v1437
      %1451 = vmatpush.bf16.msra.mxu0 %v1436
      %1452 = vmatpush.bf16.msra.mxu0 %v1435
      %1453 = vmatpush.bf16.msra.mxu0 %v1434
      %1454 = vmatpush.bf16.msra.mxu0 %v1433
      %1455 = vmatpush.bf16.msra.mxu0 %v1432
      %1456 = vmatmul.bf16.gmra.mxu0 %v1368
      %v1457 = vpop.f32.mrf.mxu0
      %v1458 = vadd.f32 0.0, %v1457
      %v1459 = vpop.f32.mrf.mxu0
      %v1460 = vadd.f32 0.0, %v1459
      %1461 = vmatmul.bf16.gmra.mxu0 %v1369
      %v1462 = vpop.f32.mrf.mxu0
      %v1463 = vadd.f32 0.0, %v1462
      %v1464 = vpop.f32.mrf.mxu0
      %v1465 = vadd.f32 0.0, %v1464
      %1466 = vmatmul.bf16.gmra.mxu0 %v1370
      %v1467 = vpop.f32.mrf.mxu0
      %v1468 = vadd.f32 0.0, %v1467
      %v1469 = vpop.f32.mrf.mxu0
      %v1470 = vadd.f32 0.0, %v1469
      %1471 = vmatmul.bf16.gmra.mxu0 %v1371
      %v1472 = vpop.f32.mrf.mxu0
      %v1473 = vadd.f32 0.0, %v1472
      %v1474 = vpop.f32.mrf.mxu0
      %v1475 = vadd.f32 0.0, %v1474
      %1476 = vmatmul.bf16.gmra.mxu0 %v1372
      %v1477 = vpop.f32.mrf.mxu0
      %v1478 = vadd.f32 0.0, %v1477
      %v1479 = vpop.f32.mrf.mxu0
      %v1480 = vadd.f32 0.0, %v1479
      %1481 = vmatmul.bf16.gmra.mxu0 %v1373
      %v1482 = vpop.f32.mrf.mxu0
      %v1483 = vadd.f32 0.0, %v1482
      %v1484 = vpop.f32.mrf.mxu0
      %v1485 = vadd.f32 0.0, %v1484
      %1486 = vmatmul.bf16.gmra.mxu0 %v1374
      %v1487 = vpop.f32.mrf.mxu0
      %v1488 = vadd.f32 0.0, %v1487
      %v1489 = vpop.f32.mrf.mxu0
      %v1490 = vadd.f32 0.0, %v1489
      %1491 = vmatmul.bf16.gmra.mxu0 %v1375
      %v1492 = vpop.f32.mrf.mxu0
      %v1493 = vadd.f32 0.0, %v1492
      %v1494 = vpop.f32.mrf.mxu0
      %v1495 = vadd.f32 0.0, %v1494
      %1496 = vmatmul.bf16.gmra.mxu0 %v1376
      %v1497 = vpop.f32.mrf.mxu0
      %v1498 = vadd.f32 0.0, %v1497
      %v1499 = vpop.f32.mrf.mxu0
      %v1500 = vadd.f32 0.0, %v1499
      %1501 = vmatmul.bf16.gmra.mxu0 %v1377
      %v1502 = vpop.f32.mrf.mxu0
      %v1503 = vadd.f32 0.0, %v1502
      %v1504 = vpop.f32.mrf.mxu0
      %v1505 = vadd.f32 0.0, %v1504
      %1506 = vmatmul.bf16.gmra.mxu0 %v1378
      %v1507 = vpop.f32.mrf.mxu0
      %v1508 = vadd.f32 0.0, %v1507
      %v1509 = vpop.f32.mrf.mxu0
      %v1510 = vadd.f32 0.0, %v1509
      %1511 = vmatmul.bf16.gmra.mxu0 %v1379
      %v1512 = vpop.f32.mrf.mxu0
      %v1513 = vadd.f32 0.0, %v1512
      %v1514 = vpop.f32.mrf.mxu0
      %v1515 = vadd.f32 0.0, %v1514
      %1516 = vmatmul.bf16.gmra.mxu0 %v1380
      %v1517 = vpop.f32.mrf.mxu0
      %v1518 = vadd.f32 0.0, %v1517
      %v1519 = vpop.f32.mrf.mxu0
      %v1520 = vadd.f32 0.0, %v1519
      %1521 = vmatmul.bf16.gmra.mxu0 %v1381
      %v1522 = vpop.f32.mrf.mxu0
      %v1523 = vadd.f32 0.0, %v1522
      %v1524 = vpop.f32.mrf.mxu0
      %v1525 = vadd.f32 0.0, %v1524
      %1526 = vmatmul.bf16.gmra.mxu0 %v1382
      %v1527 = vpop.f32.mrf.mxu0
      %v1528 = vadd.f32 0.0, %v1527
      %v1529 = vpop.f32.mrf.mxu0
      %v1530 = vadd.f32 0.0, %v1529
      %1531 = vmatmul.bf16.gmra.mxu0 %v1383
      %v1532 = vpop.f32.mrf.mxu0
      %v1533 = vadd.f32 0.0, %v1532
      %v1534 = vpop.f32.mrf.mxu0
      %v1535 = vadd.f32 0.0, %v1534
      %1536 = vdwg.mxu0
      %v1537 = vadd.f32 %v1077, %v1458
      %v1538 = vadd.f32 %v1079, %v1460
      %v1539 = vadd.f32 %v1082, %v1463
      %v1540 = vadd.f32 %v1084, %v1465
      %v1541 = vadd.f32 %v1087, %v1468
      %v1542 = vadd.f32 %v1089, %v1470
      %v1543 = vadd.f32 %v1092, %v1473
      %v1544 = vadd.f32 %v1094, %v1475
      %v1545 = vadd.f32 %v1097, %v1478
      %v1546 = vadd.f32 %v1099, %v1480
      %v1547 = vadd.f32 %v1102, %v1483
      %v1548 = vadd.f32 %v1104, %v1485
      %v1549 = vadd.f32 %v1107, %v1488
      %v1550 = vadd.f32 %v1109, %v1490
      %v1551 = vadd.f32 %v1112, %v1493
      %v1552 = vadd.f32 %v1114, %v1495
      %v1553 = vadd.f32 %v1117, %v1498
      %v1554 = vadd.f32 %v1119, %v1500
      %v1555 = vadd.f32 %v1122, %v1503
      %v1556 = vadd.f32 %v1124, %v1505
      %v1557 = vadd.f32 %v1127, %v1508
      %v1558 = vadd.f32 %v1129, %v1510
      %v1559 = vadd.f32 %v1132, %v1513
      %v1560 = vadd.f32 %v1134, %v1515
      %v1561 = vadd.f32 %v1137, %v1518
      %v1562 = vadd.f32 %v1139, %v1520
      %v1563 = vadd.f32 %v1142, %v1523
      %v1564 = vadd.f32 %v1144, %v1525
      %v1565 = vadd.f32 %v1147, %v1528
      %v1566 = vadd.f32 %v1149, %v1530
      %v1567 = vadd.f32 %v1152, %v1533
      %v1568 = vadd.f32 %v1154, %v1535
      %s1569 = scalar_lea.vmem [#allocation2], 12
      %v1570 = vld [vmem:[%s1569] sm:$0xf]
      %v1571 = vld [vmem:[%s1569 + $0x4] sm:$0xf]
      %v1572 = vld [vmem:[%s1569 + $0xc] sm:$0xf]
      %v1573 = vld [vmem:[%s1569 + $0x10] sm:$0xf]
      %v1574 = vld [vmem:[%s1569 + $0x18] sm:$0xf]
      %v1575 = vld [vmem:[%s1569 + $0x1c] sm:$0xf]
      %v1576 = vld [vmem:[%s1569 + $0x24] sm:$0xf]
      %v1577 = vld [vmem:[%s1569 + $0x28] sm:$0xf]
      %v1578 = vld [vmem:[%s1569 + $0x30] sm:$0xf]
      %v1579 = vld [vmem:[%s1569 + $0x34] sm:$0xf]
      %v1580 = vld [vmem:[%s1569 + $0x3c] sm:$0xf]
      %v1581 = vld [vmem:[%s1569 + $0x40] sm:$0xf]
      %v1582 = vld [vmem:[%s1569 + $0x48] sm:$0xf]
      %v1583 = vld [vmem:[%s1569 + $0x4c] sm:$0xf]
      %v1584 = vld [vmem:[%s1569 + $0x54] sm:$0xf]
      %v1585 = vld [vmem:[%s1569 + $0x58] sm:$0xf]
      %v1586 = vld [vmem:[%s1569 + $0x60] sm:$0xf]
      %v1587 = vld [vmem:[%s1569 + $0x64] sm:$0xf]
      %v1588 = vld [vmem:[%s1569 + $0x6c] sm:$0xf]
      %v1589 = vld [vmem:[%s1569 + $0x70] sm:$0xf]
      %v1590 = vld [vmem:[%s1569 + $0x78] sm:$0xf]
      %v1591 = vld [vmem:[%s1569 + $0x7c] sm:$0xf]
      %v1592 = vld [vmem:[%s1569 + $0x84] sm:$0xf]
      %v1593 = vld [vmem:[%s1569 + $0x88] sm:$0xf]
      %v1594 = vld [vmem:[%s1569 + $0x90] sm:$0xf]
      %v1595 = vld [vmem:[%s1569 + $0x94] sm:$0xf]
      %v1596 = vld [vmem:[%s1569 + $0x9c] sm:$0xf]
      %v1597 = vld [vmem:[%s1569 + $0xa0] sm:$0xf]
      %v1598 = vld [vmem:[%s1569 + $0xa8] sm:$0xf]
      %v1599 = vld [vmem:[%s1569 + $0xac] sm:$0xf]
      %v1600 = vld [vmem:[%s1569 + $0xb4] sm:$0xf]
      %v1601 = vld [vmem:[%s1569 + $0xb8] sm:$0xf]
      %s1602 = scalar_lea.vmem %s1, 192
      %v1603 = vld [vmem:[%s1602] sm:$0xf]
      %v1604 = vld [vmem:[%s1602 + $0x4] sm:$0xf]
      %v1605 = vld [vmem:[%s1602 + $0x8] sm:$0xf]
      %v1606 = vld [vmem:[%s1602 + $0xc] sm:$0xf]
      %v1607 = vld [vmem:[%s1602 + $0x10] sm:$0xf]
      %v1608 = vld [vmem:[%s1602 + $0x14] sm:$0xf]
      %v1609 = vld [vmem:[%s1602 + $0x18] sm:$0xf]
      %v1610 = vld [vmem:[%s1602 + $0x1c] sm:$0xf]
      %v1611 = vld [vmem:[%s1602 + $0x20] sm:$0xf]
      %v1612 = vld [vmem:[%s1602 + $0x24] sm:$0xf]
      %v1613 = vld [vmem:[%s1602 + $0x28] sm:$0xf]
      %v1614 = vld [vmem:[%s1602 + $0x2c] sm:$0xf]
      %v1615 = vld [vmem:[%s1602 + $0x30] sm:$0xf]
      %v1616 = vld [vmem:[%s1602 + $0x34] sm:$0xf]
      %v1617 = vld [vmem:[%s1602 + $0x38] sm:$0xf]
      %v1618 = vld [vmem:[%s1602 + $0x3c] sm:$0xf]
      %v1651 = vunpack.c.l.b16 %v1570
      %v1652 = vunpack.c.l.b16 %v1571
      %v1653 = vunpack.c.l.b16 %v1572
      %v1654 = vunpack.c.l.b16 %v1573
      %v1655 = vunpack.c.l.b16 %v1574
      %v1656 = vunpack.c.l.b16 %v1575
      %v1657 = vunpack.c.l.b16 %v1576
      %v1658 = vunpack.c.l.b16 %v1577
      %v1659 = vunpack.c.l.b16 %v1578
      %v1660 = vunpack.c.l.b16 %v1579
      %v1661 = vunpack.c.l.b16 %v1580
      %v1662 = vunpack.c.l.b16 %v1581
      %v1663 = vunpack.c.l.b16 %v1582
      %v1664 = vunpack.c.l.b16 %v1583
      %v1665 = vunpack.c.l.b16 %v1584
      %v1666 = vunpack.c.l.b16 %v1585
      %v1667 = vunpack.c.l.b16 %v1586
      %v1668 = vunpack.c.l.b16 %v1587
      %v1669 = vunpack.c.l.b16 %v1588
      %v1670 = vunpack.c.l.b16 %v1589
      %v1671 = vunpack.c.l.b16 %v1590
      %v1672 = vunpack.c.l.b16 %v1591
      %v1673 = vunpack.c.l.b16 %v1592
      %v1674 = vunpack.c.l.b16 %v1593
      %v1675 = vunpack.c.l.b16 %v1594
      %v1676 = vunpack.c.l.b16 %v1595
      %v1677 = vunpack.c.l.b16 %v1596
      %v1678 = vunpack.c.l.b16 %v1597
      %v1679 = vunpack.c.l.b16 %v1598
      %v1680 = vunpack.c.l.b16 %v1599
      %v1681 = vunpack.c.l.b16 %v1600
      %v1682 = vunpack.c.l.b16 %v1601
      %v1683 = vpack.c.b16 %v1652, %v1651
      %v1684 = vpack.c.b16 %v1654, %v1653
      %v1685 = vpack.c.b16 %v1656, %v1655
      %v1686 = vpack.c.b16 %v1658, %v1657
      %v1687 = vpack.c.b16 %v1660, %v1659
      %v1688 = vpack.c.b16 %v1662, %v1661
      %v1689 = vpack.c.b16 %v1664, %v1663
      %v1690 = vpack.c.b16 %v1666, %v1665
      %v1691 = vpack.c.b16 %v1668, %v1667
      %v1692 = vpack.c.b16 %v1670, %v1669
      %v1693 = vpack.c.b16 %v1672, %v1671
      %v1694 = vpack.c.b16 %v1674, %v1673
      %v1695 = vpack.c.b16 %v1676, %v1675
      %v1696 = vpack.c.b16 %v1678, %v1677
      %v1697 = vpack.c.b16 %v1680, %v1679
      %v1698 = vpack.c.b16 %v1682, %v1681
      %v1731 = vunpack.c.l.b16 %v1603
      %v1732 = vunpack.c.l.b16 %v1604
      %v1733 = vunpack.c.l.b16 %v1605
      %v1734 = vunpack.c.l.b16 %v1606
      %v1735 = vunpack.c.l.b16 %v1607
      %v1736 = vunpack.c.l.b16 %v1608
      %v1737 = vunpack.c.l.b16 %v1609
      %v1738 = vunpack.c.l.b16 %v1610
      %v1739 = vunpack.c.l.b16 %v1611
      %v1740 = vunpack.c.l.b16 %v1612
      %v1741 = vunpack.c.l.b16 %v1613
      %v1742 = vunpack.c.l.b16 %v1614
      %v1743 = vunpack.c.l.b16 %v1615
      %v1744 = vunpack.c.l.b16 %v1616
      %v1745 = vunpack.c.l.b16 %v1617
      %v1746 = vunpack.c.l.b16 %v1618
      %v1747 = vpack.c.b16 %v1732, %v1731
      %v1748 = vpack.c.b16 %v1734, %v1733
      %v1749 = vpack.c.b16 %v1736, %v1735
      %v1750 = vpack.c.b16 %v1738, %v1737
      %v1751 = vpack.c.b16 %v1740, %v1739
      %v1752 = vpack.c.b16 %v1742, %v1741
      %v1753 = vpack.c.b16 %v1744, %v1743
      %v1754 = vpack.c.b16 %v1746, %v1745
      %1763 = vmatpush.bf16.msra.mxu0 %v1754
      %1764 = vmatpush.bf16.msra.mxu0 %v1753
      %1765 = vmatpush.bf16.msra.mxu0 %v1752
      %1766 = vmatpush.bf16.msra.mxu0 %v1751
      %1767 = vmatpush.bf16.msra.mxu0 %v1750
      %1768 = vmatpush.bf16.msra.mxu0 %v1749
      %1769 = vmatpush.bf16.msra.mxu0 %v1748
      %1770 = vmatpush.bf16.msra.mxu0 %v1747
      %1771 = vmatmul.bf16.gmra.mxu0 %v1683
      %v1772 = vpop.f32.mrf.mxu0
      %v1773 = vadd.f32 0.0, %v1772
      %v1774 = vpop.f32.mrf.mxu0
      %v1775 = vadd.f32 0.0, %v1774
      %1776 = vmatmul.bf16.gmra.mxu0 %v1684
      %v1777 = vpop.f32.mrf.mxu0
      %v1778 = vadd.f32 0.0, %v1777
      %v1779 = vpop.f32.mrf.mxu0
      %v1780 = vadd.f32 0.0, %v1779
      %1781 = vmatmul.bf16.gmra.mxu0 %v1685
      %v1782 = vpop.f32.mrf.mxu0
      %v1783 = vadd.f32 0.0, %v1782
      %v1784 = vpop.f32.mrf.mxu0
      %v1785 = vadd.f32 0.0, %v1784
      %1786 = vmatmul.bf16.gmra.mxu0 %v1686
      %v1787 = vpop.f32.mrf.mxu0
      %v1788 = vadd.f32 0.0, %v1787
      %v1789 = vpop.f32.mrf.mxu0
      %v1790 = vadd.f32 0.0, %v1789
      %1791 = vmatmul.bf16.gmra.mxu0 %v1687
      %v1792 = vpop.f32.mrf.mxu0
      %v1793 = vadd.f32 0.0, %v1792
      %v1794 = vpop.f32.mrf.mxu0
      %v1795 = vadd.f32 0.0, %v1794
      %1796 = vmatmul.bf16.gmra.mxu0 %v1688
      %v1797 = vpop.f32.mrf.mxu0
      %v1798 = vadd.f32 0.0, %v1797
      %v1799 = vpop.f32.mrf.mxu0
      %v1800 = vadd.f32 0.0, %v1799
      %1801 = vmatmul.bf16.gmra.mxu0 %v1689
      %v1802 = vpop.f32.mrf.mxu0
      %v1803 = vadd.f32 0.0, %v1802
      %v1804 = vpop.f32.mrf.mxu0
      %v1805 = vadd.f32 0.0, %v1804
      %1806 = vmatmul.bf16.gmra.mxu0 %v1690
      %v1807 = vpop.f32.mrf.mxu0
      %v1808 = vadd.f32 0.0, %v1807
      %v1809 = vpop.f32.mrf.mxu0
      %v1810 = vadd.f32 0.0, %v1809
      %1811 = vmatmul.bf16.gmra.mxu0 %v1691
      %v1812 = vpop.f32.mrf.mxu0
      %v1813 = vadd.f32 0.0, %v1812
      %v1814 = vpop.f32.mrf.mxu0
      %v1815 = vadd.f32 0.0, %v1814
      %1816 = vmatmul.bf16.gmra.mxu0 %v1692
      %v1817 = vpop.f32.mrf.mxu0
      %v1818 = vadd.f32 0.0, %v1817
      %v1819 = vpop.f32.mrf.mxu0
      %v1820 = vadd.f32 0.0, %v1819
      %1821 = vmatmul.bf16.gmra.mxu0 %v1693
      %v1822 = vpop.f32.mrf.mxu0
      %v1823 = vadd.f32 0.0, %v1822
      %v1824 = vpop.f32.mrf.mxu0
      %v1825 = vadd.f32 0.0, %v1824
      %1826 = vmatmul.bf16.gmra.mxu0 %v1694
      %v1827 = vpop.f32.mrf.mxu0
      %v1828 = vadd.f32 0.0, %v1827
      %v1829 = vpop.f32.mrf.mxu0
      %v1830 = vadd.f32 0.0, %v1829
      %1831 = vmatmul.bf16.gmra.mxu0 %v1695
      %v1832 = vpop.f32.mrf.mxu0
      %v1833 = vadd.f32 0.0, %v1832
      %v1834 = vpop.f32.mrf.mxu0
      %v1835 = vadd.f32 0.0, %v1834
      %1836 = vmatmul.bf16.gmra.mxu0 %v1696
      %v1837 = vpop.f32.mrf.mxu0
      %v1838 = vadd.f32 0.0, %v1837
      %v1839 = vpop.f32.mrf.mxu0
      %v1840 = vadd.f32 0.0, %v1839
      %1841 = vmatmul.bf16.gmra.mxu0 %v1697
      %v1842 = vpop.f32.mrf.mxu0
      %v1843 = vadd.f32 0.0, %v1842
      %v1844 = vpop.f32.mrf.mxu0
      %v1845 = vadd.f32 0.0, %v1844
      %1846 = vmatmul.bf16.gmra.mxu0 %v1698
      %v1847 = vpop.f32.mrf.mxu0
      %v1848 = vadd.f32 0.0, %v1847
      %v1849 = vpop.f32.mrf.mxu0
      %v1850 = vadd.f32 0.0, %v1849
      %1851 = vdwg.mxu0
      %v1852 = vadd.f32 %v1537, %v1773
      %v1853 = vadd.f32 %v1538, %v1775
      %v1854 = vadd.f32 %v1539, %v1778
      %v1855 = vadd.f32 %v1540, %v1780
      %v1856 = vadd.f32 %v1541, %v1783
      %v1857 = vadd.f32 %v1542, %v1785
      %v1858 = vadd.f32 %v1543, %v1788
      %v1859 = vadd.f32 %v1544, %v1790
      %v1860 = vadd.f32 %v1545, %v1793
      %v1861 = vadd.f32 %v1546, %v1795
      %v1862 = vadd.f32 %v1547, %v1798
      %v1863 = vadd.f32 %v1548, %v1800
      %v1864 = vadd.f32 %v1549, %v1803
      %v1865 = vadd.f32 %v1550, %v1805
      %v1866 = vadd.f32 %v1551, %v1808
      %v1867 = vadd.f32 %v1552, %v1810
      %v1868 = vadd.f32 %v1553, %v1813
      %v1869 = vadd.f32 %v1554, %v1815
      %v1870 = vadd.f32 %v1555, %v1818
      %v1871 = vadd.f32 %v1556, %v1820
      %v1872 = vadd.f32 %v1557, %v1823
      %v1873 = vadd.f32 %v1558, %v1825
      %v1874 = vadd.f32 %v1559, %v1828
      %v1875 = vadd.f32 %v1560, %v1830
      %v1876 = vadd.f32 %v1561, %v1833
      %v1877 = vadd.f32 %v1562, %v1835
      %v1878 = vadd.f32 %v1563, %v1838
      %v1879 = vadd.f32 %v1564, %v1840
      %v1880 = vadd.f32 %v1565, %v1843
      %v1881 = vadd.f32 %v1566, %v1845
      %v1882 = vadd.f32 %v1567, %v1848
      %v1883 = vadd.f32 %v1568, %v1850
      %v1884 = vld [vmem:[%s1569] sm:$0xf]
      %v1885 = vld [vmem:[%s1569 + $0x4] sm:$0xf]
      %v1886 = vld [vmem:[%s1569 + $0x8] sm:$0x1]
      %v1887 = vld [vmem:[%s1569 + $0xc] sm:$0xf]
      %v1888 = vld [vmem:[%s1569 + $0x10] sm:$0xf]
      %v1889 = vld [vmem:[%s1569 + $0x14] sm:$0x1]
      %v1890 = vld [vmem:[%s1569 + $0x18] sm:$0xf]
      %v1891 = vld [vmem:[%s1569 + $0x1c] sm:$0xf]
      %v1892 = vld [vmem:[%s1569 + $0x20] sm:$0x1]
      %v1893 = vld [vmem:[%s1569 + $0x24] sm:$0xf]
      %v1894 = vld [vmem:[%s1569 + $0x28] sm:$0xf]
      %v1895 = vld [vmem:[%s1569 + $0x2c] sm:$0x1]
      %v1896 = vld [vmem:[%s1569 + $0x30] sm:$0xf]
      %v1897 = vld [vmem:[%s1569 + $0x34] sm:$0xf]
      %v1898 = vld [vmem:[%s1569 + $0x38] sm:$0x1]
      %v1899 = vld [vmem:[%s1569 + $0x3c] sm:$0xf]
      %v1900 = vld [vmem:[%s1569 + $0x40] sm:$0xf]
      %v1901 = vld [vmem:[%s1569 + $0x44] sm:$0x1]
      %v1902 = vld [vmem:[%s1569 + $0x48] sm:$0xf]
      %v1903 = vld [vmem:[%s1569 + $0x4c] sm:$0xf]
      %v1904 = vld [vmem:[%s1569 + $0x50] sm:$0x1]
      %v1905 = vld [vmem:[%s1569 + $0x54] sm:$0xf]
      %v1906 = vld [vmem:[%s1569 + $0x58] sm:$0xf]
      %v1907 = vld [vmem:[%s1569 + $0x5c] sm:$0x1]
      %v1908 = vld [vmem:[%s1569 + $0x60] sm:$0xf]
      %v1909 = vld [vmem:[%s1569 + $0x64] sm:$0xf]
      %v1910 = vld [vmem:[%s1569 + $0x68] sm:$0x1]
      %v1911 = vld [vmem:[%s1569 + $0x6c] sm:$0xf]
      %v1912 = vld [vmem:[%s1569 + $0x70] sm:$0xf]
      %v1913 = vld [vmem:[%s1569 + $0x74] sm:$0x1]
      %v1914 = vld [vmem:[%s1569 + $0x78] sm:$0xf]
      %v1915 = vld [vmem:[%s1569 + $0x7c] sm:$0xf]
      %v1916 = vld [vmem:[%s1569 + $0x80] sm:$0x1]
      %v1917 = vld [vmem:[%s1569 + $0x84] sm:$0xf]
      %v1918 = vld [vmem:[%s1569 + $0x88] sm:$0xf]
      %v1919 = vld [vmem:[%s1569 + $0x8c] sm:$0x1]
      %v1920 = vld [vmem:[%s1569 + $0x90] sm:$0xf]
      %v1921 = vld [vmem:[%s1569 + $0x94] sm:$0xf]
      %v1922 = vld [vmem:[%s1569 + $0x98] sm:$0x1]
      %v1923 = vld [vmem:[%s1569 + $0x9c] sm:$0xf]
      %v1924 = vld [vmem:[%s1569 + $0xa0] sm:$0xf]
      %v1925 = vld [vmem:[%s1569 + $0xa4] sm:$0x1]
      %v1926 = vld [vmem:[%s1569 + $0xa8] sm:$0xf]
      %v1927 = vld [vmem:[%s1569 + $0xac] sm:$0xf]
      %v1928 = vld [vmem:[%s1569 + $0xb0] sm:$0x1]
      %v1929 = vld [vmem:[%s1569 + $0xb4] sm:$0xf]
      %v1930 = vld [vmem:[%s1569 + $0xb8] sm:$0xf]
      %v1931 = vld [vmem:[%s1569 + $0xbc] sm:$0x1]
      %v1933 = vshrl.u32 %v1884, 16
      %v1935 = vrot.slane %v1933, 4
      %v1936 = vshll.u32 %v1884, 16
      %v1938 = vrot.slane %v1936, 5
      %v1939 = vor.u32 %v1935, %v1938
      %v1940 = vrot.slane %v1939, 4
      %v1942 = vshll.u32 %v1885, 16
      %v1944 = vrot.slane %v1942, 5
      %v1945 = vsel %vm320, %v1940, %v1944
      %v1946 = vshrl.u32 %v1885, 16
      %v1948 = vrot.slane %v1946, 4
      %v1949 = vor.u32 %v1948, %v1944
      %v1950 = vrot.slane %v1949, 4
      %v1952 = vshll.u32 %v1886, 16
      %v1954 = vrot.slane %v1952, 5
      %v1955 = vsel %vm320, %v1950, %v1954
      %v1957 = vshrl.u32 %v1887, 16
      %v1959 = vrot.slane %v1957, 4
      %v1960 = vshll.u32 %v1887, 16
      %v1962 = vrot.slane %v1960, 5
      %v1963 = vor.u32 %v1959, %v1962
      %v1964 = vrot.slane %v1963, 4
      %v1966 = vshll.u32 %v1888, 16
      %v1968 = vrot.slane %v1966, 5
      %v1969 = vsel %vm320, %v1964, %v1968
      %v1970 = vshrl.u32 %v1888, 16
      %v1972 = vrot.slane %v1970, 4
      %v1973 = vor.u32 %v1972, %v1968
      %v1974 = vrot.slane %v1973, 4
      %v1976 = vshll.u32 %v1889, 16
      %v1978 = vrot.slane %v1976, 5
      %v1979 = vsel %vm320, %v1974, %v1978
      %v1981 = vshrl.u32 %v1890, 16
      %v1983 = vrot.slane %v1981, 4
      %v1984 = vshll.u32 %v1890, 16
      %v1986 = vrot.slane %v1984, 5
      %v1987 = vor.u32 %v1983, %v1986
      %v1988 = vrot.slane %v1987, 4
      %v1990 = vshll.u32 %v1891, 16
      %v1992 = vrot.slane %v1990, 5
      %v1993 = vsel %vm320, %v1988, %v1992
      %v1994 = vshrl.u32 %v1891, 16
      %v1996 = vrot.slane %v1994, 4
      %v1997 = vor.u32 %v1996, %v1992
      %v1998 = vrot.slane %v1997, 4
      %v2000 = vshll.u32 %v1892, 16
      %v2002 = vrot.slane %v2000, 5
      %v2003 = vsel %vm320, %v1998, %v2002
      %v2005 = vshrl.u32 %v1893, 16
      %v2007 = vrot.slane %v2005, 4
      %v2008 = vshll.u32 %v1893, 16
      %v2010 = vrot.slane %v2008, 5
      %v2011 = vor.u32 %v2007, %v2010
      %v2012 = vrot.slane %v2011, 4
      %v2014 = vshll.u32 %v1894, 16
      %v2016 = vrot.slane %v2014, 5
      %v2017 = vsel %vm320, %v2012, %v2016
      %v2018 = vshrl.u32 %v1894, 16
      %v2020 = vrot.slane %v2018, 4
      %v2021 = vor.u32 %v2020, %v2016
      %v2022 = vrot.slane %v2021, 4
      %v2024 = vshll.u32 %v1895, 16
      %v2026 = vrot.slane %v2024, 5
      %v2027 = vsel %vm320, %v2022, %v2026
      %v2029 = vshrl.u32 %v1896, 16
      %v2031 = vrot.slane %v2029, 4
      %v2032 = vshll.u32 %v1896, 16
      %v2034 = vrot.slane %v2032, 5
      %v2035 = vor.u32 %v2031, %v2034
      %v2036 = vrot.slane %v2035, 4
      %v2038 = vshll.u32 %v1897, 16
      %v2040 = vrot.slane %v2038, 5
      %v2041 = vsel %vm320, %v2036, %v2040
      %v2042 = vshrl.u32 %v1897, 16
      %v2044 = vrot.slane %v2042, 4
      %v2045 = vor.u32 %v2044, %v2040
      %v2046 = vrot.slane %v2045, 4
      %v2048 = vshll.u32 %v1898, 16
      %v2050 = vrot.slane %v2048, 5
      %v2051 = vsel %vm320, %v2046, %v2050
      %v2053 = vshrl.u32 %v1899, 16
      %v2055 = vrot.slane %v2053, 4
      %v2056 = vshll.u32 %v1899, 16
      %v2058 = vrot.slane %v2056, 5
      %v2059 = vor.u32 %v2055, %v2058
      %v2060 = vrot.slane %v2059, 4
      %v2062 = vshll.u32 %v1900, 16
      %v2064 = vrot.slane %v2062, 5
      %v2065 = vsel %vm320, %v2060, %v2064
      %v2066 = vshrl.u32 %v1900, 16
      %v2068 = vrot.slane %v2066, 4
      %v2069 = vor.u32 %v2068, %v2064
      %v2070 = vrot.slane %v2069, 4
      %v2072 = vshll.u32 %v1901, 16
      %v2074 = vrot.slane %v2072, 5
      %v2075 = vsel %vm320, %v2070, %v2074
      %v2077 = vshrl.u32 %v1902, 16
      %v2079 = vrot.slane %v2077, 4
      %v2080 = vshll.u32 %v1902, 16
      %v2082 = vrot.slane %v2080, 5
      %v2083 = vor.u32 %v2079, %v2082
      %v2084 = vrot.slane %v2083, 4
      %v2086 = vshll.u32 %v1903, 16
      %v2088 = vrot.slane %v2086, 5
      %v2089 = vsel %vm320, %v2084, %v2088
      %v2090 = vshrl.u32 %v1903, 16
      %v2092 = vrot.slane %v2090, 4
      %v2093 = vor.u32 %v2092, %v2088
      %v2094 = vrot.slane %v2093, 4
      %v2096 = vshll.u32 %v1904, 16
      %v2098 = vrot.slane %v2096, 5
      %v2099 = vsel %vm320, %v2094, %v2098
      %v2101 = vshrl.u32 %v1905, 16
      %v2103 = vrot.slane %v2101, 4
      %v2104 = vshll.u32 %v1905, 16
      %v2106 = vrot.slane %v2104, 5
      %v2107 = vor.u32 %v2103, %v2106
      %v2108 = vrot.slane %v2107, 4
      %v2110 = vshll.u32 %v1906, 16
      %v2112 = vrot.slane %v2110, 5
      %v2113 = vsel %vm320, %v2108, %v2112
      %v2114 = vshrl.u32 %v1906, 16
      %v2116 = vrot.slane %v2114, 4
      %v2117 = vor.u32 %v2116, %v2112
      %v2118 = vrot.slane %v2117, 4
      %v2120 = vshll.u32 %v1907, 16
      %v2122 = vrot.slane %v2120, 5
      %v2123 = vsel %vm320, %v2118, %v2122
      %v2125 = vshrl.u32 %v1908, 16
      %v2127 = vrot.slane %v2125, 4
      %v2128 = vshll.u32 %v1908, 16
      %v2130 = vrot.slane %v2128, 5
      %v2131 = vor.u32 %v2127, %v2130
      %v2132 = vrot.slane %v2131, 4
      %v2134 = vshll.u32 %v1909, 16
      %v2136 = vrot.slane %v2134, 5
      %v2137 = vsel %vm320, %v2132, %v2136
      %v2138 = vshrl.u32 %v1909, 16
      %v2140 = vrot.slane %v2138, 4
      %v2141 = vor.u32 %v2140, %v2136
      %v2142 = vrot.slane %v2141, 4
      %v2144 = vshll.u32 %v1910, 16
      %v2146 = vrot.slane %v2144, 5
      %v2147 = vsel %vm320, %v2142, %v2146
      %v2149 = vshrl.u32 %v1911, 16
      %v2151 = vrot.slane %v2149, 4
      %v2152 = vshll.u32 %v1911, 16
      %v2154 = vrot.slane %v2152, 5
      %v2155 = vor.u32 %v2151, %v2154
      %v2156 = vrot.slane %v2155, 4
      %v2158 = vshll.u32 %v1912, 16
      %v2160 = vrot.slane %v2158, 5
      %v2161 = vsel %vm320, %v2156, %v2160
      %v2162 = vshrl.u32 %v1912, 16
      %v2164 = vrot.slane %v2162, 4
      %v2165 = vor.u32 %v2164, %v2160
      %v2166 = vrot.slane %v2165, 4
      %v2168 = vshll.u32 %v1913, 16
      %v2170 = vrot.slane %v2168, 5
      %v2171 = vsel %vm320, %v2166, %v2170
      %v2173 = vshrl.u32 %v1914, 16
      %v2175 = vrot.slane %v2173, 4
      %v2176 = vshll.u32 %v1914, 16
      %v2178 = vrot.slane %v2176, 5
      %v2179 = vor.u32 %v2175, %v2178
      %v2180 = vrot.slane %v2179, 4
      %v2182 = vshll.u32 %v1915, 16
      %v2184 = vrot.slane %v2182, 5
      %v2185 = vsel %vm320, %v2180, %v2184
      %v2186 = vshrl.u32 %v1915, 16
      %v2188 = vrot.slane %v2186, 4
      %v2189 = vor.u32 %v2188, %v2184
      %v2190 = vrot.slane %v2189, 4
      %v2192 = vshll.u32 %v1916, 16
      %v2194 = vrot.slane %v2192, 5
      %v2195 = vsel %vm320, %v2190, %v2194
      %v2197 = vshrl.u32 %v1917, 16
      %v2199 = vrot.slane %v2197, 4
      %v2200 = vshll.u32 %v1917, 16
      %v2202 = vrot.slane %v2200, 5
      %v2203 = vor.u32 %v2199, %v2202
      %v2204 = vrot.slane %v2203, 4
      %v2206 = vshll.u32 %v1918, 16
      %v2208 = vrot.slane %v2206, 5
      %v2209 = vsel %vm320, %v2204, %v2208
      %v2210 = vshrl.u32 %v1918, 16
      %v2212 = vrot.slane %v2210, 4
      %v2213 = vor.u32 %v2212, %v2208
      %v2214 = vrot.slane %v2213, 4
      %v2216 = vshll.u32 %v1919, 16
      %v2218 = vrot.slane %v2216, 5
      %v2219 = vsel %vm320, %v2214, %v2218
      %v2221 = vshrl.u32 %v1920, 16
      %v2223 = vrot.slane %v2221, 4
      %v2224 = vshll.u32 %v1920, 16
      %v2226 = vrot.slane %v2224, 5
      %v2227 = vor.u32 %v2223, %v2226
      %v2228 = vrot.slane %v2227, 4
      %v2230 = vshll.u32 %v1921, 16
      %v2232 = vrot.slane %v2230, 5
      %v2233 = vsel %vm320, %v2228, %v2232
      %v2234 = vshrl.u32 %v1921, 16
      %v2236 = vrot.slane %v2234, 4
      %v2237 = vor.u32 %v2236, %v2232
      %v2238 = vrot.slane %v2237, 4
      %v2240 = vshll.u32 %v1922, 16
      %v2242 = vrot.slane %v2240, 5
      %v2243 = vsel %vm320, %v2238, %v2242
      %v2245 = vshrl.u32 %v1923, 16
      %v2247 = vrot.slane %v2245, 4
      %v2248 = vshll.u32 %v1923, 16
      %v2250 = vrot.slane %v2248, 5
      %v2251 = vor.u32 %v2247, %v2250
      %v2252 = vrot.slane %v2251, 4
      %v2254 = vshll.u32 %v1924, 16
      %v2256 = vrot.slane %v2254, 5
      %v2257 = vsel %vm320, %v2252, %v2256
      %v2258 = vshrl.u32 %v1924, 16
      %v2260 = vrot.slane %v2258, 4
      %v2261 = vor.u32 %v2260, %v2256
      %v2262 = vrot.slane %v2261, 4
      %v2264 = vshll.u32 %v1925, 16
      %v2266 = vrot.slane %v2264, 5
      %v2267 = vsel %vm320, %v2262, %v2266
      %v2269 = vshrl.u32 %v1926, 16
      %v2271 = vrot.slane %v2269, 4
      %v2272 = vshll.u32 %v1926, 16
      %v2274 = vrot.slane %v2272, 5
      %v2275 = vor.u32 %v2271, %v2274
      %v2276 = vrot.slane %v2275, 4
      %v2278 = vshll.u32 %v1927, 16
      %v2280 = vrot.slane %v2278, 5
      %v2281 = vsel %vm320, %v2276, %v2280
      %v2282 = vshrl.u32 %v1927, 16
      %v2284 = vrot.slane %v2282, 4
      %v2285 = vor.u32 %v2284, %v2280
      %v2286 = vrot.slane %v2285, 4
      %v2288 = vshll.u32 %v1928, 16
      %v2290 = vrot.slane %v2288, 5
      %v2291 = vsel %vm320, %v2286, %v2290
      %v2293 = vshrl.u32 %v1929, 16
      %v2295 = vrot.slane %v2293, 4
      %v2296 = vshll.u32 %v1929, 16
      %v2298 = vrot.slane %v2296, 5
      %v2299 = vor.u32 %v2295, %v2298
      %v2300 = vrot.slane %v2299, 4
      %v2302 = vshll.u32 %v1930, 16
      %v2304 = vrot.slane %v2302, 5
      %v2305 = vsel %vm320, %v2300, %v2304
      %v2306 = vshrl.u32 %v1930, 16
      %v2308 = vrot.slane %v2306, 4
      %v2309 = vor.u32 %v2308, %v2304
      %v2310 = vrot.slane %v2309, 4
      %v2312 = vshll.u32 %v1931, 16
      %v2314 = vrot.slane %v2312, 5
      %v2315 = vsel %vm320, %v2310, %v2314
      %s2316 = scalar_lea.vmem %s1, 256
      %v2317 = vld [vmem:[%s2316] sm:$0xf]
      %v2318 = vld [vmem:[%s2316 + $0x4] sm:$0xf]
      %v2319 = vld [vmem:[%s2316 + $0x8] sm:$0xf]
      %v2320 = vld [vmem:[%s2316 + $0xc] sm:$0xf]
      %v2321 = vld [vmem:[%s2316 + $0x10] sm:$0xf]
      %v2322 = vld [vmem:[%s2316 + $0x14] sm:$0xf]
      %v2323 = vld [vmem:[%s2316 + $0x18] sm:$0xf]
      %v2324 = vld [vmem:[%s2316 + $0x1c] sm:$0xf]
      %v2325 = vld [vmem:[%s2316 + $0x20] sm:$0xf]
      %v2326 = vld [vmem:[%s2316 + $0x24] sm:$0xf]
      %v2327 = vld [vmem:[%s2316 + $0x28] sm:$0xf]
      %v2328 = vld [vmem:[%s2316 + $0x2c] sm:$0xf]
      %v2329 = vld [vmem:[%s2316 + $0x30] sm:$0xf]
      %v2330 = vld [vmem:[%s2316 + $0x34] sm:$0xf]
      %v2331 = vld [vmem:[%s2316 + $0x38] sm:$0xf]
      %v2332 = vld [vmem:[%s2316 + $0x3c] sm:$0xf]
      %v2333 = vunpack.c.l.b16 %v1945
      %v2334 = vunpack.c.l.b16 %v1955
      %v2335 = vunpack.c.l.b16 %v1969
      %v2336 = vunpack.c.l.b16 %v1979
      %v2337 = vunpack.c.l.b16 %v1993
      %v2338 = vunpack.c.l.b16 %v2003
      %v2339 = vunpack.c.l.b16 %v2017
      %v2340 = vunpack.c.l.b16 %v2027
      %v2341 = vunpack.c.l.b16 %v2041
      %v2342 = vunpack.c.l.b16 %v2051
      %v2343 = vunpack.c.l.b16 %v2065
      %v2344 = vunpack.c.l.b16 %v2075
      %v2345 = vunpack.c.l.b16 %v2089
      %v2346 = vunpack.c.l.b16 %v2099
      %v2347 = vunpack.c.l.b16 %v2113
      %v2348 = vunpack.c.l.b16 %v2123
      %v2349 = vunpack.c.l.b16 %v2137
      %v2350 = vunpack.c.l.b16 %v2147
      %v2351 = vunpack.c.l.b16 %v2161
      %v2352 = vunpack.c.l.b16 %v2171
      %v2353 = vunpack.c.l.b16 %v2185
      %v2354 = vunpack.c.l.b16 %v2195
      %v2355 = vunpack.c.l.b16 %v2209
      %v2356 = vunpack.c.l.b16 %v2219
      %v2357 = vunpack.c.l.b16 %v2233
      %v2358 = vunpack.c.l.b16 %v2243
      %v2359 = vunpack.c.l.b16 %v2257
      %v2360 = vunpack.c.l.b16 %v2267
      %v2361 = vunpack.c.l.b16 %v2281
      %v2362 = vunpack.c.l.b16 %v2291
      %v2363 = vunpack.c.l.b16 %v2305
      %v2364 = vunpack.c.l.b16 %v2315
      %v2365 = vpack.c.b16 %v2334, %v2333
      %v2366 = vpack.c.b16 %v2336, %v2335
      %v2367 = vpack.c.b16 %v2338, %v2337
      %v2368 = vpack.c.b16 %v2340, %v2339
      %v2369 = vpack.c.b16 %v2342, %v2341
      %v2370 = vpack.c.b16 %v2344, %v2343
      %v2371 = vpack.c.b16 %v2346, %v2345
      %v2372 = vpack.c.b16 %v2348, %v2347
      %v2373 = vpack.c.b16 %v2350, %v2349
      %v2374 = vpack.c.b16 %v2352, %v2351
      %v2375 = vpack.c.b16 %v2354, %v2353
      %v2376 = vpack.c.b16 %v2356, %v2355
      %v2377 = vpack.c.b16 %v2358, %v2357
      %v2378 = vpack.c.b16 %v2360, %v2359
      %v2379 = vpack.c.b16 %v2362, %v2361
      %v2380 = vpack.c.b16 %v2364, %v2363
      %v2413 = vunpack.c.l.b16 %v2317
      %v2414 = vunpack.c.l.b16 %v2318
      %v2415 = vunpack.c.l.b16 %v2319
      %v2416 = vunpack.c.l.b16 %v2320
      %v2417 = vunpack.c.l.b16 %v2321
      %v2418 = vunpack.c.l.b16 %v2322
      %v2419 = vunpack.c.l.b16 %v2323
      %v2420 = vunpack.c.l.b16 %v2324
      %v2421 = vunpack.c.l.b16 %v2325
      %v2422 = vunpack.c.l.b16 %v2326
      %v2423 = vunpack.c.l.b16 %v2327
      %v2424 = vunpack.c.l.b16 %v2328
      %v2425 = vunpack.c.l.b16 %v2329
      %v2426 = vunpack.c.l.b16 %v2330
      %v2427 = vunpack.c.l.b16 %v2331
      %v2428 = vunpack.c.l.b16 %v2332
      %v2429 = vpack.c.b16 %v2414, %v2413
      %v2430 = vpack.c.b16 %v2416, %v2415
      %v2431 = vpack.c.b16 %v2418, %v2417
      %v2432 = vpack.c.b16 %v2420, %v2419
      %v2433 = vpack.c.b16 %v2422, %v2421
      %v2434 = vpack.c.b16 %v2424, %v2423
      %v2435 = vpack.c.b16 %v2426, %v2425
      %v2436 = vpack.c.b16 %v2428, %v2427
      %2445 = vmatpush.bf16.msra.mxu0 %v2436
      %2446 = vmatpush.bf16.msra.mxu0 %v2435
      %2447 = vmatpush.bf16.msra.mxu0 %v2434
      %2448 = vmatpush.bf16.msra.mxu0 %v2433
      %2449 = vmatpush.bf16.msra.mxu0 %v2432
      %2450 = vmatpush.bf16.msra.mxu0 %v2431
      %2451 = vmatpush.bf16.msra.mxu0 %v2430
      %2452 = vmatpush.bf16.msra.mxu0 %v2429
      %2453 = vmatmul.bf16.gmra.mxu0 %v2365
      %v2454 = vpop.f32.mrf.mxu0
      %v2455 = vadd.f32 0.0, %v2454
      %v2456 = vpop.f32.mrf.mxu0
      %v2457 = vadd.f32 0.0, %v2456
      %2458 = vmatmul.bf16.gmra.mxu0 %v2366
      %v2459 = vpop.f32.mrf.mxu0
      %v2460 = vadd.f32 0.0, %v2459
      %v2461 = vpop.f32.mrf.mxu0
      %v2462 = vadd.f32 0.0, %v2461
      %2463 = vmatmul.bf16.gmra.mxu0 %v2367
      %v2464 = vpop.f32.mrf.mxu0
      %v2465 = vadd.f32 0.0, %v2464
      %v2466 = vpop.f32.mrf.mxu0
      %v2467 = vadd.f32 0.0, %v2466
      %2468 = vmatmul.bf16.gmra.mxu0 %v2368
      %v2469 = vpop.f32.mrf.mxu0
      %v2470 = vadd.f32 0.0, %v2469
      %v2471 = vpop.f32.mrf.mxu0
      %v2472 = vadd.f32 0.0, %v2471
      %2473 = vmatmul.bf16.gmra.mxu0 %v2369
      %v2474 = vpop.f32.mrf.mxu0
      %v2475 = vadd.f32 0.0, %v2474
      %v2476 = vpop.f32.mrf.mxu0
      %v2477 = vadd.f32 0.0, %v2476
      %2478 = vmatmul.bf16.gmra.mxu0 %v2370
      %v2479 = vpop.f32.mrf.mxu0
      %v2480 = vadd.f32 0.0, %v2479
      %v2481 = vpop.f32.mrf.mxu0
      %v2482 = vadd.f32 0.0, %v2481
      %2483 = vmatmul.bf16.gmra.mxu0 %v2371
      %v2484 = vpop.f32.mrf.mxu0
      %v2485 = vadd.f32 0.0, %v2484
      %v2486 = vpop.f32.mrf.mxu0
      %v2487 = vadd.f32 0.0, %v2486
      %2488 = vmatmul.bf16.gmra.mxu0 %v2372
      %v2489 = vpop.f32.mrf.mxu0
      %v2490 = vadd.f32 0.0, %v2489
      %v2491 = vpop.f32.mrf.mxu0
      %v2492 = vadd.f32 0.0, %v2491
      %2493 = vmatmul.bf16.gmra.mxu0 %v2373
      %v2494 = vpop.f32.mrf.mxu0
      %v2495 = vadd.f32 0.0, %v2494
      %v2496 = vpop.f32.mrf.mxu0
      %v2497 = vadd.f32 0.0, %v2496
      %2498 = vmatmul.bf16.gmra.mxu0 %v2374
      %v2499 = vpop.f32.mrf.mxu0
      %v2500 = vadd.f32 0.0, %v2499
      %v2501 = vpop.f32.mrf.mxu0
      %v2502 = vadd.f32 0.0, %v2501
      %2503 = vmatmul.bf16.gmra.mxu0 %v2375
      %v2504 = vpop.f32.mrf.mxu0
      %v2505 = vadd.f32 0.0, %v2504
      %v2506 = vpop.f32.mrf.mxu0
      %v2507 = vadd.f32 0.0, %v2506
      %2508 = vmatmul.bf16.gmra.mxu0 %v2376
      %v2509 = vpop.f32.mrf.mxu0
      %v2510 = vadd.f32 0.0, %v2509
      %v2511 = vpop.f32.mrf.mxu0
      %v2512 = vadd.f32 0.0, %v2511
      %2513 = vmatmul.bf16.gmra.mxu0 %v2377
      %v2514 = vpop.f32.mrf.mxu0
      %v2515 = vadd.f32 0.0, %v2514
      %v2516 = vpop.f32.mrf.mxu0
      %v2517 = vadd.f32 0.0, %v2516
      %2518 = vmatmul.bf16.gmra.mxu0 %v2378
      %v2519 = vpop.f32.mrf.mxu0
      %v2520 = vadd.f32 0.0, %v2519
      %v2521 = vpop.f32.mrf.mxu0
      %v2522 = vadd.f32 0.0, %v2521
      %2523 = vmatmul.bf16.gmra.mxu0 %v2379
      %v2524 = vpop.f32.mrf.mxu0
      %v2525 = vadd.f32 0.0, %v2524
      %v2526 = vpop.f32.mrf.mxu0
      %v2527 = vadd.f32 0.0, %v2526
      %2528 = vmatmul.bf16.gmra.mxu0 %v2380
      %v2529 = vpop.f32.mrf.mxu0
      %v2530 = vadd.f32 0.0, %v2529
      %v2531 = vpop.f32.mrf.mxu0
      %v2532 = vadd.f32 0.0, %v2531
      %2533 = vdwg.mxu0
      %v2534 = vadd.f32 %v1852, %v2455
      %v2535 = vadd.f32 %v1853, %v2457
      %v2536 = vadd.f32 %v1854, %v2460
      %v2537 = vadd.f32 %v1855, %v2462
      %v2538 = vadd.f32 %v1856, %v2465
      %v2539 = vadd.f32 %v1857, %v2467
      %v2540 = vadd.f32 %v1858, %v2470
      %v2541 = vadd.f32 %v1859, %v2472
      %v2542 = vadd.f32 %v1860, %v2475
      %v2543 = vadd.f32 %v1861, %v2477
      %v2544 = vadd.f32 %v1862, %v2480
      %v2545 = vadd.f32 %v1863, %v2482
      %v2546 = vadd.f32 %v1864, %v2485
      %v2547 = vadd.f32 %v1865, %v2487
      %v2548 = vadd.f32 %v1866, %v2490
      %v2549 = vadd.f32 %v1867, %v2492
      %v2550 = vadd.f32 %v1868, %v2495
      %v2551 = vadd.f32 %v1869, %v2497
      %v2552 = vadd.f32 %v1870, %v2500
      %v2553 = vadd.f32 %v1871, %v2502
      %v2554 = vadd.f32 %v1872, %v2505
      %v2555 = vadd.f32 %v1873, %v2507
      %v2556 = vadd.f32 %v1874, %v2510
      %v2557 = vadd.f32 %v1875, %v2512
      %v2558 = vadd.f32 %v1876, %v2515
      %v2559 = vadd.f32 %v1877, %v2517
      %v2560 = vadd.f32 %v1878, %v2520
      %v2561 = vadd.f32 %v1879, %v2522
      %v2562 = vadd.f32 %v1880, %v2525
      %v2563 = vadd.f32 %v1881, %v2527
      %v2564 = vadd.f32 %v1882, %v2530
      %v2565 = vadd.f32 %v1883, %v2532
      %v2566 = vld [vmem:[%s1569] sm:$0xe]
      %v2567 = vld [vmem:[%s1569 + $0xc] sm:$0xe]
      %v2568 = vld [vmem:[%s1569 + $0x18] sm:$0xe]
      %v2569 = vld [vmem:[%s1569 + $0x24] sm:$0xe]
      %v2570 = vld [vmem:[%s1569 + $0x30] sm:$0xe]
      %v2571 = vld [vmem:[%s1569 + $0x3c] sm:$0xe]
      %v2572 = vld [vmem:[%s1569 + $0x48] sm:$0xe]
      %v2573 = vld [vmem:[%s1569 + $0x54] sm:$0xe]
      %v2574 = vld [vmem:[%s1569 + $0x60] sm:$0xe]
      %v2575 = vld [vmem:[%s1569 + $0x6c] sm:$0xe]
      %v2576 = vld [vmem:[%s1569 + $0x78] sm:$0xe]
      %v2577 = vld [vmem:[%s1569 + $0x84] sm:$0xe]
      %v2578 = vld [vmem:[%s1569 + $0x90] sm:$0xe]
      %v2579 = vld [vmem:[%s1569 + $0x9c] sm:$0xe]
      %v2580 = vld [vmem:[%s1569 + $0xa8] sm:$0xe]
      %v2581 = vld [vmem:[%s1569 + $0xb4] sm:$0xe]
      %v2630 = vrot.slane %v2566, 5
      %v2631 = vrot.slane %v2630, 4
      %v2632 = vrot.slane %v1885, 5
      %v2633 = vsel %vm1206, %v2631, %v2632
      %v2634 = vrot.slane %v2632, 4
      %v2635 = vrot.slane %v1886, 5
      %v2636 = vsel %vm1206, %v2634, %v2635
      %v2637 = vrot.slane %v2567, 5
      %v2638 = vrot.slane %v2637, 4
      %v2639 = vrot.slane %v1888, 5
      %v2640 = vsel %vm1206, %v2638, %v2639
      %v2641 = vrot.slane %v2639, 4
      %v2642 = vrot.slane %v1889, 5
      %v2643 = vsel %vm1206, %v2641, %v2642
      %v2644 = vrot.slane %v2568, 5
      %v2645 = vrot.slane %v2644, 4
      %v2646 = vrot.slane %v1891, 5
      %v2647 = vsel %vm1206, %v2645, %v2646
      %v2648 = vrot.slane %v2646, 4
      %v2649 = vrot.slane %v1892, 5
      %v2650 = vsel %vm1206, %v2648, %v2649
      %v2651 = vrot.slane %v2569, 5
      %v2652 = vrot.slane %v2651, 4
      %v2653 = vrot.slane %v1894, 5
      %v2654 = vsel %vm1206, %v2652, %v2653
      %v2655 = vrot.slane %v2653, 4
      %v2656 = vrot.slane %v1895, 5
      %v2657 = vsel %vm1206, %v2655, %v2656
      %v2658 = vrot.slane %v2570, 5
      %v2659 = vrot.slane %v2658, 4
      %v2660 = vrot.slane %v1897, 5
      %v2661 = vsel %vm1206, %v2659, %v2660
      %v2662 = vrot.slane %v2660, 4
      %v2663 = vrot.slane %v1898, 5
      %v2664 = vsel %vm1206, %v2662, %v2663
      %v2665 = vrot.slane %v2571, 5
      %v2666 = vrot.slane %v2665, 4
      %v2667 = vrot.slane %v1900, 5
      %v2668 = vsel %vm1206, %v2666, %v2667
      %v2669 = vrot.slane %v2667, 4
      %v2670 = vrot.slane %v1901, 5
      %v2671 = vsel %vm1206, %v2669, %v2670
      %v2672 = vrot.slane %v2572, 5
      %v2673 = vrot.slane %v2672, 4
      %v2674 = vrot.slane %v1903, 5
      %v2675 = vsel %vm1206, %v2673, %v2674
      %v2676 = vrot.slane %v2674, 4
      %v2677 = vrot.slane %v1904, 5
      %v2678 = vsel %vm1206, %v2676, %v2677
      %v2679 = vrot.slane %v2573, 5
      %v2680 = vrot.slane %v2679, 4
      %v2681 = vrot.slane %v1906, 5
      %v2682 = vsel %vm1206, %v2680, %v2681
      %v2683 = vrot.slane %v2681, 4
      %v2684 = vrot.slane %v1907, 5
      %v2685 = vsel %vm1206, %v2683, %v2684
      %v2686 = vrot.slane %v2574, 5
      %v2687 = vrot.slane %v2686, 4
      %v2688 = vrot.slane %v1909, 5
      %v2689 = vsel %vm1206, %v2687, %v2688
      %v2690 = vrot.slane %v2688, 4
      %v2691 = vrot.slane %v1910, 5
      %v2692 = vsel %vm1206, %v2690, %v2691
      %v2693 = vrot.slane %v2575, 5
      %v2694 = vrot.slane %v2693, 4
      %v2695 = vrot.slane %v1912, 5
      %v2696 = vsel %vm1206, %v2694, %v2695
      %v2697 = vrot.slane %v2695, 4
      %v2698 = vrot.slane %v1913, 5
      %v2699 = vsel %vm1206, %v2697, %v2698
      %v2700 = vrot.slane %v2576, 5
      %v2701 = vrot.slane %v2700, 4
      %v2702 = vrot.slane %v1915, 5
      %v2703 = vsel %vm1206, %v2701, %v2702
      %v2704 = vrot.slane %v2702, 4
      %v2705 = vrot.slane %v1916, 5
      %v2706 = vsel %vm1206, %v2704, %v2705
      %v2707 = vrot.slane %v2577, 5
      %v2708 = vrot.slane %v2707, 4
      %v2709 = vrot.slane %v1918, 5
      %v2710 = vsel %vm1206, %v2708, %v2709
      %v2711 = vrot.slane %v2709, 4
      %v2712 = vrot.slane %v1919, 5
      %v2713 = vsel %vm1206, %v2711, %v2712
      %v2714 = vrot.slane %v2578, 5
      %v2715 = vrot.slane %v2714, 4
      %v2716 = vrot.slane %v1921, 5
      %v2717 = vsel %vm1206, %v2715, %v2716
      %v2718 = vrot.slane %v2716, 4
      %v2719 = vrot.slane %v1922, 5
      %v2720 = vsel %vm1206, %v2718, %v2719
      %v2721 = vrot.slane %v2579, 5
      %v2722 = vrot.slane %v2721, 4
      %v2723 = vrot.slane %v1924, 5
      %v2724 = vsel %vm1206, %v2722, %v2723
      %v2725 = vrot.slane %v2723, 4
      %v2726 = vrot.slane %v1925, 5
      %v2727 = vsel %vm1206, %v2725, %v2726
      %v2728 = vrot.slane %v2580, 5
      %v2729 = vrot.slane %v2728, 4
      %v2730 = vrot.slane %v1927, 5
      %v2731 = vsel %vm1206, %v2729, %v2730
      %v2732 = vrot.slane %v2730, 4
      %v2733 = vrot.slane %v1928, 5
      %v2734 = vsel %vm1206, %v2732, %v2733
      %v2735 = vrot.slane %v2581, 5
      %v2736 = vrot.slane %v2735, 4
      %v2737 = vrot.slane %v1930, 5
      %v2738 = vsel %vm1206, %v2736, %v2737
      %v2739 = vrot.slane %v2737, 4
      %v2740 = vrot.slane %v1931, 5
      %v2741 = vsel %vm1206, %v2739, %v2740
      %s2742 = scalar_lea.vmem %s1, 320
      %v2743 = vld [vmem:[%s2742] sm:$0xf]
      %v2744 = vld [vmem:[%s2742 + $0x4] sm:$0xf]
      %v2745 = vld [vmem:[%s2742 + $0x8] sm:$0xf]
      %v2746 = vld [vmem:[%s2742 + $0xc] sm:$0xf]
      %v2747 = vld [vmem:[%s2742 + $0x10] sm:$0xf]
      %v2748 = vld [vmem:[%s2742 + $0x14] sm:$0xf]
      %v2749 = vld [vmem:[%s2742 + $0x18] sm:$0xf]
      %v2750 = vld [vmem:[%s2742 + $0x1c] sm:$0xf]
      %v2751 = vld [vmem:[%s2742 + $0x20] sm:$0xf]
      %v2752 = vld [vmem:[%s2742 + $0x24] sm:$0xf]
      %v2753 = vld [vmem:[%s2742 + $0x28] sm:$0xf]
      %v2754 = vld [vmem:[%s2742 + $0x2c] sm:$0xf]
      %v2755 = vld [vmem:[%s2742 + $0x30] sm:$0xf]
      %v2756 = vld [vmem:[%s2742 + $0x34] sm:$0xf]
      %v2757 = vld [vmem:[%s2742 + $0x38] sm:$0xf]
      %v2758 = vld [vmem:[%s2742 + $0x3c] sm:$0xf]
      %v2759 = vunpack.c.l.b16 %v2633
      %v2760 = vunpack.c.l.b16 %v2636
      %v2761 = vunpack.c.l.b16 %v2640
      %v2762 = vunpack.c.l.b16 %v2643
      %v2763 = vunpack.c.l.b16 %v2647
      %v2764 = vunpack.c.l.b16 %v2650
      %v2765 = vunpack.c.l.b16 %v2654
      %v2766 = vunpack.c.l.b16 %v2657
      %v2767 = vunpack.c.l.b16 %v2661
      %v2768 = vunpack.c.l.b16 %v2664
      %v2769 = vunpack.c.l.b16 %v2668
      %v2770 = vunpack.c.l.b16 %v2671
      %v2771 = vunpack.c.l.b16 %v2675
      %v2772 = vunpack.c.l.b16 %v2678
      %v2773 = vunpack.c.l.b16 %v2682
      %v2774 = vunpack.c.l.b16 %v2685
      %v2775 = vunpack.c.l.b16 %v2689
      %v2776 = vunpack.c.l.b16 %v2692
      %v2777 = vunpack.c.l.b16 %v2696
      %v2778 = vunpack.c.l.b16 %v2699
      %v2779 = vunpack.c.l.b16 %v2703
      %v2780 = vunpack.c.l.b16 %v2706
      %v2781 = vunpack.c.l.b16 %v2710
      %v2782 = vunpack.c.l.b16 %v2713
      %v2783 = vunpack.c.l.b16 %v2717
      %v2784 = vunpack.c.l.b16 %v2720
      %v2785 = vunpack.c.l.b16 %v2724
      %v2786 = vunpack.c.l.b16 %v2727
      %v2787 = vunpack.c.l.b16 %v2731
      %v2788 = vunpack.c.l.b16 %v2734
      %v2789 = vunpack.c.l.b16 %v2738
      %v2790 = vunpack.c.l.b16 %v2741
      %v2791 = vpack.c.b16 %v2760, %v2759
      %v2792 = vpack.c.b16 %v2762, %v2761
      %v2793 = vpack.c.b16 %v2764, %v2763
      %v2794 = vpack.c.b16 %v2766, %v2765
      %v2795 = vpack.c.b16 %v2768, %v2767
      %v2796 = vpack.c.b16 %v2770, %v2769
      %v2797 = vpack.c.b16 %v2772, %v2771
      %v2798 = vpack.c.b16 %v2774, %v2773
      %v2799 = vpack.c.b16 %v2776, %v2775
      %v2800 = vpack.c.b16 %v2778, %v2777
      %v2801 = vpack.c.b16 %v2780, %v2779
      %v2802 = vpack.c.b16 %v2782, %v2781
      %v2803 = vpack.c.b16 %v2784, %v2783
      %v2804 = vpack.c.b16 %v2786, %v2785
      %v2805 = vpack.c.b16 %v2788, %v2787
      %v2806 = vpack.c.b16 %v2790, %v2789
      %v2839 = vunpack.c.l.b16 %v2743
      %v2840 = vunpack.c.l.b16 %v2744
      %v2841 = vunpack.c.l.b16 %v2745
      %v2842 = vunpack.c.l.b16 %v2746
      %v2843 = vunpack.c.l.b16 %v2747
      %v2844 = vunpack.c.l.b16 %v2748
      %v2845 = vunpack.c.l.b16 %v2749
      %v2846 = vunpack.c.l.b16 %v2750
      %v2847 = vunpack.c.l.b16 %v2751
      %v2848 = vunpack.c.l.b16 %v2752
      %v2849 = vunpack.c.l.b16 %v2753
      %v2850 = vunpack.c.l.b16 %v2754
      %v2851 = vunpack.c.l.b16 %v2755
      %v2852 = vunpack.c.l.b16 %v2756
      %v2853 = vunpack.c.l.b16 %v2757
      %v2854 = vunpack.c.l.b16 %v2758
      %v2855 = vpack.c.b16 %v2840, %v2839
      %v2856 = vpack.c.b16 %v2842, %v2841
      %v2857 = vpack.c.b16 %v2844, %v2843
      %v2858 = vpack.c.b16 %v2846, %v2845
      %v2859 = vpack.c.b16 %v2848, %v2847
      %v2860 = vpack.c.b16 %v2850, %v2849
      %v2861 = vpack.c.b16 %v2852, %v2851
      %v2862 = vpack.c.b16 %v2854, %v2853
      %2871 = vmatpush.bf16.msra.mxu0 %v2862
      %2872 = vmatpush.bf16.msra.mxu0 %v2861
      %2873 = vmatpush.bf16.msra.mxu0 %v2860
      %2874 = vmatpush.bf16.msra.mxu0 %v2859
      %2875 = vmatpush.bf16.msra.mxu0 %v2858
      %2876 = vmatpush.bf16.msra.mxu0 %v2857
      %2877 = vmatpush.bf16.msra.mxu0 %v2856
      %2878 = vmatpush.bf16.msra.mxu0 %v2855
      %2879 = vmatmul.bf16.gmra.mxu0 %v2791
      %v2880 = vpop.f32.mrf.mxu0
      %v2881 = vadd.f32 0.0, %v2880
      %v2882 = vpop.f32.mrf.mxu0
      %v2883 = vadd.f32 0.0, %v2882
      %2884 = vmatmul.bf16.gmra.mxu0 %v2792
      %v2885 = vpop.f32.mrf.mxu0
      %v2886 = vadd.f32 0.0, %v2885
      %v2887 = vpop.f32.mrf.mxu0
      %v2888 = vadd.f32 0.0, %v2887
      %2889 = vmatmul.bf16.gmra.mxu0 %v2793
      %v2890 = vpop.f32.mrf.mxu0
      %v2891 = vadd.f32 0.0, %v2890
      %v2892 = vpop.f32.mrf.mxu0
      %v2893 = vadd.f32 0.0, %v2892
      %2894 = vmatmul.bf16.gmra.mxu0 %v2794
      %v2895 = vpop.f32.mrf.mxu0
      %v2896 = vadd.f32 0.0, %v2895
      %v2897 = vpop.f32.mrf.mxu0
      %v2898 = vadd.f32 0.0, %v2897
      %2899 = vmatmul.bf16.gmra.mxu0 %v2795
      %v2900 = vpop.f32.mrf.mxu0
      %v2901 = vadd.f32 0.0, %v2900
      %v2902 = vpop.f32.mrf.mxu0
      %v2903 = vadd.f32 0.0, %v2902
      %2904 = vmatmul.bf16.gmra.mxu0 %v2796
      %v2905 = vpop.f32.mrf.mxu0
      %v2906 = vadd.f32 0.0, %v2905
      %v2907 = vpop.f32.mrf.mxu0
      %v2908 = vadd.f32 0.0, %v2907
      %2909 = vmatmul.bf16.gmra.mxu0 %v2797
      %v2910 = vpop.f32.mrf.mxu0
      %v2911 = vadd.f32 0.0, %v2910
      %v2912 = vpop.f32.mrf.mxu0
      %v2913 = vadd.f32 0.0, %v2912
      %2914 = vmatmul.bf16.gmra.mxu0 %v2798
      %v2915 = vpop.f32.mrf.mxu0
      %v2916 = vadd.f32 0.0, %v2915
      %v2917 = vpop.f32.mrf.mxu0
      %v2918 = vadd.f32 0.0, %v2917
      %2919 = vmatmul.bf16.gmra.mxu0 %v2799
      %v2920 = vpop.f32.mrf.mxu0
      %v2921 = vadd.f32 0.0, %v2920
      %v2922 = vpop.f32.mrf.mxu0
      %v2923 = vadd.f32 0.0, %v2922
      %2924 = vmatmul.bf16.gmra.mxu0 %v2800
      %v2925 = vpop.f32.mrf.mxu0
      %v2926 = vadd.f32 0.0, %v2925
      %v2927 = vpop.f32.mrf.mxu0
      %v2928 = vadd.f32 0.0, %v2927
      %2929 = vmatmul.bf16.gmra.mxu0 %v2801
      %v2930 = vpop.f32.mrf.mxu0
      %v2931 = vadd.f32 0.0, %v2930
      %v2932 = vpop.f32.mrf.mxu0
      %v2933 = vadd.f32 0.0, %v2932
      %2934 = vmatmul.bf16.gmra.mxu0 %v2802
      %v2935 = vpop.f32.mrf.mxu0
      %v2936 = vadd.f32 0.0, %v2935
      %v2937 = vpop.f32.mrf.mxu0
      %v2938 = vadd.f32 0.0, %v2937
      %2939 = vmatmul.bf16.gmra.mxu0 %v2803
      %v2940 = vpop.f32.mrf.mxu0
      %v2941 = vadd.f32 0.0, %v2940
      %v2942 = vpop.f32.mrf.mxu0
      %v2943 = vadd.f32 0.0, %v2942
      %2944 = vmatmul.bf16.gmra.mxu0 %v2804
      %v2945 = vpop.f32.mrf.mxu0
      %v2946 = vadd.f32 0.0, %v2945
      %v2947 = vpop.f32.mrf.mxu0
      %v2948 = vadd.f32 0.0, %v2947
      %2949 = vmatmul.bf16.gmra.mxu0 %v2805
      %v2950 = vpop.f32.mrf.mxu0
      %v2951 = vadd.f32 0.0, %v2950
      %v2952 = vpop.f32.mrf.mxu0
      %v2953 = vadd.f32 0.0, %v2952
      %2954 = vmatmul.bf16.gmra.mxu0 %v2806
      %v2955 = vpop.f32.mrf.mxu0
      %v2956 = vadd.f32 0.0, %v2955
      %v2957 = vpop.f32.mrf.mxu0
      %v2958 = vadd.f32 0.0, %v2957
      %2959 = vdwg.mxu0
      %v2960 = vadd.f32 %v2534, %v2881
      %v2961 = vadd.f32 %v2535, %v2883
      %v2962 = vadd.f32 %v2536, %v2886
      %v2963 = vadd.f32 %v2537, %v2888
      %v2964 = vadd.f32 %v2538, %v2891
      %v2965 = vadd.f32 %v2539, %v2893
      %v2966 = vadd.f32 %v2540, %v2896
      %v2967 = vadd.f32 %v2541, %v2898
      %v2968 = vadd.f32 %v2542, %v2901
      %v2969 = vadd.f32 %v2543, %v2903
      %v2970 = vadd.f32 %v2544, %v2906
      %v2971 = vadd.f32 %v2545, %v2908
      %v2972 = vadd.f32 %v2546, %v2911
      %v2973 = vadd.f32 %v2547, %v2913
      %v2974 = vadd.f32 %v2548, %v2916
      %v2975 = vadd.f32 %v2549, %v2918
      %v2976 = vadd.f32 %v2550, %v2921
      %v2977 = vadd.f32 %v2551, %v2923
      %v2978 = vadd.f32 %v2552, %v2926
      %v2979 = vadd.f32 %v2553, %v2928
      %v2980 = vadd.f32 %v2554, %v2931
      %v2981 = vadd.f32 %v2555, %v2933
      %v2982 = vadd.f32 %v2556, %v2936
      %v2983 = vadd.f32 %v2557, %v2938
      %v2984 = vadd.f32 %v2558, %v2941
      %v2985 = vadd.f32 %v2559, %v2943
      %v2986 = vadd.f32 %v2560, %v2946
      %v2987 = vadd.f32 %v2561, %v2948
      %v2988 = vadd.f32 %v2562, %v2951
      %v2989 = vadd.f32 %v2563, %v2953
      %v2990 = vadd.f32 %v2564, %v2956
      %v2991 = vadd.f32 %v2565, %v2958
      %s2992 = scalar_lea.vmem [#allocation2], 24
      %v2993 = vld [vmem:[%s2992] sm:$0xf]
      %v2994 = vld [vmem:[%s2992 + $0x4] sm:$0xf]
      %v2995 = vld [vmem:[%s2992 + $0xc] sm:$0xf]
      %v2996 = vld [vmem:[%s2992 + $0x10] sm:$0xf]
      %v2997 = vld [vmem:[%s2992 + $0x18] sm:$0xf]
      %v2998 = vld [vmem:[%s2992 + $0x1c] sm:$0xf]
      %v2999 = vld [vmem:[%s2992 + $0x24] sm:$0xf]
      %v3000 = vld [vmem:[%s2992 + $0x28] sm:$0xf]
      %v3001 = vld [vmem:[%s2992 + $0x30] sm:$0xf]
      %v3002 = vld [vmem:[%s2992 + $0x34] sm:$0xf]
      %v3003 = vld [vmem:[%s2992 + $0x3c] sm:$0xf]
      %v3004 = vld [vmem:[%s2992 + $0x40] sm:$0xf]
      %v3005 = vld [vmem:[%s2992 + $0x48] sm:$0xf]
      %v3006 = vld [vmem:[%s2992 + $0x4c] sm:$0xf]
      %v3007 = vld [vmem:[%s2992 + $0x54] sm:$0xf]
      %v3008 = vld [vmem:[%s2992 + $0x58] sm:$0xf]
      %v3009 = vld [vmem:[%s2992 + $0x60] sm:$0xf]
      %v3010 = vld [vmem:[%s2992 + $0x64] sm:$0xf]
      %v3011 = vld [vmem:[%s2992 + $0x6c] sm:$0xf]
      %v3012 = vld [vmem:[%s2992 + $0x70] sm:$0xf]
      %v3013 = vld [vmem:[%s2992 + $0x78] sm:$0xf]
      %v3014 = vld [vmem:[%s2992 + $0x7c] sm:$0xf]
      %v3015 = vld [vmem:[%s2992 + $0x84] sm:$0xf]
      %v3016 = vld [vmem:[%s2992 + $0x88] sm:$0xf]
      %v3017 = vld [vmem:[%s2992 + $0x90] sm:$0xf]
      %v3018 = vld [vmem:[%s2992 + $0x94] sm:$0xf]
      %v3019 = vld [vmem:[%s2992 + $0x9c] sm:$0xf]
      %v3020 = vld [vmem:[%s2992 + $0xa0] sm:$0xf]
      %v3021 = vld [vmem:[%s2992 + $0xa8] sm:$0xf]
      %v3022 = vld [vmem:[%s2992 + $0xac] sm:$0xf]
      %v3023 = vld [vmem:[%s2992 + $0xb4] sm:$0xf]
      %v3024 = vld [vmem:[%s2992 + $0xb8] sm:$0xf]
      %s3025 = scalar_lea.vmem %s1, 384
      %v3026 = vld [vmem:[%s3025] sm:$0xf]
      %v3027 = vld [vmem:[%s3025 + $0x4] sm:$0xf]
      %v3028 = vld [vmem:[%s3025 + $0x8] sm:$0xf]
      %v3029 = vld [vmem:[%s3025 + $0xc] sm:$0xf]
      %v3030 = vld [vmem:[%s3025 + $0x10] sm:$0xf]
      %v3031 = vld [vmem:[%s3025 + $0x14] sm:$0xf]
      %v3032 = vld [vmem:[%s3025 + $0x18] sm:$0xf]
      %v3033 = vld [vmem:[%s3025 + $0x1c] sm:$0xf]
      %v3034 = vld [vmem:[%s3025 + $0x20] sm:$0xf]
      %v3035 = vld [vmem:[%s3025 + $0x24] sm:$0xf]
      %v3036 = vld [vmem:[%s3025 + $0x28] sm:$0xf]
      %v3037 = vld [vmem:[%s3025 + $0x2c] sm:$0xf]
      %v3038 = vld [vmem:[%s3025 + $0x30] sm:$0xf]
      %v3039 = vld [vmem:[%s3025 + $0x34] sm:$0xf]
      %v3040 = vld [vmem:[%s3025 + $0x38] sm:$0xf]
      %v3041 = vld [vmem:[%s3025 + $0x3c] sm:$0xf]
      %v3074 = vunpack.c.l.b16 %v2993
      %v3075 = vunpack.c.l.b16 %v2994
      %v3076 = vunpack.c.l.b16 %v2995
      %v3077 = vunpack.c.l.b16 %v2996
      %v3078 = vunpack.c.l.b16 %v2997
      %v3079 = vunpack.c.l.b16 %v2998
      %v3080 = vunpack.c.l.b16 %v2999
      %v3081 = vunpack.c.l.b16 %v3000
      %v3082 = vunpack.c.l.b16 %v3001
      %v3083 = vunpack.c.l.b16 %v3002
      %v3084 = vunpack.c.l.b16 %v3003
      %v3085 = vunpack.c.l.b16 %v3004
      %v3086 = vunpack.c.l.b16 %v3005
      %v3087 = vunpack.c.l.b16 %v3006
      %v3088 = vunpack.c.l.b16 %v3007
      %v3089 = vunpack.c.l.b16 %v3008
      %v3090 = vunpack.c.l.b16 %v3009
      %v3091 = vunpack.c.l.b16 %v3010
      %v3092 = vunpack.c.l.b16 %v3011
      %v3093 = vunpack.c.l.b16 %v3012
      %v3094 = vunpack.c.l.b16 %v3013
      %v3095 = vunpack.c.l.b16 %v3014
      %v3096 = vunpack.c.l.b16 %v3015
      %v3097 = vunpack.c.l.b16 %v3016
      %v3098 = vunpack.c.l.b16 %v3017
      %v3099 = vunpack.c.l.b16 %v3018
      %v3100 = vunpack.c.l.b16 %v3019
      %v3101 = vunpack.c.l.b16 %v3020
      %v3102 = vunpack.c.l.b16 %v3021
      %v3103 = vunpack.c.l.b16 %v3022
      %v3104 = vunpack.c.l.b16 %v3023
      %v3105 = vunpack.c.l.b16 %v3024
      %v3106 = vpack.c.b16 %v3075, %v3074
      %v3107 = vpack.c.b16 %v3077, %v3076
      %v3108 = vpack.c.b16 %v3079, %v3078
      %v3109 = vpack.c.b16 %v3081, %v3080
      %v3110 = vpack.c.b16 %v3083, %v3082
      %v3111 = vpack.c.b16 %v3085, %v3084
      %v3112 = vpack.c.b16 %v3087, %v3086
      %v3113 = vpack.c.b16 %v3089, %v3088
      %v3114 = vpack.c.b16 %v3091, %v3090
      %v3115 = vpack.c.b16 %v3093, %v3092
      %v3116 = vpack.c.b16 %v3095, %v3094
      %v3117 = vpack.c.b16 %v3097, %v3096
      %v3118 = vpack.c.b16 %v3099, %v3098
      %v3119 = vpack.c.b16 %v3101, %v3100
      %v3120 = vpack.c.b16 %v3103, %v3102
      %v3121 = vpack.c.b16 %v3105, %v3104
      %v3154 = vunpack.c.l.b16 %v3026
      %v3155 = vunpack.c.l.b16 %v3027
      %v3156 = vunpack.c.l.b16 %v3028
      %v3157 = vunpack.c.l.b16 %v3029
      %v3158 = vunpack.c.l.b16 %v3030
      %v3159 = vunpack.c.l.b16 %v3031
      %v3160 = vunpack.c.l.b16 %v3032
      %v3161 = vunpack.c.l.b16 %v3033
      %v3162 = vunpack.c.l.b16 %v3034
      %v3163 = vunpack.c.l.b16 %v3035
      %v3164 = vunpack.c.l.b16 %v3036
      %v3165 = vunpack.c.l.b16 %v3037
      %v3166 = vunpack.c.l.b16 %v3038
      %v3167 = vunpack.c.l.b16 %v3039
      %v3168 = vunpack.c.l.b16 %v3040
      %v3169 = vunpack.c.l.b16 %v3041
      %v3170 = vpack.c.b16 %v3155, %v3154
      %v3171 = vpack.c.b16 %v3157, %v3156
      %v3172 = vpack.c.b16 %v3159, %v3158
      %v3173 = vpack.c.b16 %v3161, %v3160
      %v3174 = vpack.c.b16 %v3163, %v3162
      %v3175 = vpack.c.b16 %v3165, %v3164
      %v3176 = vpack.c.b16 %v3167, %v3166
      %v3177 = vpack.c.b16 %v3169, %v3168
      %3186 = vmatpush.bf16.msra.mxu0 %v3177
      %3187 = vmatpush.bf16.msra.mxu0 %v3176
      %3188 = vmatpush.bf16.msra.mxu0 %v3175
      %3189 = vmatpush.bf16.msra.mxu0 %v3174
      %3190 = vmatpush.bf16.msra.mxu0 %v3173
      %3191 = vmatpush.bf16.msra.mxu0 %v3172
      %3192 = vmatpush.bf16.msra.mxu0 %v3171
      %3193 = vmatpush.bf16.msra.mxu0 %v3170
      %3194 = vmatmul.bf16.gmra.mxu0 %v3106
      %v3195 = vpop.f32.mrf.mxu0
      %v3196 = vadd.f32 0.0, %v3195
      %v3197 = vpop.f32.mrf.mxu0
      %v3198 = vadd.f32 0.0, %v3197
      %3199 = vmatmul.bf16.gmra.mxu0 %v3107
      %v3200 = vpop.f32.mrf.mxu0
      %v3201 = vadd.f32 0.0, %v3200
      %v3202 = vpop.f32.mrf.mxu0
      %v3203 = vadd.f32 0.0, %v3202
      %3204 = vmatmul.bf16.gmra.mxu0 %v3108
      %v3205 = vpop.f32.mrf.mxu0
      %v3206 = vadd.f32 0.0, %v3205
      %v3207 = vpop.f32.mrf.mxu0
      %v3208 = vadd.f32 0.0, %v3207
      %3209 = vmatmul.bf16.gmra.mxu0 %v3109
      %v3210 = vpop.f32.mrf.mxu0
      %v3211 = vadd.f32 0.0, %v3210
      %v3212 = vpop.f32.mrf.mxu0
      %v3213 = vadd.f32 0.0, %v3212
      %3214 = vmatmul.bf16.gmra.mxu0 %v3110
      %v3215 = vpop.f32.mrf.mxu0
      %v3216 = vadd.f32 0.0, %v3215
      %v3217 = vpop.f32.mrf.mxu0
      %v3218 = vadd.f32 0.0, %v3217
      %3219 = vmatmul.bf16.gmra.mxu0 %v3111
      %v3220 = vpop.f32.mrf.mxu0
      %v3221 = vadd.f32 0.0, %v3220
      %v3222 = vpop.f32.mrf.mxu0
      %v3223 = vadd.f32 0.0, %v3222
      %3224 = vmatmul.bf16.gmra.mxu0 %v3112
      %v3225 = vpop.f32.mrf.mxu0
      %v3226 = vadd.f32 0.0, %v3225
      %v3227 = vpop.f32.mrf.mxu0
      %v3228 = vadd.f32 0.0, %v3227
      %3229 = vmatmul.bf16.gmra.mxu0 %v3113
      %v3230 = vpop.f32.mrf.mxu0
      %v3231 = vadd.f32 0.0, %v3230
      %v3232 = vpop.f32.mrf.mxu0
      %v3233 = vadd.f32 0.0, %v3232
      %3234 = vmatmul.bf16.gmra.mxu0 %v3114
      %v3235 = vpop.f32.mrf.mxu0
      %v3236 = vadd.f32 0.0, %v3235
      %v3237 = vpop.f32.mrf.mxu0
      %v3238 = vadd.f32 0.0, %v3237
      %3239 = vmatmul.bf16.gmra.mxu0 %v3115
      %v3240 = vpop.f32.mrf.mxu0
      %v3241 = vadd.f32 0.0, %v3240
      %v3242 = vpop.f32.mrf.mxu0
      %v3243 = vadd.f32 0.0, %v3242
      %3244 = vmatmul.bf16.gmra.mxu0 %v3116
      %v3245 = vpop.f32.mrf.mxu0
      %v3246 = vadd.f32 0.0, %v3245
      %v3247 = vpop.f32.mrf.mxu0
      %v3248 = vadd.f32 0.0, %v3247
      %3249 = vmatmul.bf16.gmra.mxu0 %v3117
      %v3250 = vpop.f32.mrf.mxu0
      %v3251 = vadd.f32 0.0, %v3250
      %v3252 = vpop.f32.mrf.mxu0
      %v3253 = vadd.f32 0.0, %v3252
      %3254 = vmatmul.bf16.gmra.mxu0 %v3118
      %v3255 = vpop.f32.mrf.mxu0
      %v3256 = vadd.f32 0.0, %v3255
      %v3257 = vpop.f32.mrf.mxu0
      %v3258 = vadd.f32 0.0, %v3257
      %3259 = vmatmul.bf16.gmra.mxu0 %v3119
      %v3260 = vpop.f32.mrf.mxu0
      %v3261 = vadd.f32 0.0, %v3260
      %v3262 = vpop.f32.mrf.mxu0
      %v3263 = vadd.f32 0.0, %v3262
      %3264 = vmatmul.bf16.gmra.mxu0 %v3120
      %v3265 = vpop.f32.mrf.mxu0
      %v3266 = vadd.f32 0.0, %v3265
      %v3267 = vpop.f32.mrf.mxu0
      %v3268 = vadd.f32 0.0, %v3267
      %3269 = vmatmul.bf16.gmra.mxu0 %v3121
      %v3270 = vpop.f32.mrf.mxu0
      %v3271 = vadd.f32 0.0, %v3270
      %v3272 = vpop.f32.mrf.mxu0
      %v3273 = vadd.f32 0.0, %v3272
      %3274 = vdwg.mxu0
      %v3275 = vadd.f32 %v2960, %v3196
      %v3276 = vadd.f32 %v2961, %v3198
      %v3277 = vadd.f32 %v2962, %v3201
      %v3278 = vadd.f32 %v2963, %v3203
      %v3279 = vadd.f32 %v2964, %v3206
      %v3280 = vadd.f32 %v2965, %v3208
      %v3281 = vadd.f32 %v2966, %v3211
      %v3282 = vadd.f32 %v2967, %v3213
      %v3283 = vadd.f32 %v2968, %v3216
      %v3284 = vadd.f32 %v2969, %v3218
      %v3285 = vadd.f32 %v2970, %v3221
      %v3286 = vadd.f32 %v2971, %v3223
      %v3287 = vadd.f32 %v2972, %v3226
      %v3288 = vadd.f32 %v2973, %v3228
      %v3289 = vadd.f32 %v2974, %v3231
      %v3290 = vadd.f32 %v2975, %v3233
      %v3291 = vadd.f32 %v2976, %v3236
      %v3292 = vadd.f32 %v2977, %v3238
      %v3293 = vadd.f32 %v2978, %v3241
      %v3294 = vadd.f32 %v2979, %v3243
      %v3295 = vadd.f32 %v2980, %v3246
      %v3296 = vadd.f32 %v2981, %v3248
      %v3297 = vadd.f32 %v2982, %v3251
      %v3298 = vadd.f32 %v2983, %v3253
      %v3299 = vadd.f32 %v2984, %v3256
      %v3300 = vadd.f32 %v2985, %v3258
      %v3301 = vadd.f32 %v2986, %v3261
      %v3302 = vadd.f32 %v2987, %v3263
      %v3303 = vadd.f32 %v2988, %v3266
      %v3304 = vadd.f32 %v2989, %v3268
      %v3305 = vadd.f32 %v2990, %v3271
      %v3306 = vadd.f32 %v2991, %v3273
      %v3307 = vld [vmem:[%s2992] sm:$0xf]
      %v3308 = vld [vmem:[%s2992 + $0x4] sm:$0xf]
      %v3309 = vld [vmem:[%s2992 + $0x8] sm:$0x1]
      %v3310 = vld [vmem:[%s2992 + $0xc] sm:$0xf]
      %v3311 = vld [vmem:[%s2992 + $0x10] sm:$0xf]
      %v3312 = vld [vmem:[%s2992 + $0x14] sm:$0x1]
      %v3313 = vld [vmem:[%s2992 + $0x18] sm:$0xf]
      %v3314 = vld [vmem:[%s2992 + $0x1c] sm:$0xf]
      %v3315 = vld [vmem:[%s2992 + $0x20] sm:$0x1]
      %v3316 = vld [vmem:[%s2992 + $0x24] sm:$0xf]
      %v3317 = vld [vmem:[%s2992 + $0x28] sm:$0xf]
      %v3318 = vld [vmem:[%s2992 + $0x2c] sm:$0x1]
      %v3319 = vld [vmem:[%s2992 + $0x30] sm:$0xf]
      %v3320 = vld [vmem:[%s2992 + $0x34] sm:$0xf]
      %v3321 = vld [vmem:[%s2992 + $0x38] sm:$0x1]
      %v3322 = vld [vmem:[%s2992 + $0x3c] sm:$0xf]
      %v3323 = vld [vmem:[%s2992 + $0x40] sm:$0xf]
      %v3324 = vld [vmem:[%s2992 + $0x44] sm:$0x1]
      %v3325 = vld [vmem:[%s2992 + $0x48] sm:$0xf]
      %v3326 = vld [vmem:[%s2992 + $0x4c] sm:$0xf]
      %v3327 = vld [vmem:[%s2992 + $0x50] sm:$0x1]
      %v3328 = vld [vmem:[%s2992 + $0x54] sm:$0xf]
      %v3329 = vld [vmem:[%s2992 + $0x58] sm:$0xf]
      %v3330 = vld [vmem:[%s2992 + $0x5c] sm:$0x1]
      %v3331 = vld [vmem:[%s2992 + $0x60] sm:$0xf]
      %v3332 = vld [vmem:[%s2992 + $0x64] sm:$0xf]
      %v3333 = vld [vmem:[%s2992 + $0x68] sm:$0x1]
      %v3334 = vld [vmem:[%s2992 + $0x6c] sm:$0xf]
      %v3335 = vld [vmem:[%s2992 + $0x70] sm:$0xf]
      %v3336 = vld [vmem:[%s2992 + $0x74] sm:$0x1]
      %v3337 = vld [vmem:[%s2992 + $0x78] sm:$0xf]
      %v3338 = vld [vmem:[%s2992 + $0x7c] sm:$0xf]
      %v3339 = vld [vmem:[%s2992 + $0x80] sm:$0x1]
      %v3340 = vld [vmem:[%s2992 + $0x84] sm:$0xf]
      %v3341 = vld [vmem:[%s2992 + $0x88] sm:$0xf]
      %v3342 = vld [vmem:[%s2992 + $0x8c] sm:$0x1]
      %v3343 = vld [vmem:[%s2992 + $0x90] sm:$0xf]
      %v3344 = vld [vmem:[%s2992 + $0x94] sm:$0xf]
      %v3345 = vld [vmem:[%s2992 + $0x98] sm:$0x1]
      %v3346 = vld [vmem:[%s2992 + $0x9c] sm:$0xf]
      %v3347 = vld [vmem:[%s2992 + $0xa0] sm:$0xf]
      %v3348 = vld [vmem:[%s2992 + $0xa4] sm:$0x1]
      %v3349 = vld [vmem:[%s2992 + $0xa8] sm:$0xf]
      %v3350 = vld [vmem:[%s2992 + $0xac] sm:$0xf]
      %v3351 = vld [vmem:[%s2992 + $0xb0] sm:$0x1]
      %v3352 = vld [vmem:[%s2992 + $0xb4] sm:$0xf]
      %v3353 = vld [vmem:[%s2992 + $0xb8] sm:$0xf]
      %v3354 = vld [vmem:[%s2992 + $0xbc] sm:$0x1]
      %v3356 = vshrl.u32 %v3307, 16
      %v3358 = vrot.slane %v3356, 4
      %v3359 = vshll.u32 %v3307, 16
      %v3361 = vrot.slane %v3359, 5
      %v3362 = vor.u32 %v3358, %v3361
      %v3363 = vrot.slane %v3362, 4
      %v3365 = vshll.u32 %v3308, 16
      %v3367 = vrot.slane %v3365, 5
      %v3368 = vsel %vm320, %v3363, %v3367
      %v3369 = vshrl.u32 %v3308, 16
      %v3371 = vrot.slane %v3369, 4
      %v3372 = vor.u32 %v3371, %v3367
      %v3373 = vrot.slane %v3372, 4
      %v3375 = vshll.u32 %v3309, 16
      %v3377 = vrot.slane %v3375, 5
      %v3378 = vsel %vm320, %v3373, %v3377
      %v3380 = vshrl.u32 %v3310, 16
      %v3382 = vrot.slane %v3380, 4
      %v3383 = vshll.u32 %v3310, 16
      %v3385 = vrot.slane %v3383, 5
      %v3386 = vor.u32 %v3382, %v3385
      %v3387 = vrot.slane %v3386, 4
      %v3389 = vshll.u32 %v3311, 16
      %v3391 = vrot.slane %v3389, 5
      %v3392 = vsel %vm320, %v3387, %v3391
      %v3393 = vshrl.u32 %v3311, 16
      %v3395 = vrot.slane %v3393, 4
      %v3396 = vor.u32 %v3395, %v3391
      %v3397 = vrot.slane %v3396, 4
      %v3399 = vshll.u32 %v3312, 16
      %v3401 = vrot.slane %v3399, 5
      %v3402 = vsel %vm320, %v3397, %v3401
      %v3404 = vshrl.u32 %v3313, 16
      %v3406 = vrot.slane %v3404, 4
      %v3407 = vshll.u32 %v3313, 16
      %v3409 = vrot.slane %v3407, 5
      %v3410 = vor.u32 %v3406, %v3409
      %v3411 = vrot.slane %v3410, 4
      %v3413 = vshll.u32 %v3314, 16
      %v3415 = vrot.slane %v3413, 5
      %v3416 = vsel %vm320, %v3411, %v3415
      %v3417 = vshrl.u32 %v3314, 16
      %v3419 = vrot.slane %v3417, 4
      %v3420 = vor.u32 %v3419, %v3415
      %v3421 = vrot.slane %v3420, 4
      %v3423 = vshll.u32 %v3315, 16
      %v3425 = vrot.slane %v3423, 5
      %v3426 = vsel %vm320, %v3421, %v3425
      %v3428 = vshrl.u32 %v3316, 16
      %v3430 = vrot.slane %v3428, 4
      %v3431 = vshll.u32 %v3316, 16
      %v3433 = vrot.slane %v3431, 5
      %v3434 = vor.u32 %v3430, %v3433
      %v3435 = vrot.slane %v3434, 4
      %v3437 = vshll.u32 %v3317, 16
      %v3439 = vrot.slane %v3437, 5
      %v3440 = vsel %vm320, %v3435, %v3439
      %v3441 = vshrl.u32 %v3317, 16
      %v3443 = vrot.slane %v3441, 4
      %v3444 = vor.u32 %v3443, %v3439
      %v3445 = vrot.slane %v3444, 4
      %v3447 = vshll.u32 %v3318, 16
      %v3449 = vrot.slane %v3447, 5
      %v3450 = vsel %vm320, %v3445, %v3449
      %v3452 = vshrl.u32 %v3319, 16
      %v3454 = vrot.slane %v3452, 4
      %v3455 = vshll.u32 %v3319, 16
      %v3457 = vrot.slane %v3455, 5
      %v3458 = vor.u32 %v3454, %v3457
      %v3459 = vrot.slane %v3458, 4
      %v3461 = vshll.u32 %v3320, 16
      %v3463 = vrot.slane %v3461, 5
      %v3464 = vsel %vm320, %v3459, %v3463
      %v3465 = vshrl.u32 %v3320, 16
      %v3467 = vrot.slane %v3465, 4
      %v3468 = vor.u32 %v3467, %v3463
      %v3469 = vrot.slane %v3468, 4
      %v3471 = vshll.u32 %v3321, 16
      %v3473 = vrot.slane %v3471, 5
      %v3474 = vsel %vm320, %v3469, %v3473
      %v3476 = vshrl.u32 %v3322, 16
      %v3478 = vrot.slane %v3476, 4
      %v3479 = vshll.u32 %v3322, 16
      %v3481 = vrot.slane %v3479, 5
      %v3482 = vor.u32 %v3478, %v3481
      %v3483 = vrot.slane %v3482, 4
      %v3485 = vshll.u32 %v3323, 16
      %v3487 = vrot.slane %v3485, 5
      %v3488 = vsel %vm320, %v3483, %v3487
      %v3489 = vshrl.u32 %v3323, 16
      %v3491 = vrot.slane %v3489, 4
      %v3492 = vor.u32 %v3491, %v3487
      %v3493 = vrot.slane %v3492, 4
      %v3495 = vshll.u32 %v3324, 16
      %v3497 = vrot.slane %v3495, 5
      %v3498 = vsel %vm320, %v3493, %v3497
      %v3500 = vshrl.u32 %v3325, 16
      %v3502 = vrot.slane %v3500, 4
      %v3503 = vshll.u32 %v3325, 16
      %v3505 = vrot.slane %v3503, 5
      %v3506 = vor.u32 %v3502, %v3505
      %v3507 = vrot.slane %v3506, 4
      %v3509 = vshll.u32 %v3326, 16
      %v3511 = vrot.slane %v3509, 5
      %v3512 = vsel %vm320, %v3507, %v3511
      %v3513 = vshrl.u32 %v3326, 16
      %v3515 = vrot.slane %v3513, 4
      %v3516 = vor.u32 %v3515, %v3511
      %v3517 = vrot.slane %v3516, 4
      %v3519 = vshll.u32 %v3327, 16
      %v3521 = vrot.slane %v3519, 5
      %v3522 = vsel %vm320, %v3517, %v3521
      %v3524 = vshrl.u32 %v3328, 16
      %v3526 = vrot.slane %v3524, 4
      %v3527 = vshll.u32 %v3328, 16
      %v3529 = vrot.slane %v3527, 5
      %v3530 = vor.u32 %v3526, %v3529
      %v3531 = vrot.slane %v3530, 4
      %v3533 = vshll.u32 %v3329, 16
      %v3535 = vrot.slane %v3533, 5
      %v3536 = vsel %vm320, %v3531, %v3535
      %v3537 = vshrl.u32 %v3329, 16
      %v3539 = vrot.slane %v3537, 4
      %v3540 = vor.u32 %v3539, %v3535
      %v3541 = vrot.slane %v3540, 4
      %v3543 = vshll.u32 %v3330, 16
      %v3545 = vrot.slane %v3543, 5
      %v3546 = vsel %vm320, %v3541, %v3545
      %v3548 = vshrl.u32 %v3331, 16
      %v3550 = vrot.slane %v3548, 4
      %v3551 = vshll.u32 %v3331, 16
      %v3553 = vrot.slane %v3551, 5
      %v3554 = vor.u32 %v3550, %v3553
      %v3555 = vrot.slane %v3554, 4
      %v3557 = vshll.u32 %v3332, 16
      %v3559 = vrot.slane %v3557, 5
      %v3560 = vsel %vm320, %v3555, %v3559
      %v3561 = vshrl.u32 %v3332, 16
      %v3563 = vrot.slane %v3561, 4
      %v3564 = vor.u32 %v3563, %v3559
      %v3565 = vrot.slane %v3564, 4
      %v3567 = vshll.u32 %v3333, 16
      %v3569 = vrot.slane %v3567, 5
      %v3570 = vsel %vm320, %v3565, %v3569
      %v3572 = vshrl.u32 %v3334, 16
      %v3574 = vrot.slane %v3572, 4
      %v3575 = vshll.u32 %v3334, 16
      %v3577 = vrot.slane %v3575, 5
      %v3578 = vor.u32 %v3574, %v3577
      %v3579 = vrot.slane %v3578, 4
      %v3581 = vshll.u32 %v3335, 16
      %v3583 = vrot.slane %v3581, 5
      %v3584 = vsel %vm320, %v3579, %v3583
      %v3585 = vshrl.u32 %v3335, 16
      %v3587 = vrot.slane %v3585, 4
      %v3588 = vor.u32 %v3587, %v3583
      %v3589 = vrot.slane %v3588, 4
      %v3591 = vshll.u32 %v3336, 16
      %v3593 = vrot.slane %v3591, 5
      %v3594 = vsel %vm320, %v3589, %v3593
      %v3596 = vshrl.u32 %v3337, 16
      %v3598 = vrot.slane %v3596, 4
      %v3599 = vshll.u32 %v3337, 16
      %v3601 = vrot.slane %v3599, 5
      %v3602 = vor.u32 %v3598, %v3601
      %v3603 = vrot.slane %v3602, 4
      %v3605 = vshll.u32 %v3338, 16
      %v3607 = vrot.slane %v3605, 5
      %v3608 = vsel %vm320, %v3603, %v3607
      %v3609 = vshrl.u32 %v3338, 16
      %v3611 = vrot.slane %v3609, 4
      %v3612 = vor.u32 %v3611, %v3607
      %v3613 = vrot.slane %v3612, 4
      %v3615 = vshll.u32 %v3339, 16
      %v3617 = vrot.slane %v3615, 5
      %v3618 = vsel %vm320, %v3613, %v3617
      %v3620 = vshrl.u32 %v3340, 16
      %v3622 = vrot.slane %v3620, 4
      %v3623 = vshll.u32 %v3340, 16
      %v3625 = vrot.slane %v3623, 5
      %v3626 = vor.u32 %v3622, %v3625
      %v3627 = vrot.slane %v3626, 4
      %v3629 = vshll.u32 %v3341, 16
      %v3631 = vrot.slane %v3629, 5
      %v3632 = vsel %vm320, %v3627, %v3631
      %v3633 = vshrl.u32 %v3341, 16
      %v3635 = vrot.slane %v3633, 4
      %v3636 = vor.u32 %v3635, %v3631
      %v3637 = vrot.slane %v3636, 4
      %v3639 = vshll.u32 %v3342, 16
      %v3641 = vrot.slane %v3639, 5
      %v3642 = vsel %vm320, %v3637, %v3641
      %v3644 = vshrl.u32 %v3343, 16
      %v3646 = vrot.slane %v3644, 4
      %v3647 = vshll.u32 %v3343, 16
      %v3649 = vrot.slane %v3647, 5
      %v3650 = vor.u32 %v3646, %v3649
      %v3651 = vrot.slane %v3650, 4
      %v3653 = vshll.u32 %v3344, 16
      %v3655 = vrot.slane %v3653, 5
      %v3656 = vsel %vm320, %v3651, %v3655
      %v3657 = vshrl.u32 %v3344, 16
      %v3659 = vrot.slane %v3657, 4
      %v3660 = vor.u32 %v3659, %v3655
      %v3661 = vrot.slane %v3660, 4
      %v3663 = vshll.u32 %v3345, 16
      %v3665 = vrot.slane %v3663, 5
      %v3666 = vsel %vm320, %v3661, %v3665
      %v3668 = vshrl.u32 %v3346, 16
      %v3670 = vrot.slane %v3668, 4
      %v3671 = vshll.u32 %v3346, 16
      %v3673 = vrot.slane %v3671, 5
      %v3674 = vor.u32 %v3670, %v3673
      %v3675 = vrot.slane %v3674, 4
      %v3677 = vshll.u32 %v3347, 16
      %v3679 = vrot.slane %v3677, 5
      %v3680 = vsel %vm320, %v3675, %v3679
      %v3681 = vshrl.u32 %v3347, 16
      %v3683 = vrot.slane %v3681, 4
      %v3684 = vor.u32 %v3683, %v3679
      %v3685 = vrot.slane %v3684, 4
      %v3687 = vshll.u32 %v3348, 16
      %v3689 = vrot.slane %v3687, 5
      %v3690 = vsel %vm320, %v3685, %v3689
      %v3692 = vshrl.u32 %v3349, 16
      %v3694 = vrot.slane %v3692, 4
      %v3695 = vshll.u32 %v3349, 16
      %v3697 = vrot.slane %v3695, 5
      %v3698 = vor.u32 %v3694, %v3697
      %v3699 = vrot.slane %v3698, 4
      %v3701 = vshll.u32 %v3350, 16
      %v3703 = vrot.slane %v3701, 5
      %v3704 = vsel %vm320, %v3699, %v3703
      %v3705 = vshrl.u32 %v3350, 16
      %v3707 = vrot.slane %v3705, 4
      %v3708 = vor.u32 %v3707, %v3703
      %v3709 = vrot.slane %v3708, 4
      %v3711 = vshll.u32 %v3351, 16
      %v3713 = vrot.slane %v3711, 5
      %v3714 = vsel %vm320, %v3709, %v3713
      %v3716 = vshrl.u32 %v3352, 16
      %v3718 = vrot.slane %v3716, 4
      %v3719 = vshll.u32 %v3352, 16
      %v3721 = vrot.slane %v3719, 5
      %v3722 = vor.u32 %v3718, %v3721
      %v3723 = vrot.slane %v3722, 4
      %v3725 = vshll.u32 %v3353, 16
      %v3727 = vrot.slane %v3725, 5
      %v3728 = vsel %vm320, %v3723, %v3727
      %v3729 = vshrl.u32 %v3353, 16
      %v3731 = vrot.slane %v3729, 4
      %v3732 = vor.u32 %v3731, %v3727
      %v3733 = vrot.slane %v3732, 4
      %v3735 = vshll.u32 %v3354, 16
      %v3737 = vrot.slane %v3735, 5
      %v3738 = vsel %vm320, %v3733, %v3737
      %s3739 = scalar_lea.vmem %s1, 448
      %v3740 = vld [vmem:[%s3739] sm:$0xf]
      %v3741 = vld [vmem:[%s3739 + $0x4] sm:$0xf]
      %v3742 = vld [vmem:[%s3739 + $0x8] sm:$0xf]
      %v3743 = vld [vmem:[%s3739 + $0xc] sm:$0xf]
      %v3744 = vld [vmem:[%s3739 + $0x10] sm:$0xf]
      %v3745 = vld [vmem:[%s3739 + $0x14] sm:$0xf]
      %v3746 = vld [vmem:[%s3739 + $0x18] sm:$0xf]
      %v3747 = vld [vmem:[%s3739 + $0x1c] sm:$0xf]
      %v3748 = vld [vmem:[%s3739 + $0x20] sm:$0xf]
      %v3749 = vld [vmem:[%s3739 + $0x24] sm:$0xf]
      %v3750 = vld [vmem:[%s3739 + $0x28] sm:$0xf]
      %v3751 = vld [vmem:[%s3739 + $0x2c] sm:$0xf]
      %v3752 = vld [vmem:[%s3739 + $0x30] sm:$0xf]
      %v3753 = vld [vmem:[%s3739 + $0x34] sm:$0xf]
      %v3754 = vld [vmem:[%s3739 + $0x38] sm:$0xf]
      %v3755 = vld [vmem:[%s3739 + $0x3c] sm:$0xf]
      %v3756 = vunpack.c.l.b16 %v3368
      %v3757 = vunpack.c.l.b16 %v3378
      %v3758 = vunpack.c.l.b16 %v3392
      %v3759 = vunpack.c.l.b16 %v3402
      %v3760 = vunpack.c.l.b16 %v3416
      %v3761 = vunpack.c.l.b16 %v3426
      %v3762 = vunpack.c.l.b16 %v3440
      %v3763 = vunpack.c.l.b16 %v3450
      %v3764 = vunpack.c.l.b16 %v3464
      %v3765 = vunpack.c.l.b16 %v3474
      %v3766 = vunpack.c.l.b16 %v3488
      %v3767 = vunpack.c.l.b16 %v3498
      %v3768 = vunpack.c.l.b16 %v3512
      %v3769 = vunpack.c.l.b16 %v3522
      %v3770 = vunpack.c.l.b16 %v3536
      %v3771 = vunpack.c.l.b16 %v3546
      %v3772 = vunpack.c.l.b16 %v3560
      %v3773 = vunpack.c.l.b16 %v3570
      %v3774 = vunpack.c.l.b16 %v3584
      %v3775 = vunpack.c.l.b16 %v3594
      %v3776 = vunpack.c.l.b16 %v3608
      %v3777 = vunpack.c.l.b16 %v3618
      %v3778 = vunpack.c.l.b16 %v3632
      %v3779 = vunpack.c.l.b16 %v3642
      %v3780 = vunpack.c.l.b16 %v3656
      %v3781 = vunpack.c.l.b16 %v3666
      %v3782 = vunpack.c.l.b16 %v3680
      %v3783 = vunpack.c.l.b16 %v3690
      %v3784 = vunpack.c.l.b16 %v3704
      %v3785 = vunpack.c.l.b16 %v3714
      %v3786 = vunpack.c.l.b16 %v3728
      %v3787 = vunpack.c.l.b16 %v3738
      %v3788 = vpack.c.b16 %v3757, %v3756
      %v3789 = vpack.c.b16 %v3759, %v3758
      %v3790 = vpack.c.b16 %v3761, %v3760
      %v3791 = vpack.c.b16 %v3763, %v3762
      %v3792 = vpack.c.b16 %v3765, %v3764
      %v3793 = vpack.c.b16 %v3767, %v3766
      %v3794 = vpack.c.b16 %v3769, %v3768
      %v3795 = vpack.c.b16 %v3771, %v3770
      %v3796 = vpack.c.b16 %v3773, %v3772
      %v3797 = vpack.c.b16 %v3775, %v3774
      %v3798 = vpack.c.b16 %v3777, %v3776
      %v3799 = vpack.c.b16 %v3779, %v3778
      %v3800 = vpack.c.b16 %v3781, %v3780
      %v3801 = vpack.c.b16 %v3783, %v3782
      %v3802 = vpack.c.b16 %v3785, %v3784
      %v3803 = vpack.c.b16 %v3787, %v3786
      %v3836 = vunpack.c.l.b16 %v3740
      %v3837 = vunpack.c.l.b16 %v3741
      %v3838 = vunpack.c.l.b16 %v3742
      %v3839 = vunpack.c.l.b16 %v3743
      %v3840 = vunpack.c.l.b16 %v3744
      %v3841 = vunpack.c.l.b16 %v3745
      %v3842 = vunpack.c.l.b16 %v3746
      %v3843 = vunpack.c.l.b16 %v3747
      %v3844 = vunpack.c.l.b16 %v3748
      %v3845 = vunpack.c.l.b16 %v3749
      %v3846 = vunpack.c.l.b16 %v3750
      %v3847 = vunpack.c.l.b16 %v3751
      %v3848 = vunpack.c.l.b16 %v3752
      %v3849 = vunpack.c.l.b16 %v3753
      %v3850 = vunpack.c.l.b16 %v3754
      %v3851 = vunpack.c.l.b16 %v3755
      %v3852 = vpack.c.b16 %v3837, %v3836
      %v3853 = vpack.c.b16 %v3839, %v3838
      %v3854 = vpack.c.b16 %v3841, %v3840
      %v3855 = vpack.c.b16 %v3843, %v3842
      %v3856 = vpack.c.b16 %v3845, %v3844
      %v3857 = vpack.c.b16 %v3847, %v3846
      %v3858 = vpack.c.b16 %v3849, %v3848
      %v3859 = vpack.c.b16 %v3851, %v3850
      %3868 = vmatpush.bf16.msra.mxu0 %v3859
      %3869 = vmatpush.bf16.msra.mxu0 %v3858
      %3870 = vmatpush.bf16.msra.mxu0 %v3857
      %3871 = vmatpush.bf16.msra.mxu0 %v3856
      %3872 = vmatpush.bf16.msra.mxu0 %v3855
      %3873 = vmatpush.bf16.msra.mxu0 %v3854
      %3874 = vmatpush.bf16.msra.mxu0 %v3853
      %3875 = vmatpush.bf16.msra.mxu0 %v3852
      %3876 = vmatmul.bf16.gmra.mxu0 %v3788
      %v3877 = vpop.f32.mrf.mxu0
      %v3878 = vadd.f32 0.0, %v3877
      %v3879 = vpop.f32.mrf.mxu0
      %v3880 = vadd.f32 0.0, %v3879
      %3881 = vmatmul.bf16.gmra.mxu0 %v3789
      %v3882 = vpop.f32.mrf.mxu0
      %v3883 = vadd.f32 0.0, %v3882
      %v3884 = vpop.f32.mrf.mxu0
      %v3885 = vadd.f32 0.0, %v3884
      %3886 = vmatmul.bf16.gmra.mxu0 %v3790
      %v3887 = vpop.f32.mrf.mxu0
      %v3888 = vadd.f32 0.0, %v3887
      %v3889 = vpop.f32.mrf.mxu0
      %v3890 = vadd.f32 0.0, %v3889
      %3891 = vmatmul.bf16.gmra.mxu0 %v3791
      %v3892 = vpop.f32.mrf.mxu0
      %v3893 = vadd.f32 0.0, %v3892
      %v3894 = vpop.f32.mrf.mxu0
      %v3895 = vadd.f32 0.0, %v3894
      %3896 = vmatmul.bf16.gmra.mxu0 %v3792
      %v3897 = vpop.f32.mrf.mxu0
      %v3898 = vadd.f32 0.0, %v3897
      %v3899 = vpop.f32.mrf.mxu0
      %v3900 = vadd.f32 0.0, %v3899
      %3901 = vmatmul.bf16.gmra.mxu0 %v3793
      %v3902 = vpop.f32.mrf.mxu0
      %v3903 = vadd.f32 0.0, %v3902
      %v3904 = vpop.f32.mrf.mxu0
      %v3905 = vadd.f32 0.0, %v3904
      %3906 = vmatmul.bf16.gmra.mxu0 %v3794
      %v3907 = vpop.f32.mrf.mxu0
      %v3908 = vadd.f32 0.0, %v3907
      %v3909 = vpop.f32.mrf.mxu0
      %v3910 = vadd.f32 0.0, %v3909
      %3911 = vmatmul.bf16.gmra.mxu0 %v3795
      %v3912 = vpop.f32.mrf.mxu0
      %v3913 = vadd.f32 0.0, %v3912
      %v3914 = vpop.f32.mrf.mxu0
      %v3915 = vadd.f32 0.0, %v3914
      %3916 = vmatmul.bf16.gmra.mxu0 %v3796
      %v3917 = vpop.f32.mrf.mxu0
      %v3918 = vadd.f32 0.0, %v3917
      %v3919 = vpop.f32.mrf.mxu0
      %v3920 = vadd.f32 0.0, %v3919
      %3921 = vmatmul.bf16.gmra.mxu0 %v3797
      %v3922 = vpop.f32.mrf.mxu0
      %v3923 = vadd.f32 0.0, %v3922
      %v3924 = vpop.f32.mrf.mxu0
      %v3925 = vadd.f32 0.0, %v3924
      %3926 = vmatmul.bf16.gmra.mxu0 %v3798
      %v3927 = vpop.f32.mrf.mxu0
      %v3928 = vadd.f32 0.0, %v3927
      %v3929 = vpop.f32.mrf.mxu0
      %v3930 = vadd.f32 0.0, %v3929
      %3931 = vmatmul.bf16.gmra.mxu0 %v3799
      %v3932 = vpop.f32.mrf.mxu0
      %v3933 = vadd.f32 0.0, %v3932
      %v3934 = vpop.f32.mrf.mxu0
      %v3935 = vadd.f32 0.0, %v3934
      %3936 = vmatmul.bf16.gmra.mxu0 %v3800
      %v3937 = vpop.f32.mrf.mxu0
      %v3938 = vadd.f32 0.0, %v3937
      %v3939 = vpop.f32.mrf.mxu0
      %v3940 = vadd.f32 0.0, %v3939
      %3941 = vmatmul.bf16.gmra.mxu0 %v3801
      %v3942 = vpop.f32.mrf.mxu0
      %v3943 = vadd.f32 0.0, %v3942
      %v3944 = vpop.f32.mrf.mxu0
      %v3945 = vadd.f32 0.0, %v3944
      %3946 = vmatmul.bf16.gmra.mxu0 %v3802
      %v3947 = vpop.f32.mrf.mxu0
      %v3948 = vadd.f32 0.0, %v3947
      %v3949 = vpop.f32.mrf.mxu0
      %v3950 = vadd.f32 0.0, %v3949
      %3951 = vmatmul.bf16.gmra.mxu0 %v3803
      %v3952 = vpop.f32.mrf.mxu0
      %v3953 = vadd.f32 0.0, %v3952
      %v3954 = vpop.f32.mrf.mxu0
      %v3955 = vadd.f32 0.0, %v3954
      %3956 = vdwg.mxu0
      %v3957 = vadd.f32 %v3275, %v3878
      %v3958 = vadd.f32 %v3276, %v3880
      %v3959 = vadd.f32 %v3277, %v3883
      %v3960 = vadd.f32 %v3278, %v3885
      %v3961 = vadd.f32 %v3279, %v3888
      %v3962 = vadd.f32 %v3280, %v3890
      %v3963 = vadd.f32 %v3281, %v3893
      %v3964 = vadd.f32 %v3282, %v3895
      %v3965 = vadd.f32 %v3283, %v3898
      %v3966 = vadd.f32 %v3284, %v3900
      %v3967 = vadd.f32 %v3285, %v3903
      %v3968 = vadd.f32 %v3286, %v3905
      %v3969 = vadd.f32 %v3287, %v3908
      %v3970 = vadd.f32 %v3288, %v3910
      %v3971 = vadd.f32 %v3289, %v3913
      %v3972 = vadd.f32 %v3290, %v3915
      %v3973 = vadd.f32 %v3291, %v3918
      %v3974 = vadd.f32 %v3292, %v3920
      %v3975 = vadd.f32 %v3293, %v3923
      %v3976 = vadd.f32 %v3294, %v3925
      %v3977 = vadd.f32 %v3295, %v3928
      %v3978 = vadd.f32 %v3296, %v3930
      %v3979 = vadd.f32 %v3297, %v3933
      %v3980 = vadd.f32 %v3298, %v3935
      %v3981 = vadd.f32 %v3299, %v3938
      %v3982 = vadd.f32 %v3300, %v3940
      %v3983 = vadd.f32 %v3301, %v3943
      %v3984 = vadd.f32 %v3302, %v3945
      %v3985 = vadd.f32 %v3303, %v3948
      %v3986 = vadd.f32 %v3304, %v3950
      %v3987 = vadd.f32 %v3305, %v3953
      %v3988 = vadd.f32 %v3306, %v3955
      %v3989 = vld [vmem:[%s2992] sm:$0xe]
      %v3990 = vld [vmem:[%s2992 + $0xc] sm:$0xe]
      %v3991 = vld [vmem:[%s2992 + $0x18] sm:$0xe]
      %v3992 = vld [vmem:[%s2992 + $0x24] sm:$0xe]
      %v3993 = vld [vmem:[%s2992 + $0x30] sm:$0xe]
      %v3994 = vld [vmem:[%s2992 + $0x3c] sm:$0xe]
      %v3995 = vld [vmem:[%s2992 + $0x48] sm:$0xe]
      %v3996 = vld [vmem:[%s2992 + $0x54] sm:$0xe]
      %v3997 = vld [vmem:[%s2992 + $0x60] sm:$0xe]
      %v3998 = vld [vmem:[%s2992 + $0x6c] sm:$0xe]
      %v3999 = vld [vmem:[%s2992 + $0x78] sm:$0xe]
      %v4000 = vld [vmem:[%s2992 + $0x84] sm:$0xe]
      %v4001 = vld [vmem:[%s2992 + $0x90] sm:$0xe]
      %v4002 = vld [vmem:[%s2992 + $0x9c] sm:$0xe]
      %v4003 = vld [vmem:[%s2992 + $0xa8] sm:$0xe]
      %v4004 = vld [vmem:[%s2992 + $0xb4] sm:$0xe]
      %v4053 = vrot.slane %v3989, 5
      %v4054 = vrot.slane %v4053, 4
      %v4055 = vrot.slane %v3308, 5
      %v4056 = vsel %vm1206, %v4054, %v4055
      %v4057 = vrot.slane %v4055, 4
      %v4058 = vrot.slane %v3309, 5
      %v4059 = vsel %vm1206, %v4057, %v4058
      %v4060 = vrot.slane %v3990, 5
      %v4061 = vrot.slane %v4060, 4
      %v4062 = vrot.slane %v3311, 5
      %v4063 = vsel %vm1206, %v4061, %v4062
      %v4064 = vrot.slane %v4062, 4
      %v4065 = vrot.slane %v3312, 5
      %v4066 = vsel %vm1206, %v4064, %v4065
      %v4067 = vrot.slane %v3991, 5
      %v4068 = vrot.slane %v4067, 4
      %v4069 = vrot.slane %v3314, 5
      %v4070 = vsel %vm1206, %v4068, %v4069
      %v4071 = vrot.slane %v4069, 4
      %v4072 = vrot.slane %v3315, 5
      %v4073 = vsel %vm1206, %v4071, %v4072
      %v4074 = vrot.slane %v3992, 5
      %v4075 = vrot.slane %v4074, 4
      %v4076 = vrot.slane %v3317, 5
      %v4077 = vsel %vm1206, %v4075, %v4076
      %v4078 = vrot.slane %v4076, 4
      %v4079 = vrot.slane %v3318, 5
      %v4080 = vsel %vm1206, %v4078, %v4079
      %v4081 = vrot.slane %v3993, 5
      %v4082 = vrot.slane %v4081, 4
      %v4083 = vrot.slane %v3320, 5
      %v4084 = vsel %vm1206, %v4082, %v4083
      %v4085 = vrot.slane %v4083, 4
      %v4086 = vrot.slane %v3321, 5
      %v4087 = vsel %vm1206, %v4085, %v4086
      %v4088 = vrot.slane %v3994, 5
      %v4089 = vrot.slane %v4088, 4
      %v4090 = vrot.slane %v3323, 5
      %v4091 = vsel %vm1206, %v4089, %v4090
      %v4092 = vrot.slane %v4090, 4
      %v4093 = vrot.slane %v3324, 5
      %v4094 = vsel %vm1206, %v4092, %v4093
      %v4095 = vrot.slane %v3995, 5
      %v4096 = vrot.slane %v4095, 4
      %v4097 = vrot.slane %v3326, 5
      %v4098 = vsel %vm1206, %v4096, %v4097
      %v4099 = vrot.slane %v4097, 4
      %v4100 = vrot.slane %v3327, 5
      %v4101 = vsel %vm1206, %v4099, %v4100
      %v4102 = vrot.slane %v3996, 5
      %v4103 = vrot.slane %v4102, 4
      %v4104 = vrot.slane %v3329, 5
      %v4105 = vsel %vm1206, %v4103, %v4104
      %v4106 = vrot.slane %v4104, 4
      %v4107 = vrot.slane %v3330, 5
      %v4108 = vsel %vm1206, %v4106, %v4107
      %v4109 = vrot.slane %v3997, 5
      %v4110 = vrot.slane %v4109, 4
      %v4111 = vrot.slane %v3332, 5
      %v4112 = vsel %vm1206, %v4110, %v4111
      %v4113 = vrot.slane %v4111, 4
      %v4114 = vrot.slane %v3333, 5
      %v4115 = vsel %vm1206, %v4113, %v4114
      %v4116 = vrot.slane %v3998, 5
      %v4117 = vrot.slane %v4116, 4
      %v4118 = vrot.slane %v3335, 5
      %v4119 = vsel %vm1206, %v4117, %v4118
      %v4120 = vrot.slane %v4118, 4
      %v4121 = vrot.slane %v3336, 5
      %v4122 = vsel %vm1206, %v4120, %v4121
      %v4123 = vrot.slane %v3999, 5
      %v4124 = vrot.slane %v4123, 4
      %v4125 = vrot.slane %v3338, 5
      %v4126 = vsel %vm1206, %v4124, %v4125
      %v4127 = vrot.slane %v4125, 4
      %v4128 = vrot.slane %v3339, 5
      %v4129 = vsel %vm1206, %v4127, %v4128
      %v4130 = vrot.slane %v4000, 5
      %v4131 = vrot.slane %v4130, 4
      %v4132 = vrot.slane %v3341, 5
      %v4133 = vsel %vm1206, %v4131, %v4132
      %v4134 = vrot.slane %v4132, 4
      %v4135 = vrot.slane %v3342, 5
      %v4136 = vsel %vm1206, %v4134, %v4135
      %v4137 = vrot.slane %v4001, 5
      %v4138 = vrot.slane %v4137, 4
      %v4139 = vrot.slane %v3344, 5
      %v4140 = vsel %vm1206, %v4138, %v4139
      %v4141 = vrot.slane %v4139, 4
      %v4142 = vrot.slane %v3345, 5
      %v4143 = vsel %vm1206, %v4141, %v4142
      %v4144 = vrot.slane %v4002, 5
      %v4145 = vrot.slane %v4144, 4
      %v4146 = vrot.slane %v3347, 5
      %v4147 = vsel %vm1206, %v4145, %v4146
      %v4148 = vrot.slane %v4146, 4
      %v4149 = vrot.slane %v3348, 5
      %v4150 = vsel %vm1206, %v4148, %v4149
      %v4151 = vrot.slane %v4003, 5
      %v4152 = vrot.slane %v4151, 4
      %v4153 = vrot.slane %v3350, 5
      %v4154 = vsel %vm1206, %v4152, %v4153
      %v4155 = vrot.slane %v4153, 4
      %v4156 = vrot.slane %v3351, 5
      %v4157 = vsel %vm1206, %v4155, %v4156
      %v4158 = vrot.slane %v4004, 5
      %v4159 = vrot.slane %v4158, 4
      %v4160 = vrot.slane %v3353, 5
      %v4161 = vsel %vm1206, %v4159, %v4160
      %v4162 = vrot.slane %v4160, 4
      %v4163 = vrot.slane %v3354, 5
      %v4164 = vsel %vm1206, %v4162, %v4163
      %s4165 = scalar_lea.vmem %s1, 512
      %v4166 = vld [vmem:[%s4165] sm:$0xf]
      %v4167 = vld [vmem:[%s4165 + $0x4] sm:$0xf]
      %v4168 = vld [vmem:[%s4165 + $0x8] sm:$0xf]
      %v4169 = vld [vmem:[%s4165 + $0xc] sm:$0xf]
      %v4170 = vld [vmem:[%s4165 + $0x10] sm:$0xf]
      %v4171 = vld [vmem:[%s4165 + $0x14] sm:$0xf]
      %v4172 = vld [vmem:[%s4165 + $0x18] sm:$0xf]
      %v4173 = vld [vmem:[%s4165 + $0x1c] sm:$0xf]
      %v4174 = vld [vmem:[%s4165 + $0x20] sm:$0xf]
      %v4175 = vld [vmem:[%s4165 + $0x24] sm:$0xf]
      %v4176 = vld [vmem:[%s4165 + $0x28] sm:$0xf]
      %v4177 = vld [vmem:[%s4165 + $0x2c] sm:$0xf]
      %v4178 = vld [vmem:[%s4165 + $0x30] sm:$0xf]
      %v4179 = vld [vmem:[%s4165 + $0x34] sm:$0xf]
      %v4180 = vld [vmem:[%s4165 + $0x38] sm:$0xf]
      %v4181 = vld [vmem:[%s4165 + $0x3c] sm:$0xf]
      %v4182 = vunpack.c.l.b16 %v4056
      %v4183 = vunpack.c.l.b16 %v4059
      %v4184 = vunpack.c.l.b16 %v4063
      %v4185 = vunpack.c.l.b16 %v4066
      %v4186 = vunpack.c.l.b16 %v4070
      %v4187 = vunpack.c.l.b16 %v4073
      %v4188 = vunpack.c.l.b16 %v4077
      %v4189 = vunpack.c.l.b16 %v4080
      %v4190 = vunpack.c.l.b16 %v4084
      %v4191 = vunpack.c.l.b16 %v4087
      %v4192 = vunpack.c.l.b16 %v4091
      %v4193 = vunpack.c.l.b16 %v4094
      %v4194 = vunpack.c.l.b16 %v4098
      %v4195 = vunpack.c.l.b16 %v4101
      %v4196 = vunpack.c.l.b16 %v4105
      %v4197 = vunpack.c.l.b16 %v4108
      %v4198 = vunpack.c.l.b16 %v4112
      %v4199 = vunpack.c.l.b16 %v4115
      %v4200 = vunpack.c.l.b16 %v4119
      %v4201 = vunpack.c.l.b16 %v4122
      %v4202 = vunpack.c.l.b16 %v4126
      %v4203 = vunpack.c.l.b16 %v4129
      %v4204 = vunpack.c.l.b16 %v4133
      %v4205 = vunpack.c.l.b16 %v4136
      %v4206 = vunpack.c.l.b16 %v4140
      %v4207 = vunpack.c.l.b16 %v4143
      %v4208 = vunpack.c.l.b16 %v4147
      %v4209 = vunpack.c.l.b16 %v4150
      %v4210 = vunpack.c.l.b16 %v4154
      %v4211 = vunpack.c.l.b16 %v4157
      %v4212 = vunpack.c.l.b16 %v4161
      %v4213 = vunpack.c.l.b16 %v4164
      %v4214 = vpack.c.b16 %v4183, %v4182
      %v4215 = vpack.c.b16 %v4185, %v4184
      %v4216 = vpack.c.b16 %v4187, %v4186
      %v4217 = vpack.c.b16 %v4189, %v4188
      %v4218 = vpack.c.b16 %v4191, %v4190
      %v4219 = vpack.c.b16 %v4193, %v4192
      %v4220 = vpack.c.b16 %v4195, %v4194
      %v4221 = vpack.c.b16 %v4197, %v4196
      %v4222 = vpack.c.b16 %v4199, %v4198
      %v4223 = vpack.c.b16 %v4201, %v4200
      %v4224 = vpack.c.b16 %v4203, %v4202
      %v4225 = vpack.c.b16 %v4205, %v4204
      %v4226 = vpack.c.b16 %v4207, %v4206
      %v4227 = vpack.c.b16 %v4209, %v4208
      %v4228 = vpack.c.b16 %v4211, %v4210
      %v4229 = vpack.c.b16 %v4213, %v4212
      %v4262 = vunpack.c.l.b16 %v4166
      %v4263 = vunpack.c.l.b16 %v4167
      %v4264 = vunpack.c.l.b16 %v4168
      %v4265 = vunpack.c.l.b16 %v4169
      %v4266 = vunpack.c.l.b16 %v4170
      %v4267 = vunpack.c.l.b16 %v4171
      %v4268 = vunpack.c.l.b16 %v4172
      %v4269 = vunpack.c.l.b16 %v4173
      %v4270 = vunpack.c.l.b16 %v4174
      %v4271 = vunpack.c.l.b16 %v4175
      %v4272 = vunpack.c.l.b16 %v4176
      %v4273 = vunpack.c.l.b16 %v4177
      %v4274 = vunpack.c.l.b16 %v4178
      %v4275 = vunpack.c.l.b16 %v4179
      %v4276 = vunpack.c.l.b16 %v4180
      %v4277 = vunpack.c.l.b16 %v4181
      %v4278 = vpack.c.b16 %v4263, %v4262
      %v4279 = vpack.c.b16 %v4265, %v4264
      %v4280 = vpack.c.b16 %v4267, %v4266
      %v4281 = vpack.c.b16 %v4269, %v4268
      %v4282 = vpack.c.b16 %v4271, %v4270
      %v4283 = vpack.c.b16 %v4273, %v4272
      %v4284 = vpack.c.b16 %v4275, %v4274
      %v4285 = vpack.c.b16 %v4277, %v4276
      %4294 = vmatpush.bf16.msra.mxu0 %v4285
      %4295 = vmatpush.bf16.msra.mxu0 %v4284
      %4296 = vmatpush.bf16.msra.mxu0 %v4283
      %4297 = vmatpush.bf16.msra.mxu0 %v4282
      %4298 = vmatpush.bf16.msra.mxu0 %v4281
      %4299 = vmatpush.bf16.msra.mxu0 %v4280
      %4300 = vmatpush.bf16.msra.mxu0 %v4279
      %4301 = vmatpush.bf16.msra.mxu0 %v4278
      %4302 = vmatmul.bf16.gmra.mxu0 %v4214
      %v4303 = vpop.f32.mrf.mxu0
      %v4304 = vadd.f32 0.0, %v4303
      %v4305 = vpop.f32.mrf.mxu0
      %v4306 = vadd.f32 0.0, %v4305
      %4307 = vmatmul.bf16.gmra.mxu0 %v4215
      %v4308 = vpop.f32.mrf.mxu0
      %v4309 = vadd.f32 0.0, %v4308
      %v4310 = vpop.f32.mrf.mxu0
      %v4311 = vadd.f32 0.0, %v4310
      %4312 = vmatmul.bf16.gmra.mxu0 %v4216
      %v4313 = vpop.f32.mrf.mxu0
      %v4314 = vadd.f32 0.0, %v4313
      %v4315 = vpop.f32.mrf.mxu0
      %v4316 = vadd.f32 0.0, %v4315
      %4317 = vmatmul.bf16.gmra.mxu0 %v4217
      %v4318 = vpop.f32.mrf.mxu0
      %v4319 = vadd.f32 0.0, %v4318
      %v4320 = vpop.f32.mrf.mxu0
      %v4321 = vadd.f32 0.0, %v4320
      %4322 = vmatmul.bf16.gmra.mxu0 %v4218
      %v4323 = vpop.f32.mrf.mxu0
      %v4324 = vadd.f32 0.0, %v4323
      %v4325 = vpop.f32.mrf.mxu0
      %v4326 = vadd.f32 0.0, %v4325
      %4327 = vmatmul.bf16.gmra.mxu0 %v4219
      %v4328 = vpop.f32.mrf.mxu0
      %v4329 = vadd.f32 0.0, %v4328
      %v4330 = vpop.f32.mrf.mxu0
      %v4331 = vadd.f32 0.0, %v4330
      %4332 = vmatmul.bf16.gmra.mxu0 %v4220
      %v4333 = vpop.f32.mrf.mxu0
      %v4334 = vadd.f32 0.0, %v4333
      %v4335 = vpop.f32.mrf.mxu0
      %v4336 = vadd.f32 0.0, %v4335
      %4337 = vmatmul.bf16.gmra.mxu0 %v4221
      %v4338 = vpop.f32.mrf.mxu0
      %v4339 = vadd.f32 0.0, %v4338
      %v4340 = vpop.f32.mrf.mxu0
      %v4341 = vadd.f32 0.0, %v4340
      %4342 = vmatmul.bf16.gmra.mxu0 %v4222
      %v4343 = vpop.f32.mrf.mxu0
      %v4344 = vadd.f32 0.0, %v4343
      %v4345 = vpop.f32.mrf.mxu0
      %v4346 = vadd.f32 0.0, %v4345
      %4347 = vmatmul.bf16.gmra.mxu0 %v4223
      %v4348 = vpop.f32.mrf.mxu0
      %v4349 = vadd.f32 0.0, %v4348
      %v4350 = vpop.f32.mrf.mxu0
      %v4351 = vadd.f32 0.0, %v4350
      %4352 = vmatmul.bf16.gmra.mxu0 %v4224
      %v4353 = vpop.f32.mrf.mxu0
      %v4354 = vadd.f32 0.0, %v4353
      %v4355 = vpop.f32.mrf.mxu0
      %v4356 = vadd.f32 0.0, %v4355
      %4357 = vmatmul.bf16.gmra.mxu0 %v4225
      %v4358 = vpop.f32.mrf.mxu0
      %v4359 = vadd.f32 0.0, %v4358
      %v4360 = vpop.f32.mrf.mxu0
      %v4361 = vadd.f32 0.0, %v4360
      %4362 = vmatmul.bf16.gmra.mxu0 %v4226
      %v4363 = vpop.f32.mrf.mxu0
      %v4364 = vadd.f32 0.0, %v4363
      %v4365 = vpop.f32.mrf.mxu0
      %v4366 = vadd.f32 0.0, %v4365
      %4367 = vmatmul.bf16.gmra.mxu0 %v4227
      %v4368 = vpop.f32.mrf.mxu0
      %v4369 = vadd.f32 0.0, %v4368
      %v4370 = vpop.f32.mrf.mxu0
      %v4371 = vadd.f32 0.0, %v4370
      %4372 = vmatmul.bf16.gmra.mxu0 %v4228
      %v4373 = vpop.f32.mrf.mxu0
      %v4374 = vadd.f32 0.0, %v4373
      %v4375 = vpop.f32.mrf.mxu0
      %v4376 = vadd.f32 0.0, %v4375
      %4377 = vmatmul.bf16.gmra.mxu0 %v4229
      %v4378 = vpop.f32.mrf.mxu0
      %v4379 = vadd.f32 0.0, %v4378
      %v4380 = vpop.f32.mrf.mxu0
      %v4381 = vadd.f32 0.0, %v4380
      %4382 = vdwg.mxu0
      %v4383 = vadd.f32 %v3957, %v4304
      %v4384 = vadd.f32 %v3958, %v4306
      %v4385 = vadd.f32 %v3959, %v4309
      %v4386 = vadd.f32 %v3960, %v4311
      %v4387 = vadd.f32 %v3961, %v4314
      %v4388 = vadd.f32 %v3962, %v4316
      %v4389 = vadd.f32 %v3963, %v4319
      %v4390 = vadd.f32 %v3964, %v4321
      %v4391 = vadd.f32 %v3965, %v4324
      %v4392 = vadd.f32 %v3966, %v4326
      %v4393 = vadd.f32 %v3967, %v4329
      %v4394 = vadd.f32 %v3968, %v4331
      %v4395 = vadd.f32 %v3969, %v4334
      %v4396 = vadd.f32 %v3970, %v4336
      %v4397 = vadd.f32 %v3971, %v4339
      %v4398 = vadd.f32 %v3972, %v4341
      %v4399 = vadd.f32 %v3973, %v4344
      %v4400 = vadd.f32 %v3974, %v4346
      %v4401 = vadd.f32 %v3975, %v4349
      %v4402 = vadd.f32 %v3976, %v4351
      %v4403 = vadd.f32 %v3977, %v4354
      %v4404 = vadd.f32 %v3978, %v4356
      %v4405 = vadd.f32 %v3979, %v4359
      %v4406 = vadd.f32 %v3980, %v4361
      %v4407 = vadd.f32 %v3981, %v4364
      %v4408 = vadd.f32 %v3982, %v4366
      %v4409 = vadd.f32 %v3983, %v4369
      %v4410 = vadd.f32 %v3984, %v4371
      %v4411 = vadd.f32 %v3985, %v4374
      %v4412 = vadd.f32 %v3986, %v4376
      %v4413 = vadd.f32 %v3987, %v4379
      %v4414 = vadd.f32 %v3988, %v4381
      %v4415 = vpack.c.bf16 %v4383, %v4383
      %v4416 = vpack.c.bf16 %v4384, %v4384
      %v4417 = vpack.c.bf16 %v4385, %v4385
      %v4418 = vpack.c.bf16 %v4386, %v4386
      %v4419 = vpack.c.bf16 %v4387, %v4387
      %v4420 = vpack.c.bf16 %v4388, %v4388
      %v4421 = vpack.c.bf16 %v4389, %v4389
      %v4422 = vpack.c.bf16 %v4390, %v4390
      %v4423 = vpack.c.bf16 %v4391, %v4391
      %v4424 = vpack.c.bf16 %v4392, %v4392
      %v4425 = vpack.c.bf16 %v4393, %v4393
      %v4426 = vpack.c.bf16 %v4394, %v4394
      %v4427 = vpack.c.bf16 %v4395, %v4395
      %v4428 = vpack.c.bf16 %v4396, %v4396
      %v4429 = vpack.c.bf16 %v4397, %v4397
      %v4430 = vpack.c.bf16 %v4398, %v4398
      %v4431 = vpack.c.bf16 %v4399, %v4399
      %v4432 = vpack.c.bf16 %v4400, %v4400
      %v4433 = vpack.c.bf16 %v4401, %v4401
      %v4434 = vpack.c.bf16 %v4402, %v4402
      %v4435 = vpack.c.bf16 %v4403, %v4403
      %v4436 = vpack.c.bf16 %v4404, %v4404
      %v4437 = vpack.c.bf16 %v4405, %v4405
      %v4438 = vpack.c.bf16 %v4406, %v4406
      %v4439 = vpack.c.bf16 %v4407, %v4407
      %v4440 = vpack.c.bf16 %v4408, %v4408
      %v4441 = vpack.c.bf16 %v4409, %v4409
      %v4442 = vpack.c.bf16 %v4410, %v4410
      %v4443 = vpack.c.bf16 %v4411, %v4411
      %v4444 = vpack.c.bf16 %v4412, %v4412
      %v4445 = vpack.c.bf16 %v4413, %v4413
      %v4446 = vpack.c.bf16 %v4414, %v4414
      %4447 = vst [vmem:[%s162] sm:$0xf] %v4415
      %4448 = vst [vmem:[%s162 + $0x4] sm:$0xf] %v4416
      %4449 = vst [vmem:[%s162 + $0x8] sm:$0xf] %v4417
      %4450 = vst [vmem:[%s162 + $0xc] sm:$0xf] %v4418
      %4451 = vst [vmem:[%s162 + $0x10] sm:$0xf] %v4419
      %4452 = vst [vmem:[%s162 + $0x14] sm:$0xf] %v4420
      %4453 = vst [vmem:[%s162 + $0x18] sm:$0xf] %v4421
      %4454 = vst [vmem:[%s162 + $0x1c] sm:$0xf] %v4422
      %4455 = vst [vmem:[%s162 + $0x20] sm:$0xf] %v4423
      %4456 = vst [vmem:[%s162 + $0x24] sm:$0xf] %v4424
      %4457 = vst [vmem:[%s162 + $0x28] sm:$0xf] %v4425
      %4458 = vst [vmem:[%s162 + $0x2c] sm:$0xf] %v4426
      %4459 = vst [vmem:[%s162 + $0x30] sm:$0xf] %v4427
      %4460 = vst [vmem:[%s162 + $0x34] sm:$0xf] %v4428
      %4461 = vst [vmem:[%s162 + $0x38] sm:$0xf] %v4429
      %4462 = vst [vmem:[%s162 + $0x3c] sm:$0xf] %v4430
      %4463 = vst [vmem:[%s162 + $0x40] sm:$0xf] %v4431
      %4464 = vst [vmem:[%s162 + $0x44] sm:$0xf] %v4432
      %4465 = vst [vmem:[%s162 + $0x48] sm:$0xf] %v4433
      %4466 = vst [vmem:[%s162 + $0x4c] sm:$0xf] %v4434
      %4467 = vst [vmem:[%s162 + $0x50] sm:$0xf] %v4435
      %4468 = vst [vmem:[%s162 + $0x54] sm:$0xf] %v4436
      %4469 = vst [vmem:[%s162 + $0x58] sm:$0xf] %v4437
      %4470 = vst [vmem:[%s162 + $0x5c] sm:$0xf] %v4438
      %4471 = vst [vmem:[%s162 + $0x60] sm:$0xf] %v4439
      %4472 = vst [vmem:[%s162 + $0x64] sm:$0xf] %v4440
      %4473 = vst [vmem:[%s162 + $0x68] sm:$0xf] %v4441
      %4474 = vst [vmem:[%s162 + $0x6c] sm:$0xf] %v4442
      %4475 = vst [vmem:[%s162 + $0x70] sm:$0xf] %v4443
      %4476 = vst [vmem:[%s162 + $0x74] sm:$0xf] %v4444
      %4477 = vst [vmem:[%s162 + $0x78] sm:$0xf] %v4445
      %4478 = vst [vmem:[%s162 + $0x7c] sm:$0xf] %v4446
      %v4479 = vld [vmem:[%s3] sm:$0x1]
      %v4480 = vadd.f32 %v4383, %v4384
      %v4481 = vadd.f32 %v4480, %v4385
      %v4482 = vadd.f32 %v4481, %v4386
      %v4483 = vadd.f32 %v4482, %v4387
      %v4484 = vadd.f32 %v4483, %v4388
      %v4485 = vadd.f32 %v4484, %v4389
      %v4486 = vadd.f32 %v4485, %v4390
      %v4487 = vadd.f32 %v4486, %v4391
      %v4488 = vadd.f32 %v4487, %v4392
      %v4489 = vadd.f32 %v4488, %v4393
      %v4490 = vadd.f32 %v4489, %v4394
      %v4491 = vadd.f32 %v4490, %v4395
      %v4492 = vadd.f32 %v4491, %v4396
      %v4493 = vadd.f32 %v4492, %v4397
      %v4494 = vadd.f32 %v4493, %v4398
      %v4495 = vadd.f32 %v4494, %v4399
      %v4496 = vadd.f32 %v4495, %v4400
      %v4497 = vadd.f32 %v4496, %v4401
      %v4498 = vadd.f32 %v4497, %v4402
      %v4499 = vadd.f32 %v4498, %v4403
      %v4500 = vadd.f32 %v4499, %v4404
      %v4501 = vadd.f32 %v4500, %v4405
      %v4502 = vadd.f32 %v4501, %v4406
      %v4503 = vadd.f32 %v4502, %v4407
      %v4504 = vadd.f32 %v4503, %v4408
      %v4505 = vadd.f32 %v4504, %v4409
      %v4506 = vadd.f32 %v4505, %v4410
      %v4507 = vadd.f32 %v4506, %v4411
      %v4508 = vadd.f32 %v4507, %v4412
      %v4509 = vadd.f32 %v4508, %v4413
      %v4510 = vadd.f32 %v4509, %v4414
      %v4511 = vrot.slane %v4510, 4
      %v4512 = vadd.f32 %v4510, %v4511
      %v4513 = vrot.slane %v4512, 2
      %v4514 = vadd.f32 %v4512, %v4513
      %v4515 = vrot.slane %v4514, 1
      %v4516 = vadd.f32 %v4514, %v4515
      %v4517 = vadd.f32 %v4479, %v4516
      %4518 = vst [vmem:[%s3] sm:$0x1] %v4517
      %v4519 = vld [vmem:[%s4] sm:$0x1]
      %v4520 = vmul.f32 %v4383, %v4383
      %v4521 = vmul.f32 %v4384, %v4384
      %v4522 = vmul.f32 %v4385, %v4385
      %v4523 = vmul.f32 %v4386, %v4386
      %v4524 = vmul.f32 %v4387, %v4387
      %v4525 = vmul.f32 %v4388, %v4388
      %v4526 = vmul.f32 %v4389, %v4389
      %v4527 = vmul.f32 %v4390, %v4390
      %v4528 = vmul.f32 %v4391, %v4391
      %v4529 = vmul.f32 %v4392, %v4392
      %v4530 = vmul.f32 %v4393, %v4393
      %v4531 = vmul.f32 %v4394, %v4394
      %v4532 = vmul.f32 %v4395, %v4395
      %v4533 = vmul.f32 %v4396, %v4396
      %v4534 = vmul.f32 %v4397, %v4397
      %v4535 = vmul.f32 %v4398, %v4398
      %v4536 = vmul.f32 %v4399, %v4399
      %v4537 = vmul.f32 %v4400, %v4400
      %v4538 = vmul.f32 %v4401, %v4401
      %v4539 = vmul.f32 %v4402, %v4402
      %v4540 = vmul.f32 %v4403, %v4403
      %v4541 = vmul.f32 %v4404, %v4404
      %v4542 = vmul.f32 %v4405, %v4405
      %v4543 = vmul.f32 %v4406, %v4406
      %v4544 = vmul.f32 %v4407, %v4407
      %v4545 = vmul.f32 %v4408, %v4408
      %v4546 = vmul.f32 %v4409, %v4409
      %v4547 = vmul.f32 %v4410, %v4410
      %v4548 = vmul.f32 %v4411, %v4411
      %v4549 = vmul.f32 %v4412, %v4412
      %v4550 = vmul.f32 %v4413, %v4413
      %v4551 = vmul.f32 %v4414, %v4414
      %v4552 = vadd.f32 %v4520, %v4521
      %v4553 = vadd.f32 %v4552, %v4522
      %v4554 = vadd.f32 %v4553, %v4523
      %v4555 = vadd.f32 %v4554, %v4524
      %v4556 = vadd.f32 %v4555, %v4525
      %v4557 = vadd.f32 %v4556, %v4526
      %v4558 = vadd.f32 %v4557, %v4527
      %v4559 = vadd.f32 %v4558, %v4528
      %v4560 = vadd.f32 %v4559, %v4529
      %v4561 = vadd.f32 %v4560, %v4530
      %v4562 = vadd.f32 %v4561, %v4531
      %v4563 = vadd.f32 %v4562, %v4532
      %v4564 = vadd.f32 %v4563, %v4533
      %v4565 = vadd.f32 %v4564, %v4534
      %v4566 = vadd.f32 %v4565, %v4535
      %v4567 = vadd.f32 %v4566, %v4536
      %v4568 = vadd.f32 %v4567, %v4537
      %v4569 = vadd.f32 %v4568, %v4538
      %v4570 = vadd.f32 %v4569, %v4539
      %v4571 = vadd.f32 %v4570, %v4540
      %v4572 = vadd.f32 %v4571, %v4541
      %v4573 = vadd.f32 %v4572, %v4542
      %v4574 = vadd.f32 %v4573, %v4543
      %v4575 = vadd.f32 %v4574, %v4544
      %v4576 = vadd.f32 %v4575, %v4545
      %v4577 = vadd.f32 %v4576, %v4546
      %v4578 = vadd.f32 %v4577, %v4547
      %v4579 = vadd.f32 %v4578, %v4548
      %v4580 = vadd.f32 %v4579, %v4549
      %v4581 = vadd.f32 %v4580, %v4550
      %v4582 = vadd.f32 %v4581, %v4551
      %v4583 = vrot.slane %v4582, 4
      %v4584 = vadd.f32 %v4582, %v4583
      %v4585 = vrot.slane %v4584, 2
      %v4586 = vadd.f32 %v4584, %v4585
      %v4587 = vrot.slane %v4586, 1
      %v4588 = vadd.f32 %v4586, %v4587
      %v4589 = vadd.f32 %v4519, %v4588
      %4590 = vst [vmem:[%s4] sm:$0x1] %v4589
      %s4591 = sadd.s32 %s20, %s21
      %s4592 = smul.u32 32, %s4591
      %p4593 = scmp.lt.s32.totalorder %s4592, 63
      %s4594 = scalar_select %p4593, %s4592, 63
      %s4595 = smul.addr %s4594, 4
      %s4596 = scalar_lea.vmem %s2, %s4595
      // Predicated region
      $region48: #{conv_block_forward.4} parent=23 // pred_check
        %p4597 = pneg %p69
      $region49: #{conv_block_forward.4} parent=23 // pred_check_branch
        %4599 = sbr.rel (%p4597) target = $region51
      $region50: #{conv_block_forward.4} parent=23 // pred_region
        %s4600 = sadd.s32 %s20, %s21
        %s4601 = smul.u32 32, %s4600
      $region51: #{conv_block_forward.4} parent=23 // pred_fallthru
        _
      // Predicated region
      $region52: #{conv_block_forward.4} parent=23 // pred_check
        %p4602 = pneg %p90
      $region53: #{conv_block_forward.4} parent=23 // pred_check_branch
        %4604 = sbr.rel (%p4602) target = $region55
      $region54: #{conv_block_forward.4} parent=23 // pred_region
        _
      $region55: #{conv_block_forward.4} parent=23 // pred_fallthru
        _
      // Predicated region
      $region56: #{conv_block_forward.4} parent=23 // pred_check
        %p4605 = pneg %p111
      $region57: #{conv_block_forward.4} parent=23 // pred_check_branch
        %4607 = sbr.rel (%p4605) target = $region59
      $region58: #{conv_block_forward.4} parent=23 // pred_region
        _
      $region59: #{conv_block_forward.4} parent=23 // pred_fallthru
        _
      // Predicated region
      $region60: #{conv_block_forward.4} parent=23 // pred_check
        %p4608 = pneg %p90
      $region61: #{conv_block_forward.4} parent=23 // pred_check_branch
        %4610 = sbr.rel (%p4608) target = $region63
      $region62: #{conv_block_forward.4} parent=23 // pred_region
        _
      $region63: #{conv_block_forward.4} parent=23 // pred_fallthru
        _
      // Predicated region
      $region64: #{conv_block_forward.4} parent=23 // pred_check
        %p4611 = pneg %p111
      $region65: #{conv_block_forward.4} parent=23 // pred_check_branch
        %4613 = sbr.rel (%p4611) target = $region67
      $region66: #{conv_block_forward.4} parent=23 // pred_region
        _
      $region67: #{conv_block_forward.4} parent=23 // pred_fallthru
        _
    $region24: #{conv_block_forward.4} parent=5 // pred_fallthru
      _
    %p4614 = scmp.le.s32.totalorder 2, %s11
    // Predicated region
    $region68: #{conv_block_forward.4} parent=5 // pred_check
      %p4615 = pneg %p4614
    $region69: #{conv_block_forward.4} parent=5 // pred_check_branch
      %4617 = sbr.rel (%p4615) target = $region71
    $region70: #{conv_block_forward.4} parent=5 // pred_region
      %s4618 = ssub.s32 %s11, 2
      // Predicated region
      $region72: #{conv_block_forward.4} parent=70 // pred_check
        %p4619 = pneg %p75
      $region73: #{conv_block_forward.4} parent=70 // pred_check_branch
        %4621 = sbr.rel (%p4619) target = $region75
      $region74: #{conv_block_forward.4} parent=70 // pred_region
        %s4622 = sadd.s32 %s22, %s23
        %s4623 = smul.u32 32, %s4622
        %p4624 = scmp.lt.s32.totalorder %s4623, 63
        %s4625 = scalar_select %p4624, %s4623, 63
        %s4626 = smul.addr %s4625, 4
        %s4627 = scalar_lea.vmem %s2, %s4626
      $region75: #{conv_block_forward.4} parent=70 // pred_fallthru
        _
    $region71: #{conv_block_forward.4} parent=5 // pred_fallthru
      _
  $region6: #{conv_block_forward.4} parent=0 // loop_footer
    %s15 = sadd.s32 1, %s11
  $region7: #{conv_block_forward.4} parent=0 // loop_footer_branch
    %10 = sbr.rel target = $region3
  $region8: #{conv_block_forward.4} parent=0 // loop_exit
    _
  %4628 = vsyncmov [#allocation3]
  %s4629 = vpop.sfrf %4628
  %p4630 = scmp.eq.s32.totalorder %s4629, 0
  %p4631 = pneg %p4630
  %4633 = shalt.err (%p4631)

</llo_original>
